<compile_context>
chip_gen: v6e
topology: v6e:2x2x1
jax: 0.10.0
libtpu: 0.0.40
codegen_flags: <defaults>
</compile_context>

<pallas_src>
import functools

import jax
import jax.numpy as jnp
from jax.experimental import pallas as pl
from jax.experimental.pallas import tpu as pltpu

_MLP_VMEM_LIMIT = 32 * 1024 * 1024
_PROP_VMEM_LIMIT = 48 * 1024 * 1024   # <= v7x 64 MiB physical; plenty of slack on v5e/v6e
_NEG_INF = -1e30


def _round_up(x, m):
    return ((x + m - 1) // m) * m


def _pick_tile(n_pad, candidates):
    for t in candidates:
        if n_pad % t == 0:
            return t
    return n_pad  # n_pad is a multiple of 512, so this is effectively unreachable


# --------------------------------------------------------------------------- #
# Kernels
# --------------------------------------------------------------------------- #
def _mlp_kernel(x_ref, w1_ref, b1_ref, w2_ref, b2_ref, h0b_ref, ah0_ref, *, alpha):
    # lin1 -> relu -> lin2 on the MXU with bf16 operands, f32 accumulation.
    xb = x_ref[...].astype(jnp.bfloat16)
    w1b = w1_ref[...].astype(jnp.bfloat16)
    h = jnp.dot(xb, w1b, preferred_element_type=jnp.float32) + b1_ref[...]
    h = jnp.maximum(h, 0.0)
    h = jnp.dot(h.astype(jnp.bfloat16), w2_ref[...].astype(jnp.bfloat16),
                preferred_element_type=jnp.float32) + b2_ref[...]
    h0b_ref[...] = h.astype(jnp.bfloat16)   # bf16 h0: first-step matmul operand
    ah0_ref[...] = alpha * h                # hoisted residual, kept in f32


def _prop_fused_kernel(adj_ref, h0_ref, ah0_ref, out_ref, h_scr, *, out_c):
    # Fused K-step APPNP propagation.
    #   grid = (K, row_tiles, reduction_tiles), all "arbitrary" (sequential).
    #   adj_ref : (TR, TC) bf16 tile of (1-alpha)*A_hat   (streamed)
    #   h0_ref  : (N, C)   bf16, resident                  (fetched once)
    #   ah0_ref : (N, C)   f32,  resident                  (fetched once)
    #   out_ref : (TR, C)  f32 accumulator / final output block
    #   h_scr   : (2, N, C) bf16 ping-pong buffer for the inter-step h
    k = pl.program_id(0)
    r = pl.program_id(1)
    j = pl.program_id(2)
    nk = pl.num_programs(0)
    nj = pl.num_programs(2)

    TR = out_ref.shape[0]
    TC = adj_ref.shape[1]

    # One-time seed: h^(0) = h0 (already bf16).
    @pl.when((k == 0) & (r == 0) & (j == 0))
    def _seed():
        h_scr[0] = h0_ref[...]

    src = jax.lax.rem(k, 2)          # slot holding h^(k)
    row0 = pl.multiple_of(r * TR, TR)

    @pl.when(j == 0)
    def _init():
        # Re-initialize the resident accumulator with the hoisted alpha*h0.
        out_ref[...] = ah0_ref[pl.ds(row0, TR), :]

    # Slice the resident h BEFORE feeding the MXU (only a (TC, C) bf16 view).
    col0 = pl.multiple_of(j * TC, TC)
    h_blk = h_scr[src, pl.ds(col0, TC), :]
    out_ref[...] += jnp.dot(adj_ref[...], h_blk, preferred_element_type=jnp.float32)

    last_j = j == nj - 1

    @pl.when(last_j & (k < nk - 1))
    def _stash():
        # Step result for this row tile -> ping-pong slot for step k+1 (bf16).
        h_scr[1 - src, pl.ds(row0, TR), :] = out_ref[...].astype(jnp.bfloat16)

    @pl.when(last_j & (k == nk - 1))
    def _finalize():
        # Masked log_softmax over the real classes (padded lanes -> -1e30).
        h = out_ref[...]
        col = jax.lax.broadcasted_iota(jnp.int32, h.shape, dimension=1)
        logits = jnp.where(col < out_c, h, _NEG_INF)
        m = jnp.max(logits, axis=1, keepdims=True)
        z = logits - m
        lse = jnp.log(jnp.sum(jnp.exp(z), axis=1, keepdims=True))
        out_ref[...] = z - lse


# --------------------------------------------------------------------------- #
# pallas_call wrappers
# --------------------------------------------------------------------------- #
def _mlp(x_p, w1_p, b1_p, w2_p, b2_p, *, alpha, tile_rows):
    n_pad, f_pad = x_p.shape
    h_pad = w1_p.shape[1]
    c_pad = w2_p.shape[1]
    r_tiles = n_pad // tile_rows

    flops = 2 * n_pad * (f_pad * h_pad + h_pad * c_pad)
    bytes_accessed = ((x_p.size + w1_p.size + b1_p.size + w2_p.size + b2_p.size) * 4
                      + n_pad * c_pad * (2 + 4))

    return pl.pallas_call(
        functools.partial(_mlp_kernel, alpha=alpha),
        out_shape=(jax.ShapeDtypeStruct((n_pad, c_pad), jnp.bfloat16),   # h0 (bf16)
                   jax.ShapeDtypeStruct((n_pad, c_pad), jnp.float32)),   # alpha*h0 (f32)
        grid=(r_tiles,),
        in_specs=[
            pl.BlockSpec((tile_rows, f_pad), lambda r: (r, 0)),
            pl.BlockSpec((f_pad, h_pad), lambda r: (0, 0)),
            pl.BlockSpec((1, h_pad), lambda r: (0, 0)),
            pl.BlockSpec((h_pad, c_pad), lambda r: (0, 0)),
            pl.BlockSpec((1, c_pad), lambda r: (0, 0)),
        ],
        out_specs=(pl.BlockSpec((tile_rows, c_pad), lambda r: (r, 0)),
                   pl.BlockSpec((tile_rows, c_pad), lambda r: (r, 0))),
        compiler_params=pltpu.CompilerParams(
            dimension_semantics=("parallel",),
            vmem_limit_bytes=_MLP_VMEM_LIMIT),
        cost_estimate=pl.CostEstimate(flops=int(flops), transcendentals=0,
                                      bytes_accessed=int(bytes_accessed)),
    )(x_p, w1_p, b1_p, w2_p, b2_p)


def _propagate(adj_bf16, h0_bf16, ah0, *, K, out_c, tile_rows, tile_cols):
    n_pad, c_pad = ah0.shape
    r_tiles = n_pad // tile_rows
    j_tiles = n_pad // tile_cols

    flops = 2 * K * n_pad * n_pad * c_pad
    bytes_accessed = (K * n_pad * n_pad * 2          # adjacency stream (bf16), per step
                      + n_pad * c_pad * (2 + 4)      # resident h0 (bf16) + ah0 (f32), once
                      + K * n_pad * c_pad * 4)       # output-block writebacks (revisited per step)

    return pl.pallas_call(
        functools.partial(_prop_fused_kernel, out_c=out_c),
        out_shape=jax.ShapeDtypeStruct((n_pad, c_pad), jnp.float32),
        grid=(K, r_tiles, j_tiles),
        in_specs=[
            pl.BlockSpec((tile_rows, tile_cols), lambda k, r, j: (r, j)),  # A_hat tile (streamed)
            pl.BlockSpec((n_pad, c_pad), lambda k, r, j: (0, 0)),          # h0 bf16 (resident)
            pl.BlockSpec((n_pad, c_pad), lambda k, r, j: (0, 0)),          # alpha*h0 f32 (resident)
        ],
        out_specs=pl.BlockSpec((tile_rows, c_pad), lambda k, r, j: (r, 0)),
        scratch_shapes=[pltpu.VMEM((2, n_pad, c_pad), jnp.bfloat16)],      # ping-pong inter-step h
        compiler_params=pltpu.CompilerParams(
            # h lives in per-TC VMEM scratch across steps -> keep everything on one
            # core (sequential grid); the kernel is HBM-bound so this costs nothing.
            dimension_semantics=("arbitrary", "arbitrary", "arbitrary"),
            vmem_limit_bytes=_PROP_VMEM_LIMIT),
        cost_estimate=pl.CostEstimate(flops=int(flops),
                                      transcendentals=int(n_pad * c_pad),
                                      bytes_accessed=int(bytes_accessed)),
    )(adj_bf16, h0_bf16, ah0)


# --------------------------------------------------------------------------- #
# Glue: dense GCN-normalized adjacency + padded forward pass
# --------------------------------------------------------------------------- #
def gcn_norm_dense(edge_index, num_nodes):
    """Dense GCN-normalized adjacency with self-loops (PyG gcn_norm semantics)."""
    row, col = edge_index[0], edge_index[1]          # row = source, col = target
    loop = jnp.arange(num_nodes, dtype=edge_index.dtype)
    row = jnp.concatenate([row, loop])
    col = jnp.concatenate([col, loop])
    ew = jnp.ones(row.shape[0], dtype=jnp.float32)
    deg = jnp.zeros((num_nodes,), jnp.float32).at[col].add(ew)
    dinv = jnp.where(deg > 0, 1.0 / jnp.sqrt(deg), 0.0)
    norm = dinv[row] * ew * dinv[col]
    # out[target] += norm * x[source]  =>  A_hat[target, source] = norm
    adj = jnp.zeros((num_nodes, num_nodes), jnp.float32).at[col, row].add(norm)
    return adj


def appnp_net_forward(x, edge_index, params, *, K=10, alpha=0.1):
    """Pallas-backed forward pass of APPNPNet (eval mode: dropout = identity)."""
    assert K >= 1
    n, f_in = x.shape
    w1, b1, w2, b2 = params
    hidden = w1.shape[1]
    out_c = w2.shape[1]

    # Tile-friendly padded sizes (lane-dense output: classes padded to 128;
    # nodes padded coarsely so large reduction tiles divide evenly).
    n_pad = _round_up(n, 512)
    f_pad = _round_up(f_in, 128)
    h_pad = _round_up(hidden, 128)
    c_pad = _round_up(out_c, 128)
    tile_rows = _pick_tile(n_pad, (1024, 512))
    tile_cols = _pick_tile(n_pad, (4096, 2048, 1024, 512))   # big A tiles amortize per-step cost
    mlp_tile_rows = _pick_tile(n_pad, (512, 256, 128))

    x_p = jnp.zeros((n_pad, f_pad), jnp.float32).at[:n, :f_in].set(x.astype(jnp.float32))
    w1_p = jnp.zeros((f_pad, h_pad), jnp.float32).at[:f_in, :hidden].set(w1)
    b1_p = jnp.zeros((1, h_pad), jnp.float32).at[0, :hidden].set(b1)
    w2_p = jnp.zeros((h_pad, c_pad), jnp.float32).at[:hidden, :out_c].set(w2)
    b2_p = jnp.zeros((1, c_pad), jnp.float32).at[0, :out_c].set(b2)

    # Dense normalized adjacency; fold (1-alpha) in once and cast to bf16.
    # TODO(synk): for large graphs, precompute/cache this O(N^2) dense build or
    # switch to the block-sparse tile-skip variant.
    adj = gcn_norm_dense(edge_index, n)
    adj_p = jnp.zeros((n_pad, n_pad), jnp.float32).at[:n, :n].set(adj)
    adj_scaled = ((1.0 - alpha) * adj_p).astype(jnp.bfloat16)

    h0_bf16, ah0 = _mlp(x_p, w1_p, b1_p, w2_p, b2_p, alpha=alpha,
                        tile_rows=mlp_tile_rows)

    out = _propagate(adj_scaled, h0_bf16, ah0, K=K, out_c=out_c,
                     tile_rows=tile_rows, tile_cols=tile_cols)
    return out[:n, :out_c]


# --------------------------------------------------------------------------- #
# References
# --------------------------------------------------------------------------- #
def _ref_forward_f32(x, edge_index, params, *, K=10, alpha=0.1):
    """Pure-JAX f32 reference (module semantics, eval mode)."""
    w1, b1, w2, b2 = params
    adj = gcn_norm_dense(edge_index, x.shape[0])
    h = jnp.maximum(x @ w1 + b1, 0.0) @ w2 + b2
    h0 = h
    for _ in range(K):
        h = (1.0 - alpha) * (adj @ h) + alpha * h0
    return jax.nn.log_softmax(h, axis=1)


def _ref_forward_bf16(x, edge_index, params, *, K=10, alpha=0.1):
    """Reference mirroring the kernel's bf16 arithmetic (MLP + adjacency + inter-step h)."""
    w1, b1, w2, b2 = params
    h = jnp.dot(x.astype(jnp.bfloat16), w1.astype(jnp.bfloat16),
                preferred_element_type=jnp.float32) + b1
    h = jnp.maximum(h, 0.0)
    h = jnp.dot(h.astype(jnp.bfloat16), w2.astype(jnp.bfloat16),
                preferred_element_type=jnp.float32) + b2
    ah0 = alpha * h
    adj = ((1.0 - alpha) * gcn_norm_dense(edge_index, x.shape[0])).astype(jnp.bfloat16)
    hb = h.astype(jnp.bfloat16)
    cur = h
    for _ in range(K):
        cur = jnp.dot(adj, hb, preferred_element_type=jnp.float32) + ah0
        hb = cur.astype(jnp.bfloat16)
    return jax.nn.log_softmax(cur, axis=1)


# --------------------------------------------------------------------------- #
if __name__ == "__main__":
    # Small, deterministic shapes: N=16 nodes, in=8, hidden=32, out=4 classes.
    N, F_IN, HIDDEN, OUT_C = 16, 8, 32, 4
    K_STEPS, ALPHA = 10, 0.1

    key = jax.random.PRNGKey(0)
    kx, kw1, kb1, kw2, kb2 = jax.random.split(key, 5)

    x = jax.random.normal(kx, (N, F_IN), dtype=jnp.float32)

    # Bidirectional ring graph: edge_index [2, 2N]
    src = jnp.arange(N, dtype=jnp.int32)
    dst = (src + 1) % N
    edge_index = jnp.stack(
        [jnp.concatenate([src, dst]), jnp.concatenate([dst, src])], axis=0
    )

    # Deterministic synthetic parameters (Linear weights stored as [in, out]).
    w1 = jax.random.normal(kw1, (F_IN, HIDDEN), dtype=jnp.float32) * (1.0 / jnp.sqrt(F_IN))
    b1 = jax.random.normal(kb1, (HIDDEN,), dtype=jnp.float32) * 0.01
    w2 = jax.random.normal(kw2, (HIDDEN, OUT_C), dtype=jnp.float32) * (1.0 / jnp.sqrt(HIDDEN))
    b2 = jax.random.normal(kb2, (OUT_C,), dtype=jnp.float32) * 0.01
    params = (w1, b1, w2, b2)

    fwd = jax.jit(functools.partial(appnp_net_forward, K=K_STEPS, alpha=ALPHA))
    out = jax.block_until_ready(fwd(x, edge_index, params))
    assert out.shape == (N, OUT_C)

    # Tight check against a reference that mirrors the kernel's bf16 arithmetic.
    ref_b = _ref_forward_bf16(x, edge_index, params, K=K_STEPS, alpha=ALPHA)
    assert jnp.allclose(out, ref_b, atol=3e-3, rtol=3e-3), "mismatch vs bf16 reference"

    # Loose sanity check vs the full f32 reference (bf16 rounding error only).
    ref_f = _ref_forward_f32(x, edge_index, params, K=K_STEPS, alpha=ALPHA)
    assert jnp.allclose(out, ref_f, atol=1e-1, rtol=1e-1), "mismatch vs f32 reference"

    # log_softmax rows should exp-sum to 1
    assert jnp.allclose(jnp.sum(jnp.exp(out), axis=1), 1.0, atol=1e-3)

    print("KERNEL_OK")
</pallas_src>

<mosaic_0001>
module attributes {stable_mosaic.version = 11 : i64} {
  func.func private @main(%arg0: i32) attributes {dimension_semantics = [#tpu.dimension_semantics<core_parallel>], iteration_bounds = array<i64: 2>, tpu.core_type = #tpu.core_type<sc_scalar_subcore>, window_params = []} {
    return
  }
}

module attributes {stable_mosaic.version = 11 : i64} {
  func.func private @main(%arg0: i32) attributes {dimension_semantics = [#tpu.dimension_semantics<core_parallel>], iteration_bounds = array<i64: 2>, tpu.core_type = #tpu.core_type<sc_scalar_subcore>, window_params = []} {
    return
  }
}

module attributes {stable_mosaic.version = 11 : i64} {
  func.func @_mlp_kernel(%arg0: i32, %arg1: memref<512x128xf32, #tpu.memory_space<vmem>>, %arg2: memref<128x128xf32, #tpu.memory_space<vmem>>, %arg3: memref<1x128xf32, #tpu.memory_space<vmem>>, %arg4: memref<128x128xf32, #tpu.memory_space<vmem>>, %arg5: memref<1x128xf32, #tpu.memory_space<vmem>>, %arg6: memref<512x128xbf16, #tpu.memory_space<vmem>>, %arg7: memref<512x128xf32, #tpu.memory_space<vmem>>) attributes {dimension_semantics = [#tpu.dimension_semantics<parallel>], iteration_bounds = array<i64: 1>, scalar_prefetch = 0 : i64, scratch_operands = 0 : i64, tpu.core_type = #tpu.core_type<tc>, window_params = [{transform_indices = @transform_0, window_bounds = array<i64: 512, 128>}, {pipeline_mode = #tpu.pipeline_mode<synchronous>, transform_indices = @transform_1, window_bounds = array<i64: 128, 128>}, {pipeline_mode = #tpu.pipeline_mode<synchronous>, transform_indices = @transform_2, window_bounds = array<i64: 1, 128>}, {pipeline_mode = #tpu.pipeline_mode<synchronous>, transform_indices = @transform_3, window_bounds = array<i64: 128, 128>}, {pipeline_mode = #tpu.pipeline_mode<synchronous>, transform_indices = @transform_4, window_bounds = array<i64: 1, 128>}, {transform_indices = @transform_5, window_bounds = array<i64: 512, 128>}, {transform_indices = @transform_6, window_bounds = array<i64: 512, 128>}]} {
    %c0 = arith.constant 0 : index
    %c0_0 = arith.constant 0 : index
    %0 = vector.load %arg1[%c0, %c0_0] : memref<512x128xf32, #tpu.memory_space<vmem>>, vector<512x128xf32>
    %1 = arith.truncf %0 : vector<512x128xf32> to vector<512x128xbf16>
    %c0_1 = arith.constant 0 : index
    %c0_2 = arith.constant 0 : index
    %2 = vector.load %arg2[%c0_1, %c0_2] : memref<128x128xf32, #tpu.memory_space<vmem>>, vector<128x128xf32>
    %3 = arith.truncf %2 : vector<128x128xf32> to vector<128x128xbf16>
    %cst = arith.constant dense<0.000000e+00> : vector<512x128xf32>
    %4 = tpu.matmul %1, %3, %cst {dimension_numbers = #tpu.dot_dimension_numbers<[1], [0], [0], [1], [0, 0, 1, 1], [], []>} : vector<512x128xbf16>, vector<128x128xbf16>, vector<512x128xf32> -> vector<512x128xf32>
    %c0_3 = arith.constant 0 : index
    %c0_4 = arith.constant 0 : index
    %5 = vector.load %arg3[%c0_3, %c0_4] : memref<1x128xf32, #tpu.memory_space<vmem>>, vector<1x128xf32>
    %6 = vector.broadcast %5 : vector<1x128xf32> to vector<512x128xf32>
    %7 = arith.addf %4, %6 : vector<512x128xf32>
    %cst_5 = arith.constant 0.000000e+00 : f32
    %8 = vector.broadcast %cst_5 : f32 to vector<512x128xf32>
    %9 = arith.maximumf %7, %8 : vector<512x128xf32>
    %10 = arith.truncf %9 : vector<512x128xf32> to vector<512x128xbf16>
    %c0_6 = arith.constant 0 : index
    %c0_7 = arith.constant 0 : index
    %11 = vector.load %arg4[%c0_6, %c0_7] : memref<128x128xf32, #tpu.memory_space<vmem>>, vector<128x128xf32>
    %12 = arith.truncf %11 : vector<128x128xf32> to vector<128x128xbf16>
    %cst_8 = arith.constant dense<0.000000e+00> : vector<512x128xf32>
    %13 = tpu.matmul %10, %12, %cst_8 {dimension_numbers = #tpu.dot_dimension_numbers<[1], [0], [0], [1], [0, 0, 1, 1], [], []>} : vector<512x128xbf16>, vector<128x128xbf16>, vector<512x128xf32> -> vector<512x128xf32>
    %c0_9 = arith.constant 0 : index
    %c0_10 = arith.constant 0 : index
    %14 = vector.load %arg5[%c0_9, %c0_10] : memref<1x128xf32, #tpu.memory_space<vmem>>, vector<1x128xf32>
    %15 = vector.broadcast %14 : vector<1x128xf32> to vector<512x128xf32>
    %16 = arith.addf %13, %15 : vector<512x128xf32>
    %17 = arith.truncf %16 : vector<512x128xf32> to vector<512x128xbf16>
    %c0_11 = arith.constant 0 : index
    %c0_12 = arith.constant 0 : index
    %18 = vector.load %arg6[%c0_11, %c0_12] : memref<512x128xbf16, #tpu.memory_space<vmem>>, vector<512x128xbf16>
    tpu.vector_store %arg6[%c0_11, %c0_12], %17 {strides = array<i32>} : memref<512x128xbf16, #tpu.memory_space<vmem>>, vector<512x128xbf16>,
    %cst_13 = arith.constant 1.000000e-01 : f32
    %19 = vector.broadcast %cst_13 : f32 to vector<512x128xf32>
    %20 = arith.mulf %19, %16 : vector<512x128xf32>
    %c0_14 = arith.constant 0 : index
    %c0_15 = arith.constant 0 : index
    %21 = vector.load %arg7[%c0_14, %c0_15] : memref<512x128xf32, #tpu.memory_space<vmem>>, vector<512x128xf32>
    tpu.vector_store %arg7[%c0_14, %c0_15], %20 {strides = array<i32>} : memref<512x128xf32, #tpu.memory_space<vmem>>, vector<512x128xf32>,
    return
  }
  func.func @transform_0(%arg0: i32) -> (i32, i32) {
    %c0_i32 = arith.constant 0 : i32
    %c0_i32_0 = arith.constant 0 : i32
    return %arg0, %c0_i32 : i32, i32
  }
  func.func @transform_1(%arg0: i32) -> (i32, i32) {
    %c0_i32 = arith.constant 0 : i32
    %c0_i32_0 = arith.constant 0 : i32
    %c0_i32_1 = arith.constant 0 : i32
    return %c0_i32, %c0_i32_0 : i32, i32
  }
  func.func @transform_2(%arg0: i32) -> (i32, i32) {
    %c0_i32 = arith.constant 0 : i32
    %c0_i32_0 = arith.constant 0 : i32
    %c0_i32_1 = arith.constant 0 : i32
    return %c0_i32, %c0_i32_0 : i32, i32
  }
  func.func @transform_3(%arg0: i32) -> (i32, i32) {
    %c0_i32 = arith.constant 0 : i32
    %c0_i32_0 = arith.constant 0 : i32
    %c0_i32_1 = arith.constant 0 : i32
    return %c0_i32, %c0_i32_0 : i32, i32
  }
  func.func @transform_4(%arg0: i32) -> (i32, i32) {
    %c0_i32 = arith.constant 0 : i32
    %c0_i32_0 = arith.constant 0 : i32
    %c0_i32_1 = arith.constant 0 : i32
    return %c0_i32, %c0_i32_0 : i32, i32
  }
  func.func @transform_5(%arg0: i32) -> (i32, i32) {
    %c0_i32 = arith.constant 0 : i32
    %c0_i32_0 = arith.constant 0 : i32
    return %arg0, %c0_i32 : i32, i32
  }
  func.func @transform_6(%arg0: i32) -> (i32, i32) {
    %c0_i32 = arith.constant 0 : i32
    %c0_i32_0 = arith.constant 0 : i32
    return %arg0, %c0_i32 : i32, i32
  }
}

module attributes {stable_mosaic.version = 11 : i64} {
  func.func @_prop_fused_kernel(%arg0: i32, %arg1: i32, %arg2: i32, %arg3: memref<512x512xbf16, #tpu.memory_space<vmem>>, %arg4: memref<512x128xbf16, #tpu.memory_space<vmem>>, %arg5: memref<512x128xf32, #tpu.memory_space<vmem>>, %arg6: memref<512x128xf32, #tpu.memory_space<vmem>>, %arg7: memref<2x512x128xbf16, #tpu.memory_space<vmem>>) attributes {dimension_semantics = [#tpu.dimension_semantics<arbitrary>, #tpu.dimension_semantics<arbitrary>, #tpu.dimension_semantics<arbitrary>], iteration_bounds = array<i64: 10, 1, 1>, scalar_prefetch = 0 : i64, scratch_operands = 1 : i64, tpu.core_type = #tpu.core_type<tc>, window_params = [{transform_indices = @transform_0, window_bounds = array<i64: 512, 512>}, {pipeline_mode = #tpu.pipeline_mode<synchronous>, transform_indices = @transform_1, window_bounds = array<i64: 512, 128>}, {pipeline_mode = #tpu.pipeline_mode<synchronous>, transform_indices = @transform_2, window_bounds = array<i64: 512, 128>}, {transform_indices = @transform_3, window_bounds = array<i64: 512, 128>}]} {
    %c0_i32 = arith.constant 0 : i32
    %0 = arith.cmpi eq, %arg0, %c0_i32 : i32
    %c0_i32_0 = arith.constant 0 : i32
    %1 = arith.cmpi eq, %arg1, %c0_i32_0 : i32
    %2 = arith.andi %0, %1 : i1
    %c0_i32_1 = arith.constant 0 : i32
    %3 = arith.cmpi eq, %arg2, %c0_i32_1 : i32
    %4 = arith.andi %2, %3 : i1
    %5 = arith.extui %4 : i1 to i32
    %c0_i32_2 = arith.constant 0 : i32
    %6 = arith.cmpi ne, %5, %c0_i32_2 : i32
    scf.if %6 {
      %c0_16 = arith.constant 0 : index
      %c0_17 = arith.constant 0 : index
      %33 = vector.load %arg4[%c0_16, %c0_17] : memref<512x128xbf16, #tpu.memory_space<vmem>>, vector<512x128xbf16>
      %c0_18 = arith.constant 0 : index
      %c0_19 = arith.constant 0 : index
      %c0_20 = arith.constant 0 : index
      %34 = vector.load %arg7[%c0_18, %c0_19, %c0_20] : memref<2x512x128xbf16, #tpu.memory_space<vmem>>, vector<1x512x128xbf16>
      %35 = vector.shape_cast %34 : vector<1x512x128xbf16> to vector<512x128xbf16>
      %36 = vector.shape_cast %33 : vector<512x128xbf16> to vector<1x512x128xbf16>
      tpu.vector_store %arg7[%c0_18, %c0_19, %c0_20], %36 {strides = array<i32>} : memref<2x512x128xbf16, #tpu.memory_space<vmem>>, vector<1x512x128xbf16>,
    } else {
    }
    %c2_i32 = arith.constant 2 : i32
    %7 = arith.remsi %arg0, %c2_i32 : i32
    %c512_i32 = arith.constant 512 : i32
    %8 = arith.muli %arg1, %c512_i32 : i32
    %9 = tpu.assume_multiple %8, 512 : i32
    %c0_i32_3 = arith.constant 0 : i32
    %10 = arith.cmpi eq, %arg2, %c0_i32_3 : i32
    %11 = arith.extui %10 : i1 to i32
    %c0_i32_4 = arith.constant 0 : i32
    %12 = arith.cmpi ne, %11, %c0_i32_4 : i32
    scf.if %12 {
      %33 = arith.index_cast %9 : i32 to index
      %c0_16 = arith.constant 0 : index
      %34 = vector.load %arg5[%33, %c0_16] : memref<512x128xf32, #tpu.memory_space<vmem>>, vector<512x128xf32>
      %c0_17 = arith.constant 0 : index
      %c0_18 = arith.constant 0 : index
      %35 = vector.load %arg6[%c0_17, %c0_18] : memref<512x128xf32, #tpu.memory_space<vmem>>, vector<512x128xf32>
      tpu.vector_store %arg6[%c0_17, %c0_18], %34 {strides = array<i32>} : memref<512x128xf32, #tpu.memory_space<vmem>>, vector<512x128xf32>,
    } else {
    }
    %c512_i32_5 = arith.constant 512 : i32
    %13 = arith.muli %arg2, %c512_i32_5 : i32
    %14 = tpu.assume_multiple %13, 512 : i32
    %15 = arith.index_cast %7 : i32 to index
    %16 = arith.index_cast %14 : i32 to index
    %c0 = arith.constant 0 : index
    %17 = vector.load %arg7[%15, %16, %c0] : memref<2x512x128xbf16, #tpu.memory_space<vmem>>, vector<1x512x128xbf16>
    %18 = vector.shape_cast %17 : vector<1x512x128xbf16> to vector<512x128xbf16>
    %c0_6 = arith.constant 0 : index
    %c0_7 = arith.constant 0 : index
    %19 = vector.load %arg6[%c0_6, %c0_7] : memref<512x128xf32, #tpu.memory_space<vmem>>, vector<512x128xf32>
    %c0_8 = arith.constant 0 : index
    %c0_9 = arith.constant 0 : index
    %20 = vector.load %arg3[%c0_8, %c0_9] : memref<512x512xbf16, #tpu.memory_space<vmem>>, vector<512x512xbf16>
    %cst = arith.constant dense<0.000000e+00> : vector<512x128xf32>
    %21 = tpu.matmul %20, %18, %cst {dimension_numbers = #tpu.dot_dimension_numbers<[1], [0], [0], [1], [0, 0, 1, 1], [], []>} : vector<512x512xbf16>, vector<512x128xbf16>, vector<512x128xf32> -> vector<512x128xf32>
    %22 = arith.addf %19, %21 : vector<512x128xf32>
    %c0_10 = arith.constant 0 : index
    %c0_11 = arith.constant 0 : index
    %23 = vector.load %arg6[%c0_10, %c0_11] : memref<512x128xf32, #tpu.memory_space<vmem>>, vector<512x128xf32>
    tpu.vector_store %arg6[%c0_10, %c0_11], %22 {strides = array<i32>} : memref<512x128xf32, #tpu.memory_space<vmem>>, vector<512x128xf32>,
    %c0_i32_12 = arith.constant 0 : i32
    %24 = arith.cmpi eq, %arg2, %c0_i32_12 : i32
    %c9_i32 = arith.constant 9 : i32
    %25 = arith.cmpi slt, %arg0, %c9_i32 : i32
    %26 = arith.andi %24, %25 : i1
    %27 = arith.extui %26 : i1 to i32
    %c0_i32_13 = arith.constant 0 : i32
    %28 = arith.cmpi ne, %27, %c0_i32_13 : i32
    scf.if %28 {
      %c0_16 = arith.constant 0 : index
      %c0_17 = arith.constant 0 : index
      %33 = vector.load %arg6[%c0_16, %c0_17] : memref<512x128xf32, #tpu.memory_space<vmem>>, vector<512x128xf32>
      %34 = arith.truncf %33 : vector<512x128xf32> to vector<512x128xbf16>
      %c1_i32 = arith.constant 1 : i32
      %35 = arith.subi %c1_i32, %7 : i32
      %36 = arith.index_cast %35 : i32 to index
      %37 = arith.index_cast %9 : i32 to index
      %c0_18 = arith.constant 0 : index
      %38 = vector.load %arg7[%36, %37, %c0_18] : memref<2x512x128xbf16, #tpu.memory_space<vmem>>, vector<1x512x128xbf16>
      %39 = vector.shape_cast %38 : vector<1x512x128xbf16> to vector<512x128xbf16>
      %40 = vector.shape_cast %34 : vector<512x128xbf16> to vector<1x512x128xbf16>
      tpu.vector_store %arg7[%36, %37, %c0_18], %40 {strides = array<i32>} : memref<2x512x128xbf16, #tpu.memory_space<vmem>>, vector<1x512x128xbf16>,
    } else {
    }
    %c9_i32_14 = arith.constant 9 : i32
    %29 = arith.cmpi eq, %arg0, %c9_i32_14 : i32
    %30 = arith.andi %24, %29 : i1
    %31 = arith.extui %30 : i1 to i32
    %c0_i32_15 = arith.constant 0 : i32
    %32 = arith.cmpi ne, %31, %c0_i32_15 : i32
    scf.if %32 {
      %c0_16 = arith.constant 0 : index
      %c0_17 = arith.constant 0 : index
      %33 = vector.load %arg6[%c0_16, %c0_17] : memref<512x128xf32, #tpu.memory_space<vmem>>, vector<512x128xf32>
      %34 = tpu.iota {dimensions = array<i32: 1>} : vector<512x128xi32>
      %c4_i32 = arith.constant 4 : i32
      %35 = vector.broadcast %c4_i32 : i32 to vector<512x128xi32>
      %36 = arith.cmpi slt, %34, %35 : vector<512x128xi32>
      %cst_18 = arith.constant -1.000000e+30 : f32
      %37 = vector.broadcast %cst_18 : f32 to vector<512x128xf32>
      %38 = arith.select %36, %33, %37 : vector<512x128xi1>, vector<512x128xf32>
      %cst_19 = arith.constant dense<0xFF800000> : vector<512xf32>
      %39 = vector.multi_reduction <maximumf>, %38, %cst_19 [1] : vector<512x128xf32> to vector<512xf32>
      %40 = vector.shape_cast %39 : vector<512xf32> to vector<512x1xf32>
      %41 = vector.broadcast %40 : vector<512x1xf32> to vector<512x128xf32>
      %42 = arith.subf %38, %41 : vector<512x128xf32>
      %43 = math.exp %42 : vector<512x128xf32>
      %cst_20 = arith.constant dense<0.000000e+00> : vector<512xf32>
      %44 = vector.multi_reduction <add>, %43, %cst_20 [1] : vector<512x128xf32> to vector<512xf32>
      %45 = vector.shape_cast %44 : vector<512xf32> to vector<512x1xf32>
      %46 = math.log %45 : vector<512x1xf32>
      %47 = vector.broadcast %46 : vector<512x1xf32> to vector<512x128xf32>
      %48 = arith.subf %42, %47 : vector<512x128xf32>
      %c0_21 = arith.constant 0 : index
      %c0_22 = arith.constant 0 : index
      %49 = vector.load %arg6[%c0_21, %c0_22] : memref<512x128xf32, #tpu.memory_space<vmem>>, vector<512x128xf32>
      tpu.vector_store %arg6[%c0_21, %c0_22], %48 {strides = array<i32>} : memref<512x128xf32, #tpu.memory_space<vmem>>, vector<512x128xf32>,
    } else {
    }
    return
  }
  func.func @transform_0(%arg0: i32, %arg1: i32, %arg2: i32) -> (i32, i32) {
    %c0_i32 = arith.constant 0 : i32
    return %arg1, %arg2 : i32, i32
  }
  func.func @transform_1(%arg0: i32, %arg1: i32, %arg2: i32) -> (i32, i32) {
    %c0_i32 = arith.constant 0 : i32
    %c0_i32_0 = arith.constant 0 : i32
    %c0_i32_1 = arith.constant 0 : i32
    return %c0_i32, %c0_i32_0 : i32, i32
  }
  func.func @transform_2(%arg0: i32, %arg1: i32, %arg2: i32) -> (i32, i32) {
    %c0_i32 = arith.constant 0 : i32
    %c0_i32_0 = arith.constant 0 : i32
    %c0_i32_1 = arith.constant 0 : i32
    return %c0_i32, %c0_i32_0 : i32, i32
  }
  func.func @transform_3(%arg0: i32, %arg1: i32, %arg2: i32) -> (i32, i32) {
    %c0_i32 = arith.constant 0 : i32
    %c0_i32_0 = arith.constant 0 : i32
    return %arg1, %c0_i32 : i32, i32
  }
}

</mosaic_0001>

<llo_original>
// kernel: mul.4
$region0: #{mul.4}
  #allocation0 [shape = 's32[1]{0}', space=sflag, size = 0x4, scoped, tag = 'scoped memory for mul.4']
  %s0 = inlined_call_operand.vmem [shape: f32[48], index: 0, kind: input, shape index: {}]
  %s1 = inlined_call_operand.vmem [shape: f32[48], index: 1, kind: input, shape index: {}]
  %s2 = inlined_call_operand.vmem [shape: f32[48], index: 2, kind: output, shape index: {}]
  %v3 = vld [vmem:[%s0] sm:$0x1]
  %v4 = vld [vmem:[%s1] sm:$0x1]
  %5 = xla_tuple %v3, %v4
  %6 = xla_tuple %5
  %v7 = vmul.f32 %v3, %v4
  %8 = xla_tuple %v7
  %9 = vst [vmem:[%s2] sm:$0x1] %v7

// kernel: appnp_net_forward.2
$region0: #{appnp_net_forward.2}
  #allocation0 [shape = 'u32[]', space=smem, size = 0x4, offset = 0x4, fixed_abs, tag = 'smem constant byte address 0x4 - core index']
  #allocation1 [shape = 'u32[144,128]{1,0:T(1,128)}', space=vmem, size = 0x12000, scoped, tag = 'internal scratch']
  %s0 = inlined_call_operand.vmem [shape: f32[512,128], index: 0, kind: input, shape index: {}]
  %s1 = inlined_call_operand.vmem [shape: f32[128,128], index: 1, kind: input, shape index: {}]
  %s2 = inlined_call_operand.vmem [shape: f32[1,128], index: 2, kind: input, shape index: {}]
  %s3 = inlined_call_operand.vmem [shape: f32[128,128], index: 3, kind: input, shape index: {}]
  %s4 = inlined_call_operand.vmem [shape: f32[1,128], index: 4, kind: input, shape index: {}]
  %s5 = inlined_call_operand.vmem [shape: bf16[512,128], index: 5, kind: output, shape index: {0}]
  %s6 = inlined_call_operand.vmem [shape: f32[512,128], index: 6, kind: output, shape index: {1}]
  %7 = xla_tuple %s5, %s6
  %s8 = sld [smem:[#allocation0]]
  $region38: #{appnp_net_forward.2} parent=0
    _
  %s10 = ssub.s32 1, %s8
  %s11 = scalar_select 0, %s10, %s8
  // Predicated region
  $region2: #{appnp_net_forward.2} parent=0 // pred_check
    _
  $region3: #{appnp_net_forward.2} parent=0 // pred_check_branch
    %13 = sbr.rel (0) target = $region5
  $region4: #{appnp_net_forward.2} parent=0 // pred_region
    _
  $region5: #{appnp_net_forward.2} parent=0 // pred_fallthru
    _
  // Predicated region
  $region6: #{appnp_net_forward.2} parent=0 // pred_check
    _
  $region7: #{appnp_net_forward.2} parent=0 // pred_check_branch
    %15 = sbr.rel (0) target = $region9
  $region8: #{appnp_net_forward.2} parent=0 // pred_region
    _
  $region9: #{appnp_net_forward.2} parent=0 // pred_fallthru
    _
  // Predicated region
  $region10: #{appnp_net_forward.2} parent=0 // pred_check
    _
  $region11: #{appnp_net_forward.2} parent=0 // pred_check_branch
    %17 = sbr.rel (0) target = $region13
  $region12: #{appnp_net_forward.2} parent=0 // pred_region
    _
  $region13: #{appnp_net_forward.2} parent=0 // pred_fallthru
    _
  // Predicated region
  $region14: #{appnp_net_forward.2} parent=0 // pred_check
    _
  $region15: #{appnp_net_forward.2} parent=0 // pred_check_branch
    %19 = sbr.rel (0) target = $region17
  $region16: #{appnp_net_forward.2} parent=0 // pred_region
    _
  $region17: #{appnp_net_forward.2} parent=0 // pred_fallthru
    _
  // Predicated region
  $region18: #{appnp_net_forward.2} parent=0 // pred_check
    _
  $region19: #{appnp_net_forward.2} parent=0 // pred_check_branch
    %21 = sbr.rel (0) target = $region21
  $region20: #{appnp_net_forward.2} parent=0 // pred_region
    _
  $region21: #{appnp_net_forward.2} parent=0 // pred_fallthru
    _
  %v23 = vld [vmem:[%s0] sm:$0xff]
  %v24 = vld [vmem:[%s0 + $0x8] sm:$0xff]
  %v25 = vld [vmem:[%s0 + $0x10] sm:$0xff]
  %v26 = vld [vmem:[%s0 + $0x18] sm:$0xff]
  %v27 = vld [vmem:[%s0 + $0x20] sm:$0xff]
  %v28 = vld [vmem:[%s0 + $0x28] sm:$0xff]
  %v29 = vld [vmem:[%s0 + $0x30] sm:$0xff]
  %v30 = vld [vmem:[%s0 + $0x38] sm:$0xff]
  %v31 = vld [vmem:[%s0 + $0x40] sm:$0xff]
  %v32 = vld [vmem:[%s0 + $0x48] sm:$0xff]
  %v33 = vld [vmem:[%s0 + $0x50] sm:$0xff]
  %v34 = vld [vmem:[%s0 + $0x58] sm:$0xff]
  %v35 = vld [vmem:[%s0 + $0x60] sm:$0xff]
  %v36 = vld [vmem:[%s0 + $0x68] sm:$0xff]
  %v37 = vld [vmem:[%s0 + $0x70] sm:$0xff]
  %v38 = vld [vmem:[%s0 + $0x78] sm:$0xff]
  %v39 = vld [vmem:[%s0 + $0x80] sm:$0xff]
  %v40 = vld [vmem:[%s0 + $0x88] sm:$0xff]
  %v41 = vld [vmem:[%s0 + $0x90] sm:$0xff]
  %v42 = vld [vmem:[%s0 + $0x98] sm:$0xff]
  %v43 = vld [vmem:[%s0 + $0xa0] sm:$0xff]
  %v44 = vld [vmem:[%s0 + $0xa8] sm:$0xff]
  %v45 = vld [vmem:[%s0 + $0xb0] sm:$0xff]
  %v46 = vld [vmem:[%s0 + $0xb8] sm:$0xff]
  %v47 = vld [vmem:[%s0 + $0xc0] sm:$0xff]
  %v48 = vld [vmem:[%s0 + $0xc8] sm:$0xff]
  %v49 = vld [vmem:[%s0 + $0xd0] sm:$0xff]
  %v50 = vld [vmem:[%s0 + $0xd8] sm:$0xff]
  %v51 = vld [vmem:[%s0 + $0xe0] sm:$0xff]
  %v52 = vld [vmem:[%s0 + $0xe8] sm:$0xff]
  %v53 = vld [vmem:[%s0 + $0xf0] sm:$0xff]
  %v54 = vld [vmem:[%s0 + $0xf8] sm:$0xff]
  %v55 = vld [vmem:[%s0 + $0x100] sm:$0xff]
  %v56 = vld [vmem:[%s0 + $0x108] sm:$0xff]
  %v57 = vld [vmem:[%s0 + $0x110] sm:$0xff]
  %v58 = vld [vmem:[%s0 + $0x118] sm:$0xff]
  %v59 = vld [vmem:[%s0 + $0x120] sm:$0xff]
  %v60 = vld [vmem:[%s0 + $0x128] sm:$0xff]
  %v61 = vld [vmem:[%s0 + $0x130] sm:$0xff]
  %v62 = vld [vmem:[%s0 + $0x138] sm:$0xff]
  %v63 = vld [vmem:[%s0 + $0x140] sm:$0xff]
  %v64 = vld [vmem:[%s0 + $0x148] sm:$0xff]
  %v65 = vld [vmem:[%s0 + $0x150] sm:$0xff]
  %v66 = vld [vmem:[%s0 + $0x158] sm:$0xff]
  %v67 = vld [vmem:[%s0 + $0x160] sm:$0xff]
  %v68 = vld [vmem:[%s0 + $0x168] sm:$0xff]
  %v69 = vld [vmem:[%s0 + $0x170] sm:$0xff]
  %v70 = vld [vmem:[%s0 + $0x178] sm:$0xff]
  %v71 = vld [vmem:[%s0 + $0x180] sm:$0xff]
  %v72 = vld [vmem:[%s0 + $0x188] sm:$0xff]
  %v73 = vld [vmem:[%s0 + $0x190] sm:$0xff]
  %v74 = vld [vmem:[%s0 + $0x198] sm:$0xff]
  %v75 = vld [vmem:[%s0 + $0x1a0] sm:$0xff]
  %v76 = vld [vmem:[%s0 + $0x1a8] sm:$0xff]
  %v77 = vld [vmem:[%s0 + $0x1b0] sm:$0xff]
  %v78 = vld [vmem:[%s0 + $0x1b8] sm:$0xff]
  %v79 = vld [vmem:[%s0 + $0x1c0] sm:$0xff]
  %v80 = vld [vmem:[%s0 + $0x1c8] sm:$0xff]
  %v81 = vld [vmem:[%s0 + $0x1d0] sm:$0xff]
  %v82 = vld [vmem:[%s0 + $0x1d8] sm:$0xff]
  %v83 = vld [vmem:[%s0 + $0x1e0] sm:$0xff]
  %v84 = vld [vmem:[%s0 + $0x1e8] sm:$0xff]
  %v85 = vld [vmem:[%s0 + $0x1f0] sm:$0xff]
  %v86 = vld [vmem:[%s0 + $0x1f8] sm:$0xff]
  %v87 = vpack.c.bf16 %v24, %v23
  %v88 = vpack.c.bf16 %v26, %v25
  %v89 = vpack.c.bf16 %v28, %v27
  %v90 = vpack.c.bf16 %v30, %v29
  %v91 = vpack.c.bf16 %v32, %v31
  %v92 = vpack.c.bf16 %v34, %v33
  %v93 = vpack.c.bf16 %v36, %v35
  %v94 = vpack.c.bf16 %v38, %v37
  %v95 = vpack.c.bf16 %v40, %v39
  %v96 = vpack.c.bf16 %v42, %v41
  %v97 = vpack.c.bf16 %v44, %v43
  %v98 = vpack.c.bf16 %v46, %v45
  %v99 = vpack.c.bf16 %v48, %v47
  %v100 = vpack.c.bf16 %v50, %v49
  %v101 = vpack.c.bf16 %v52, %v51
  %v102 = vpack.c.bf16 %v54, %v53
  %v103 = vpack.c.bf16 %v56, %v55
  %v104 = vpack.c.bf16 %v58, %v57
  %v105 = vpack.c.bf16 %v60, %v59
  %v106 = vpack.c.bf16 %v62, %v61
  %v107 = vpack.c.bf16 %v64, %v63
  %v108 = vpack.c.bf16 %v66, %v65
  %v109 = vpack.c.bf16 %v68, %v67
  %v110 = vpack.c.bf16 %v70, %v69
  %v111 = vpack.c.bf16 %v72, %v71
  %v112 = vpack.c.bf16 %v74, %v73
  %v113 = vpack.c.bf16 %v76, %v75
  %v114 = vpack.c.bf16 %v78, %v77
  %v115 = vpack.c.bf16 %v80, %v79
  %v116 = vpack.c.bf16 %v82, %v81
  %v117 = vpack.c.bf16 %v84, %v83
  %v118 = vpack.c.bf16 %v86, %v85
  %v119 = vld [vmem:[%s1] sm:$0xff]
  %v120 = vld [vmem:[%s1 + $0x8] sm:$0xff]
  %v121 = vld [vmem:[%s1 + $0x10] sm:$0xff]
  %v122 = vld [vmem:[%s1 + $0x18] sm:$0xff]
  %v123 = vld [vmem:[%s1 + $0x20] sm:$0xff]
  %v124 = vld [vmem:[%s1 + $0x28] sm:$0xff]
  %v125 = vld [vmem:[%s1 + $0x30] sm:$0xff]
  %v126 = vld [vmem:[%s1 + $0x38] sm:$0xff]
  %v127 = vld [vmem:[%s1 + $0x40] sm:$0xff]
  %v128 = vld [vmem:[%s1 + $0x48] sm:$0xff]
  %v129 = vld [vmem:[%s1 + $0x50] sm:$0xff]
  %v130 = vld [vmem:[%s1 + $0x58] sm:$0xff]
  %v131 = vld [vmem:[%s1 + $0x60] sm:$0xff]
  %v132 = vld [vmem:[%s1 + $0x68] sm:$0xff]
  %v133 = vld [vmem:[%s1 + $0x70] sm:$0xff]
  %v134 = vld [vmem:[%s1 + $0x78] sm:$0xff]
  %v135 = vpack.c.bf16 %v120, %v119
  %v136 = vpack.c.bf16 %v122, %v121
  %v137 = vpack.c.bf16 %v124, %v123
  %v138 = vpack.c.bf16 %v126, %v125
  %v139 = vpack.c.bf16 %v128, %v127
  %v140 = vpack.c.bf16 %v130, %v129
  %v141 = vpack.c.bf16 %v132, %v131
  %v142 = vpack.c.bf16 %v134, %v133
  %v143 = vld [vmem:[%s2] sm:$0x1]
  %v145 = vlaneseq
  %v146 = vshrl.u32 %v145, 7
  %v147 = vsub.s32 0, %v146
  %v148 = vrot.slane %v143, %v147
  %150 = vmatprep.subr.bf16.mxu0 0
  %151 = vmatpush1.bf16.msra.mxu0 %v142
  %152 = vmatprep.subr.bf16.mxu0 0
  %153 = vmatpush1.bf16.msra.mxu0 %v141
  %154 = vmatprep.subr.bf16.mxu0 0
  %155 = vmatpush1.bf16.msra.mxu0 %v140
  %156 = vmatprep.subr.bf16.mxu0 0
  %157 = vmatpush1.bf16.msra.mxu0 %v139
  %158 = vmatprep.subr.bf16.mxu0 0
  %159 = vmatpush1.bf16.msra.mxu0 %v138
  %160 = vmatprep.subr.bf16.mxu0 0
  %161 = vmatpush1.bf16.msra.mxu0 %v137
  %162 = vmatprep.subr.bf16.mxu0 0
  %163 = vmatpush1.bf16.msra.mxu0 %v136
  %164 = vmatprep.subr.bf16.mxu0 0
  %165 = vmatpush1.bf16.msra.mxu0 %v135
  %166 = vmatprep.subr.bf16.mxu0 0
  %167 = vmatpush2.bf16.msra.mxu0 0
  %168 = vmatprep.subr.bf16.mxu0 0
  %169 = vmatpush2.bf16.msra.mxu0 0
  %170 = vmatprep.subr.bf16.mxu0 0
  %171 = vmatpush2.bf16.msra.mxu0 0
  %172 = vmatprep.subr.bf16.mxu0 0
  %173 = vmatpush2.bf16.msra.mxu0 0
  %174 = vmatprep.subr.bf16.mxu0 0
  %175 = vmatpush2.bf16.msra.mxu0 0
  %176 = vmatprep.subr.bf16.mxu0 0
  %177 = vmatpush2.bf16.msra.mxu0 0
  %178 = vmatprep.subr.bf16.mxu0 0
  %179 = vmatpush2.bf16.msra.mxu0 0
  %180 = vmatprep.subr.bf16.mxu0 0
  %181 = vmatpush2.bf16.msra.mxu0 0
  %182 = vmatprep.mubr.bf16.mxu0 0
  %183 = vmatmul.mubr.bf16.gmra.mxu0 %v87
  %v184 = vpop.f32.mrf.mxu0
  %v185 = vadd.f32 %v148, %v184
  %v186 = vpop.f32.mrf.mxu0
  %v187 = vpop.f32.mrf.mxu0
  %v188 = vadd.f32 %v148, %v187
  %v189 = vpop.f32.mrf.mxu0
  %190 = vmatprep.mubr.bf16.mxu0 0
  %191 = vmatmul.mubr.bf16.gmra.mxu0 %v88
  %v192 = vpop.f32.mrf.mxu0
  %v193 = vadd.f32 %v148, %v192
  %v194 = vpop.f32.mrf.mxu0
  %v195 = vpop.f32.mrf.mxu0
  %v196 = vadd.f32 %v148, %v195
  %v197 = vpop.f32.mrf.mxu0
  %198 = vmatprep.mubr.bf16.mxu0 0
  %199 = vmatmul.mubr.bf16.gmra.mxu0 %v89
  %v200 = vpop.f32.mrf.mxu0
  %v201 = vadd.f32 %v148, %v200
  %v202 = vpop.f32.mrf.mxu0
  %v203 = vpop.f32.mrf.mxu0
  %v204 = vadd.f32 %v148, %v203
  %v205 = vpop.f32.mrf.mxu0
  %206 = vmatprep.mubr.bf16.mxu0 0
  %207 = vmatmul.mubr.bf16.gmra.mxu0 %v90
  %v208 = vpop.f32.mrf.mxu0
  %v209 = vadd.f32 %v148, %v208
  %v210 = vpop.f32.mrf.mxu0
  %v211 = vpop.f32.mrf.mxu0
  %v212 = vadd.f32 %v148, %v211
  %v213 = vpop.f32.mrf.mxu0
  %214 = vmatprep.mubr.bf16.mxu0 0
  %215 = vmatmul.mubr.bf16.gmra.mxu0 %v91
  %v216 = vpop.f32.mrf.mxu0
  %v217 = vadd.f32 %v148, %v216
  %v218 = vpop.f32.mrf.mxu0
  %v219 = vpop.f32.mrf.mxu0
  %v220 = vadd.f32 %v148, %v219
  %v221 = vpop.f32.mrf.mxu0
  %222 = vmatprep.mubr.bf16.mxu0 0
  %223 = vmatmul.mubr.bf16.gmra.mxu0 %v92
  %v224 = vpop.f32.mrf.mxu0
  %v225 = vadd.f32 %v148, %v224
  %v226 = vpop.f32.mrf.mxu0
  %v227 = vpop.f32.mrf.mxu0
  %v228 = vadd.f32 %v148, %v227
  %v229 = vpop.f32.mrf.mxu0
  %230 = vmatprep.mubr.bf16.mxu0 0
  %231 = vmatmul.mubr.bf16.gmra.mxu0 %v93
  %v232 = vpop.f32.mrf.mxu0
  %v233 = vadd.f32 %v148, %v232
  %v234 = vpop.f32.mrf.mxu0
  %v235 = vpop.f32.mrf.mxu0
  %v236 = vadd.f32 %v148, %v235
  %v237 = vpop.f32.mrf.mxu0
  %238 = vmatprep.mubr.bf16.mxu0 0
  %239 = vmatmul.mubr.bf16.gmra.mxu0 %v94
  %v240 = vpop.f32.mrf.mxu0
  %v241 = vadd.f32 %v148, %v240
  %v242 = vpop.f32.mrf.mxu0
  %v243 = vpop.f32.mrf.mxu0
  %v244 = vadd.f32 %v148, %v243
  %v245 = vpop.f32.mrf.mxu0
  %246 = vmatprep.mubr.bf16.mxu0 0
  %247 = vmatmul.mubr.bf16.gmra.mxu0 %v95
  %v248 = vpop.f32.mrf.mxu0
  %v249 = vadd.f32 %v148, %v248
  %v250 = vpop.f32.mrf.mxu0
  %v251 = vpop.f32.mrf.mxu0
  %v252 = vadd.f32 %v148, %v251
  %v253 = vpop.f32.mrf.mxu0
  %254 = vmatprep.mubr.bf16.mxu0 0
  %255 = vmatmul.mubr.bf16.gmra.mxu0 %v96
  %v256 = vpop.f32.mrf.mxu0
  %v257 = vadd.f32 %v148, %v256
  %v258 = vpop.f32.mrf.mxu0
  %v259 = vpop.f32.mrf.mxu0
  %v260 = vadd.f32 %v148, %v259
  %v261 = vpop.f32.mrf.mxu0
  %262 = vmatprep.mubr.bf16.mxu0 0
  %263 = vmatmul.mubr.bf16.gmra.mxu0 %v97
  %v264 = vpop.f32.mrf.mxu0
  %v265 = vadd.f32 %v148, %v264
  %v266 = vpop.f32.mrf.mxu0
  %v267 = vpop.f32.mrf.mxu0
  %v268 = vadd.f32 %v148, %v267
  %v269 = vpop.f32.mrf.mxu0
  %270 = vmatprep.mubr.bf16.mxu0 0
  %271 = vmatmul.mubr.bf16.gmra.mxu0 %v98
  %v272 = vpop.f32.mrf.mxu0
  %v273 = vadd.f32 %v148, %v272
  %v274 = vpop.f32.mrf.mxu0
  %v275 = vpop.f32.mrf.mxu0
  %v276 = vadd.f32 %v148, %v275
  %v277 = vpop.f32.mrf.mxu0
  %278 = vmatprep.mubr.bf16.mxu0 0
  %279 = vmatmul.mubr.bf16.gmra.mxu0 %v99
  %v280 = vpop.f32.mrf.mxu0
  %v281 = vadd.f32 %v148, %v280
  %v282 = vpop.f32.mrf.mxu0
  %v283 = vpop.f32.mrf.mxu0
  %v284 = vadd.f32 %v148, %v283
  %v285 = vpop.f32.mrf.mxu0
  %286 = vmatprep.mubr.bf16.mxu0 0
  %287 = vmatmul.mubr.bf16.gmra.mxu0 %v100
  %v288 = vpop.f32.mrf.mxu0
  %v289 = vadd.f32 %v148, %v288
  %v290 = vpop.f32.mrf.mxu0
  %v291 = vpop.f32.mrf.mxu0
  %v292 = vadd.f32 %v148, %v291
  %v293 = vpop.f32.mrf.mxu0
  %294 = vmatprep.mubr.bf16.mxu0 0
  %295 = vmatmul.mubr.bf16.gmra.mxu0 %v101
  %v296 = vpop.f32.mrf.mxu0
  %v297 = vadd.f32 %v148, %v296
  %v298 = vpop.f32.mrf.mxu0
  %v299 = vpop.f32.mrf.mxu0
  %v300 = vadd.f32 %v148, %v299
  %v301 = vpop.f32.mrf.mxu0
  %302 = vmatprep.mubr.bf16.mxu0 0
  %303 = vmatmul.mubr.bf16.gmra.mxu0 %v102
  %v304 = vpop.f32.mrf.mxu0
  %v305 = vadd.f32 %v148, %v304
  %v306 = vpop.f32.mrf.mxu0
  %v307 = vpop.f32.mrf.mxu0
  %v308 = vadd.f32 %v148, %v307
  %v309 = vpop.f32.mrf.mxu0
  %310 = vmatprep.mubr.bf16.mxu0 0
  %311 = vmatmul.mubr.bf16.gmra.mxu0 %v103
  %v312 = vpop.f32.mrf.mxu0
  %v313 = vadd.f32 %v148, %v312
  %v314 = vpop.f32.mrf.mxu0
  %v315 = vpop.f32.mrf.mxu0
  %v316 = vadd.f32 %v148, %v315
  %v317 = vpop.f32.mrf.mxu0
  %318 = vmatprep.mubr.bf16.mxu0 0
  %319 = vmatmul.mubr.bf16.gmra.mxu0 %v104
  %v320 = vpop.f32.mrf.mxu0
  %v321 = vadd.f32 %v148, %v320
  %v322 = vpop.f32.mrf.mxu0
  %v323 = vpop.f32.mrf.mxu0
  %v324 = vadd.f32 %v148, %v323
  %v325 = vpop.f32.mrf.mxu0
  %326 = vmatprep.mubr.bf16.mxu0 0
  %327 = vmatmul.mubr.bf16.gmra.mxu0 %v105
  %v328 = vpop.f32.mrf.mxu0
  %v329 = vadd.f32 %v148, %v328
  %v330 = vpop.f32.mrf.mxu0
  %v331 = vpop.f32.mrf.mxu0
  %v332 = vadd.f32 %v148, %v331
  %v333 = vpop.f32.mrf.mxu0
  %334 = vmatprep.mubr.bf16.mxu0 0
  %335 = vmatmul.mubr.bf16.gmra.mxu0 %v106
  %v336 = vpop.f32.mrf.mxu0
  %v337 = vadd.f32 %v148, %v336
  %v338 = vpop.f32.mrf.mxu0
  %v339 = vpop.f32.mrf.mxu0
  %v340 = vadd.f32 %v148, %v339
  %v341 = vpop.f32.mrf.mxu0
  %342 = vmatprep.mubr.bf16.mxu0 0
  %343 = vmatmul.mubr.bf16.gmra.mxu0 %v107
  %v344 = vpop.f32.mrf.mxu0
  %v345 = vadd.f32 %v148, %v344
  %v346 = vpop.f32.mrf.mxu0
  %v347 = vpop.f32.mrf.mxu0
  %v348 = vadd.f32 %v148, %v347
  %v349 = vpop.f32.mrf.mxu0
  %350 = vmatprep.mubr.bf16.mxu0 0
  %351 = vmatmul.mubr.bf16.gmra.mxu0 %v108
  %v352 = vpop.f32.mrf.mxu0
  %v353 = vadd.f32 %v148, %v352
  %v354 = vpop.f32.mrf.mxu0
  %v355 = vpop.f32.mrf.mxu0
  %v356 = vadd.f32 %v148, %v355
  %v357 = vpop.f32.mrf.mxu0
  %358 = vmatprep.mubr.bf16.mxu0 0
  %359 = vmatmul.mubr.bf16.gmra.mxu0 %v109
  %v360 = vpop.f32.mrf.mxu0
  %v361 = vadd.f32 %v148, %v360
  %v362 = vpop.f32.mrf.mxu0
  %v363 = vpop.f32.mrf.mxu0
  %v364 = vadd.f32 %v148, %v363
  %v365 = vpop.f32.mrf.mxu0
  %366 = vmatprep.mubr.bf16.mxu0 0
  %367 = vmatmul.mubr.bf16.gmra.mxu0 %v110
  %v368 = vpop.f32.mrf.mxu0
  %v369 = vadd.f32 %v148, %v368
  %v370 = vpop.f32.mrf.mxu0
  %v371 = vpop.f32.mrf.mxu0
  %v372 = vadd.f32 %v148, %v371
  %v373 = vpop.f32.mrf.mxu0
  %374 = vmatprep.mubr.bf16.mxu0 0
  %375 = vmatmul.mubr.bf16.gmra.mxu0 %v111
  %v376 = vpop.f32.mrf.mxu0
  %v377 = vadd.f32 %v148, %v376
  %v378 = vpop.f32.mrf.mxu0
  %v379 = vpop.f32.mrf.mxu0
  %v380 = vadd.f32 %v148, %v379
  %v381 = vpop.f32.mrf.mxu0
  %382 = vmatprep.mubr.bf16.mxu0 0
  %383 = vmatmul.mubr.bf16.gmra.mxu0 %v112
  %v384 = vpop.f32.mrf.mxu0
  %v385 = vadd.f32 %v148, %v384
  %v386 = vpop.f32.mrf.mxu0
  %v387 = vpop.f32.mrf.mxu0
  %v388 = vadd.f32 %v148, %v387
  %v389 = vpop.f32.mrf.mxu0
  %390 = vmatprep.mubr.bf16.mxu0 0
  %391 = vmatmul.mubr.bf16.gmra.mxu0 %v113
  %v392 = vpop.f32.mrf.mxu0
  %v393 = vadd.f32 %v148, %v392
  %v394 = vpop.f32.mrf.mxu0
  %v395 = vpop.f32.mrf.mxu0
  %v396 = vadd.f32 %v148, %v395
  %v397 = vpop.f32.mrf.mxu0
  %398 = vmatprep.mubr.bf16.mxu0 0
  %399 = vmatmul.mubr.bf16.gmra.mxu0 %v114
  %v400 = vpop.f32.mrf.mxu0
  %v401 = vadd.f32 %v148, %v400
  %v402 = vpop.f32.mrf.mxu0
  %v403 = vpop.f32.mrf.mxu0
  %v404 = vadd.f32 %v148, %v403
  %v405 = vpop.f32.mrf.mxu0
  %406 = vmatprep.mubr.bf16.mxu0 0
  %407 = vmatmul.mubr.bf16.gmra.mxu0 %v115
  %v408 = vpop.f32.mrf.mxu0
  %v409 = vadd.f32 %v148, %v408
  %v410 = vpop.f32.mrf.mxu0
  %v411 = vpop.f32.mrf.mxu0
  %v412 = vadd.f32 %v148, %v411
  %v413 = vpop.f32.mrf.mxu0
  %414 = vmatprep.mubr.bf16.mxu0 0
  %415 = vmatmul.mubr.bf16.gmra.mxu0 %v116
  %v416 = vpop.f32.mrf.mxu0
  %v417 = vadd.f32 %v148, %v416
  %v418 = vpop.f32.mrf.mxu0
  %v419 = vpop.f32.mrf.mxu0
  %v420 = vadd.f32 %v148, %v419
  %v421 = vpop.f32.mrf.mxu0
  %422 = vmatprep.mubr.bf16.mxu0 0
  %423 = vmatmul.mubr.bf16.gmra.mxu0 %v117
  %v424 = vpop.f32.mrf.mxu0
  %v425 = vadd.f32 %v148, %v424
  %v426 = vpop.f32.mrf.mxu0
  %v427 = vpop.f32.mrf.mxu0
  %v428 = vadd.f32 %v148, %v427
  %v429 = vpop.f32.mrf.mxu0
  %430 = vmatprep.mubr.bf16.mxu0 0
  %431 = vmatmul.mubr.bf16.gmra.mxu0 %v118
  %v432 = vpop.f32.mrf.mxu0
  %v433 = vadd.f32 %v148, %v432
  %v434 = vpop.f32.mrf.mxu0
  %v435 = vpop.f32.mrf.mxu0
  %v436 = vadd.f32 %v148, %v435
  %v437 = vpop.f32.mrf.mxu0
  %438 = vdwg.mxu0
  %v439 = vmax.f32 %v185, 0.0
  %v440 = vmax.f32 %v188, 0.0
  %v441 = vmax.f32 %v193, 0.0
  %v442 = vmax.f32 %v196, 0.0
  %v443 = vmax.f32 %v201, 0.0
  %v444 = vmax.f32 %v204, 0.0
  %v445 = vmax.f32 %v209, 0.0
  %v446 = vmax.f32 %v212, 0.0
  %v447 = vmax.f32 %v217, 0.0
  %v448 = vmax.f32 %v220, 0.0
  %v449 = vmax.f32 %v225, 0.0
  %v450 = vmax.f32 %v228, 0.0
  %v451 = vmax.f32 %v233, 0.0
  %v452 = vmax.f32 %v236, 0.0
  %v453 = vmax.f32 %v241, 0.0
  %v454 = vmax.f32 %v244, 0.0
  %v455 = vmax.f32 %v249, 0.0
  %v456 = vmax.f32 %v252, 0.0
  %v457 = vmax.f32 %v257, 0.0
  %v458 = vmax.f32 %v260, 0.0
  %v459 = vmax.f32 %v265, 0.0
  %v460 = vmax.f32 %v268, 0.0
  %v461 = vmax.f32 %v273, 0.0
  %v462 = vmax.f32 %v276, 0.0
  %v463 = vmax.f32 %v281, 0.0
  %v464 = vmax.f32 %v284, 0.0
  %v465 = vmax.f32 %v289, 0.0
  %v466 = vmax.f32 %v292, 0.0
  %v467 = vmax.f32 %v297, 0.0
  %v468 = vmax.f32 %v300, 0.0
  %v469 = vmax.f32 %v305, 0.0
  %v470 = vmax.f32 %v308, 0.0
  %v471 = vmax.f32 %v313, 0.0
  %v472 = vmax.f32 %v316, 0.0
  %v473 = vmax.f32 %v321, 0.0
  %v474 = vmax.f32 %v324, 0.0
  %v475 = vmax.f32 %v329, 0.0
  %v476 = vmax.f32 %v332, 0.0
  %v477 = vmax.f32 %v337, 0.0
  %v478 = vmax.f32 %v340, 0.0
  %v479 = vmax.f32 %v345, 0.0
  %v480 = vmax.f32 %v348, 0.0
  %v481 = vmax.f32 %v353, 0.0
  %v482 = vmax.f32 %v356, 0.0
  %v483 = vmax.f32 %v361, 0.0
  %v484 = vmax.f32 %v364, 0.0
  %v485 = vmax.f32 %v369, 0.0
  %v486 = vmax.f32 %v372, 0.0
  %v487 = vmax.f32 %v377, 0.0
  %v488 = vmax.f32 %v380, 0.0
  %v489 = vmax.f32 %v385, 0.0
  %v490 = vmax.f32 %v388, 0.0
  %v491 = vmax.f32 %v393, 0.0
  %v492 = vmax.f32 %v396, 0.0
  %v493 = vmax.f32 %v401, 0.0
  %v494 = vmax.f32 %v404, 0.0
  %v495 = vmax.f32 %v409, 0.0
  %v496 = vmax.f32 %v412, 0.0
  %v497 = vmax.f32 %v417, 0.0
  %v498 = vmax.f32 %v420, 0.0
  %v499 = vmax.f32 %v425, 0.0
  %v500 = vmax.f32 %v428, 0.0
  %v501 = vmax.f32 %v433, 0.0
  %v502 = vmax.f32 %v436, 0.0
  %v503 = vpack.c.bf16 %v440, %v439
  %v504 = vpack.c.bf16 %v442, %v441
  %v505 = vpack.c.bf16 %v444, %v443
  %v506 = vpack.c.bf16 %v446, %v445
  %v507 = vpack.c.bf16 %v448, %v447
  %v508 = vpack.c.bf16 %v450, %v449
  %v509 = vpack.c.bf16 %v452, %v451
  %v510 = vpack.c.bf16 %v454, %v453
  %v511 = vpack.c.bf16 %v456, %v455
  %v512 = vpack.c.bf16 %v458, %v457
  %v513 = vpack.c.bf16 %v460, %v459
  %v514 = vpack.c.bf16 %v462, %v461
  %v515 = vpack.c.bf16 %v464, %v463
  %v516 = vpack.c.bf16 %v466, %v465
  %v517 = vpack.c.bf16 %v468, %v467
  %v518 = vpack.c.bf16 %v470, %v469
  %v519 = vpack.c.bf16 %v472, %v471
  %v520 = vpack.c.bf16 %v474, %v473
  %v521 = vpack.c.bf16 %v476, %v475
  %v522 = vpack.c.bf16 %v478, %v477
  %v523 = vpack.c.bf16 %v480, %v479
  %v524 = vpack.c.bf16 %v482, %v481
  %v525 = vpack.c.bf16 %v484, %v483
  %v526 = vpack.c.bf16 %v486, %v485
  %v527 = vpack.c.bf16 %v488, %v487
  %v528 = vpack.c.bf16 %v490, %v489
  %v529 = vpack.c.bf16 %v492, %v491
  %v530 = vpack.c.bf16 %v494, %v493
  %v531 = vpack.c.bf16 %v496, %v495
  %v532 = vpack.c.bf16 %v498, %v497
  %v533 = vpack.c.bf16 %v500, %v499
  %v534 = vpack.c.bf16 %v502, %v501
  %v535 = vld [vmem:[%s3] sm:$0xff]
  %v536 = vld [vmem:[%s3 + $0x8] sm:$0xff]
  %v537 = vld [vmem:[%s3 + $0x10] sm:$0xff]
  %v538 = vld [vmem:[%s3 + $0x18] sm:$0xff]
  %v539 = vld [vmem:[%s3 + $0x20] sm:$0xff]
  %v540 = vld [vmem:[%s3 + $0x28] sm:$0xff]
  %v541 = vld [vmem:[%s3 + $0x30] sm:$0xff]
  %v542 = vld [vmem:[%s3 + $0x38] sm:$0xff]
  %v543 = vld [vmem:[%s3 + $0x40] sm:$0xff]
  %v544 = vld [vmem:[%s3 + $0x48] sm:$0xff]
  %v545 = vld [vmem:[%s3 + $0x50] sm:$0xff]
  %v546 = vld [vmem:[%s3 + $0x58] sm:$0xff]
  %v547 = vld [vmem:[%s3 + $0x60] sm:$0xff]
  %v548 = vld [vmem:[%s3 + $0x68] sm:$0xff]
  %v549 = vld [vmem:[%s3 + $0x70] sm:$0xff]
  %v550 = vld [vmem:[%s3 + $0x78] sm:$0xff]
  %v551 = vpack.c.bf16 %v536, %v535
  %v552 = vpack.c.bf16 %v538, %v537
  %v553 = vpack.c.bf16 %v540, %v539
  %v554 = vpack.c.bf16 %v542, %v541
  %v555 = vpack.c.bf16 %v544, %v543
  %v556 = vpack.c.bf16 %v546, %v545
  %v557 = vpack.c.bf16 %v548, %v547
  %v558 = vpack.c.bf16 %v550, %v549
  %v559 = vld [vmem:[%s4] sm:$0x1]
  %v561 = vlaneseq
  %v562 = vshrl.u32 %v561, 7
  %v563 = vsub.s32 0, %v562
  %v564 = vrot.slane %v559, %v563
  %566 = vmatprep.subr.bf16.mxu0 0
  %567 = vmatpush1.bf16.msra.mxu0 %v558
  %568 = vmatprep.subr.bf16.mxu0 0
  %569 = vmatpush1.bf16.msra.mxu0 %v557
  %570 = vmatprep.subr.bf16.mxu0 0
  %571 = vmatpush1.bf16.msra.mxu0 %v556
  %572 = vmatprep.subr.bf16.mxu0 0
  %573 = vmatpush1.bf16.msra.mxu0 %v555
  %574 = vmatprep.subr.bf16.mxu0 0
  %575 = vmatpush1.bf16.msra.mxu0 %v554
  %576 = vmatprep.subr.bf16.mxu0 0
  %577 = vmatpush1.bf16.msra.mxu0 %v553
  %578 = vmatprep.subr.bf16.mxu0 0
  %579 = vmatpush1.bf16.msra.mxu0 %v552
  %580 = vmatprep.subr.bf16.mxu0 0
  %581 = vmatpush1.bf16.msra.mxu0 %v551
  %582 = vmatprep.subr.bf16.mxu0 0
  %583 = vmatpush2.bf16.msra.mxu0 0
  %584 = vmatprep.subr.bf16.mxu0 0
  %585 = vmatpush2.bf16.msra.mxu0 0
  %586 = vmatprep.subr.bf16.mxu0 0
  %587 = vmatpush2.bf16.msra.mxu0 0
  %588 = vmatprep.subr.bf16.mxu0 0
  %589 = vmatpush2.bf16.msra.mxu0 0
  %590 = vmatprep.subr.bf16.mxu0 0
  %591 = vmatpush2.bf16.msra.mxu0 0
  %592 = vmatprep.subr.bf16.mxu0 0
  %593 = vmatpush2.bf16.msra.mxu0 0
  %594 = vmatprep.subr.bf16.mxu0 0
  %595 = vmatpush2.bf16.msra.mxu0 0
  %596 = vmatprep.subr.bf16.mxu0 0
  %597 = vmatpush2.bf16.msra.mxu0 0
  %598 = vmatprep.mubr.bf16.mxu0 0
  %599 = vmatmul.mubr.bf16.gmra.mxu0 %v503
  %v600 = vpop.f32.mrf.mxu0
  %v601 = vadd.f32 %v564, %v600
  %v602 = vpop.f32.mrf.mxu0
  %v603 = vpop.f32.mrf.mxu0
  %v604 = vadd.f32 %v564, %v603
  %v605 = vpop.f32.mrf.mxu0
  %606 = vmatprep.mubr.bf16.mxu0 0
  %607 = vmatmul.mubr.bf16.gmra.mxu0 %v504
  %v608 = vpop.f32.mrf.mxu0
  %v609 = vadd.f32 %v564, %v608
  %v610 = vpop.f32.mrf.mxu0
  %v611 = vpop.f32.mrf.mxu0
  %v612 = vadd.f32 %v564, %v611
  %v613 = vpop.f32.mrf.mxu0
  %614 = vmatprep.mubr.bf16.mxu0 0
  %615 = vmatmul.mubr.bf16.gmra.mxu0 %v505
  %v616 = vpop.f32.mrf.mxu0
  %v617 = vadd.f32 %v564, %v616
  %v618 = vpop.f32.mrf.mxu0
  %v619 = vpop.f32.mrf.mxu0
  %v620 = vadd.f32 %v564, %v619
  %v621 = vpop.f32.mrf.mxu0
  %622 = vmatprep.mubr.bf16.mxu0 0
  %623 = vmatmul.mubr.bf16.gmra.mxu0 %v506
  %v624 = vpop.f32.mrf.mxu0
  %v625 = vadd.f32 %v564, %v624
  %v626 = vpop.f32.mrf.mxu0
  %v627 = vpop.f32.mrf.mxu0
  %v628 = vadd.f32 %v564, %v627
  %v629 = vpop.f32.mrf.mxu0
  %630 = vmatprep.mubr.bf16.mxu0 0
  %631 = vmatmul.mubr.bf16.gmra.mxu0 %v507
  %v632 = vpop.f32.mrf.mxu0
  %v633 = vadd.f32 %v564, %v632
  %v634 = vpop.f32.mrf.mxu0
  %v635 = vpop.f32.mrf.mxu0
  %v636 = vadd.f32 %v564, %v635
  %v637 = vpop.f32.mrf.mxu0
  %638 = vmatprep.mubr.bf16.mxu0 0
  %639 = vmatmul.mubr.bf16.gmra.mxu0 %v508
  %v640 = vpop.f32.mrf.mxu0
  %v641 = vadd.f32 %v564, %v640
  %v642 = vpop.f32.mrf.mxu0
  %v643 = vpop.f32.mrf.mxu0
  %v644 = vadd.f32 %v564, %v643
  %v645 = vpop.f32.mrf.mxu0
  %646 = vmatprep.mubr.bf16.mxu0 0
  %647 = vmatmul.mubr.bf16.gmra.mxu0 %v509
  %v648 = vpop.f32.mrf.mxu0
  %v649 = vadd.f32 %v564, %v648
  %v650 = vpop.f32.mrf.mxu0
  %v651 = vpop.f32.mrf.mxu0
  %v652 = vadd.f32 %v564, %v651
  %v653 = vpop.f32.mrf.mxu0
  %654 = vmatprep.mubr.bf16.mxu0 0
  %655 = vmatmul.mubr.bf16.gmra.mxu0 %v510
  %v656 = vpop.f32.mrf.mxu0
  %v657 = vadd.f32 %v564, %v656
  %v658 = vpop.f32.mrf.mxu0
  %v659 = vpop.f32.mrf.mxu0
  %v660 = vadd.f32 %v564, %v659
  %v661 = vpop.f32.mrf.mxu0
  %662 = vmatprep.mubr.bf16.mxu0 0
  %663 = vmatmul.mubr.bf16.gmra.mxu0 %v511
  %v664 = vpop.f32.mrf.mxu0
  %v665 = vadd.f32 %v564, %v664
  %v666 = vpop.f32.mrf.mxu0
  %v667 = vpop.f32.mrf.mxu0
  %v668 = vadd.f32 %v564, %v667
  %v669 = vpop.f32.mrf.mxu0
  %670 = vmatprep.mubr.bf16.mxu0 0
  %671 = vmatmul.mubr.bf16.gmra.mxu0 %v512
  %v672 = vpop.f32.mrf.mxu0
  %v673 = vadd.f32 %v564, %v672
  %v674 = vpop.f32.mrf.mxu0
  %v675 = vpop.f32.mrf.mxu0
  %v676 = vadd.f32 %v564, %v675
  %v677 = vpop.f32.mrf.mxu0
  %678 = vmatprep.mubr.bf16.mxu0 0
  %679 = vmatmul.mubr.bf16.gmra.mxu0 %v513
  %v680 = vpop.f32.mrf.mxu0
  %v681 = vadd.f32 %v564, %v680
  %v682 = vpop.f32.mrf.mxu0
  %v683 = vpop.f32.mrf.mxu0
  %v684 = vadd.f32 %v564, %v683
  %v685 = vpop.f32.mrf.mxu0
  %686 = vmatprep.mubr.bf16.mxu0 0
  %687 = vmatmul.mubr.bf16.gmra.mxu0 %v514
  %v688 = vpop.f32.mrf.mxu0
  %v689 = vadd.f32 %v564, %v688
  %v690 = vpop.f32.mrf.mxu0
  %v691 = vpop.f32.mrf.mxu0
  %v692 = vadd.f32 %v564, %v691
  %v693 = vpop.f32.mrf.mxu0
  %694 = vmatprep.mubr.bf16.mxu0 0
  %695 = vmatmul.mubr.bf16.gmra.mxu0 %v515
  %v696 = vpop.f32.mrf.mxu0
  %v697 = vadd.f32 %v564, %v696
  %v698 = vpop.f32.mrf.mxu0
  %v699 = vpop.f32.mrf.mxu0
  %v700 = vadd.f32 %v564, %v699
  %v701 = vpop.f32.mrf.mxu0
  %702 = vmatprep.mubr.bf16.mxu0 0
  %703 = vmatmul.mubr.bf16.gmra.mxu0 %v516
  %v704 = vpop.f32.mrf.mxu0
  %v705 = vadd.f32 %v564, %v704
  %v706 = vpop.f32.mrf.mxu0
  %v707 = vpop.f32.mrf.mxu0
  %v708 = vadd.f32 %v564, %v707
  %v709 = vpop.f32.mrf.mxu0
  %710 = vmatprep.mubr.bf16.mxu0 0
  %711 = vmatmul.mubr.bf16.gmra.mxu0 %v517
  %v712 = vpop.f32.mrf.mxu0
  %v713 = vadd.f32 %v564, %v712
  %v714 = vpop.f32.mrf.mxu0
  %v715 = vpop.f32.mrf.mxu0
  %v716 = vadd.f32 %v564, %v715
  %v717 = vpop.f32.mrf.mxu0
  %718 = vmatprep.mubr.bf16.mxu0 0
  %719 = vmatmul.mubr.bf16.gmra.mxu0 %v518
  %v720 = vpop.f32.mrf.mxu0
  %v721 = vadd.f32 %v564, %v720
  %v722 = vpop.f32.mrf.mxu0
  %v723 = vpop.f32.mrf.mxu0
  %v724 = vadd.f32 %v564, %v723
  %v725 = vpop.f32.mrf.mxu0
  %726 = vmatprep.mubr.bf16.mxu0 0
  %727 = vmatmul.mubr.bf16.gmra.mxu0 %v519
  %v728 = vpop.f32.mrf.mxu0
  %v729 = vadd.f32 %v564, %v728
  %v730 = vpop.f32.mrf.mxu0
  %v731 = vpop.f32.mrf.mxu0
  %v732 = vadd.f32 %v564, %v731
  %v733 = vpop.f32.mrf.mxu0
  %734 = vmatprep.mubr.bf16.mxu0 0
  %735 = vmatmul.mubr.bf16.gmra.mxu0 %v520
  %v736 = vpop.f32.mrf.mxu0
  %v737 = vadd.f32 %v564, %v736
  %v738 = vpop.f32.mrf.mxu0
  %v739 = vpop.f32.mrf.mxu0
  %v740 = vadd.f32 %v564, %v739
  %v741 = vpop.f32.mrf.mxu0
  %742 = vmatprep.mubr.bf16.mxu0 0
  %743 = vmatmul.mubr.bf16.gmra.mxu0 %v521
  %v744 = vpop.f32.mrf.mxu0
  %v745 = vadd.f32 %v564, %v744
  %v746 = vpop.f32.mrf.mxu0
  %v747 = vpop.f32.mrf.mxu0
  %v748 = vadd.f32 %v564, %v747
  %v749 = vpop.f32.mrf.mxu0
  %750 = vmatprep.mubr.bf16.mxu0 0
  %751 = vmatmul.mubr.bf16.gmra.mxu0 %v522
  %v752 = vpop.f32.mrf.mxu0
  %v753 = vadd.f32 %v564, %v752
  %v754 = vpop.f32.mrf.mxu0
  %v755 = vpop.f32.mrf.mxu0
  %v756 = vadd.f32 %v564, %v755
  %v757 = vpop.f32.mrf.mxu0
  %758 = vmatprep.mubr.bf16.mxu0 0
  %759 = vmatmul.mubr.bf16.gmra.mxu0 %v523
  %v760 = vpop.f32.mrf.mxu0
  %v761 = vadd.f32 %v564, %v760
  %v762 = vpop.f32.mrf.mxu0
  %v763 = vpop.f32.mrf.mxu0
  %v764 = vadd.f32 %v564, %v763
  %v765 = vpop.f32.mrf.mxu0
  %766 = vmatprep.mubr.bf16.mxu0 0
  %767 = vmatmul.mubr.bf16.gmra.mxu0 %v524
  %v768 = vpop.f32.mrf.mxu0
  %v769 = vadd.f32 %v564, %v768
  %v770 = vpop.f32.mrf.mxu0
  %v771 = vpop.f32.mrf.mxu0
  %v772 = vadd.f32 %v564, %v771
  %v773 = vpop.f32.mrf.mxu0
  %774 = vmatprep.mubr.bf16.mxu0 0
  %775 = vmatmul.mubr.bf16.gmra.mxu0 %v525
  %v776 = vpop.f32.mrf.mxu0
  %v777 = vadd.f32 %v564, %v776
  %v778 = vpop.f32.mrf.mxu0
  %v779 = vpop.f32.mrf.mxu0
  %v780 = vadd.f32 %v564, %v779
  %v781 = vpop.f32.mrf.mxu0
  %782 = vmatprep.mubr.bf16.mxu0 0
  %783 = vmatmul.mubr.bf16.gmra.mxu0 %v526
  %v784 = vpop.f32.mrf.mxu0
  %v785 = vadd.f32 %v564, %v784
  %v786 = vpop.f32.mrf.mxu0
  %v787 = vpop.f32.mrf.mxu0
  %v788 = vadd.f32 %v564, %v787
  %v789 = vpop.f32.mrf.mxu0
  %790 = vmatprep.mubr.bf16.mxu0 0
  %791 = vmatmul.mubr.bf16.gmra.mxu0 %v527
  %v792 = vpop.f32.mrf.mxu0
  %v793 = vadd.f32 %v564, %v792
  %v794 = vpop.f32.mrf.mxu0
  %v795 = vpop.f32.mrf.mxu0
  %v796 = vadd.f32 %v564, %v795
  %v797 = vpop.f32.mrf.mxu0
  %798 = vmatprep.mubr.bf16.mxu0 0
  %799 = vmatmul.mubr.bf16.gmra.mxu0 %v528
  %v800 = vpop.f32.mrf.mxu0
  %v801 = vadd.f32 %v564, %v800
  %v802 = vpop.f32.mrf.mxu0
  %v803 = vpop.f32.mrf.mxu0
  %v804 = vadd.f32 %v564, %v803
  %v805 = vpop.f32.mrf.mxu0
  %806 = vmatprep.mubr.bf16.mxu0 0
  %807 = vmatmul.mubr.bf16.gmra.mxu0 %v529
  %v808 = vpop.f32.mrf.mxu0
  %v809 = vadd.f32 %v564, %v808
  %v810 = vpop.f32.mrf.mxu0
  %v811 = vpop.f32.mrf.mxu0
  %v812 = vadd.f32 %v564, %v811
  %v813 = vpop.f32.mrf.mxu0
  %814 = vmatprep.mubr.bf16.mxu0 0
  %815 = vmatmul.mubr.bf16.gmra.mxu0 %v530
  %v816 = vpop.f32.mrf.mxu0
  %v817 = vadd.f32 %v564, %v816
  %v818 = vpop.f32.mrf.mxu0
  %v819 = vpop.f32.mrf.mxu0
  %v820 = vadd.f32 %v564, %v819
  %v821 = vpop.f32.mrf.mxu0
  %822 = vmatprep.mubr.bf16.mxu0 0
  %823 = vmatmul.mubr.bf16.gmra.mxu0 %v531
  %v824 = vpop.f32.mrf.mxu0
  %v825 = vadd.f32 %v564, %v824
  %v826 = vpop.f32.mrf.mxu0
  %v827 = vpop.f32.mrf.mxu0
  %v828 = vadd.f32 %v564, %v827
  %v829 = vpop.f32.mrf.mxu0
  %830 = vmatprep.mubr.bf16.mxu0 0
  %831 = vmatmul.mubr.bf16.gmra.mxu0 %v532
  %v832 = vpop.f32.mrf.mxu0
  %v833 = vadd.f32 %v564, %v832
  %v834 = vpop.f32.mrf.mxu0
  %v835 = vpop.f32.mrf.mxu0
  %v836 = vadd.f32 %v564, %v835
  %v837 = vpop.f32.mrf.mxu0
  %838 = vmatprep.mubr.bf16.mxu0 0
  %839 = vmatmul.mubr.bf16.gmra.mxu0 %v533
  %v840 = vpop.f32.mrf.mxu0
  %v841 = vadd.f32 %v564, %v840
  %v842 = vpop.f32.mrf.mxu0
  %v843 = vpop.f32.mrf.mxu0
  %v844 = vadd.f32 %v564, %v843
  %v845 = vpop.f32.mrf.mxu0
  %846 = vmatprep.mubr.bf16.mxu0 0
  %847 = vmatmul.mubr.bf16.gmra.mxu0 %v534
  %v848 = vpop.f32.mrf.mxu0
  %v849 = vadd.f32 %v564, %v848
  %v850 = vpop.f32.mrf.mxu0
  %v851 = vpop.f32.mrf.mxu0
  %v852 = vadd.f32 %v564, %v851
  %v853 = vpop.f32.mrf.mxu0
  %854 = vdwg.mxu0
  %v855 = vpack.c.bf16 %v604, %v601
  %v856 = vpack.c.bf16 %v612, %v609
  %v857 = vpack.c.bf16 %v620, %v617
  %v858 = vpack.c.bf16 %v628, %v625
  %v859 = vpack.c.bf16 %v636, %v633
  %v860 = vpack.c.bf16 %v644, %v641
  %v861 = vpack.c.bf16 %v652, %v649
  %v862 = vpack.c.bf16 %v660, %v657
  %v863 = vpack.c.bf16 %v668, %v665
  %v864 = vpack.c.bf16 %v676, %v673
  %v865 = vpack.c.bf16 %v684, %v681
  %v866 = vpack.c.bf16 %v692, %v689
  %v867 = vpack.c.bf16 %v700, %v697
  %v868 = vpack.c.bf16 %v708, %v705
  %v869 = vpack.c.bf16 %v716, %v713
  %v870 = vpack.c.bf16 %v724, %v721
  %v871 = vpack.c.bf16 %v732, %v729
  %v872 = vpack.c.bf16 %v740, %v737
  %v873 = vpack.c.bf16 %v748, %v745
  %v874 = vpack.c.bf16 %v756, %v753
  %v875 = vpack.c.bf16 %v764, %v761
  %v876 = vpack.c.bf16 %v772, %v769
  %v877 = vpack.c.bf16 %v780, %v777
  %v878 = vpack.c.bf16 %v788, %v785
  %v879 = vpack.c.bf16 %v796, %v793
  %v880 = vpack.c.bf16 %v804, %v801
  %v881 = vpack.c.bf16 %v812, %v809
  %v882 = vpack.c.bf16 %v820, %v817
  %v883 = vpack.c.bf16 %v828, %v825
  %v884 = vpack.c.bf16 %v836, %v833
  %v885 = vpack.c.bf16 %v844, %v841
  %v886 = vpack.c.bf16 %v852, %v849
  %v919 = vunpack.c.l.b16 %v855
  %v920 = vunpack.c.h.b16 %v855
  %v921 = vunpack.c.l.b16 %v856
  %v922 = vunpack.c.h.b16 %v856
  %v923 = vunpack.c.l.b16 %v857
  %v924 = vunpack.c.h.b16 %v857
  %v925 = vunpack.c.l.b16 %v858
  %v926 = vunpack.c.h.b16 %v858
  %v927 = vunpack.c.l.b16 %v859
  %v928 = vunpack.c.h.b16 %v859
  %v929 = vunpack.c.l.b16 %v860
  %v930 = vunpack.c.h.b16 %v860
  %v931 = vunpack.c.l.b16 %v861
  %v932 = vunpack.c.h.b16 %v861
  %v933 = vunpack.c.l.b16 %v862
  %v934 = vunpack.c.h.b16 %v862
  %v935 = vunpack.c.l.b16 %v863
  %v936 = vunpack.c.h.b16 %v863
  %v937 = vunpack.c.l.b16 %v864
  %v938 = vunpack.c.h.b16 %v864
  %v939 = vunpack.c.l.b16 %v865
  %v940 = vunpack.c.h.b16 %v865
  %v941 = vunpack.c.l.b16 %v866
  %v942 = vunpack.c.h.b16 %v866
  %v943 = vunpack.c.l.b16 %v867
  %v944 = vunpack.c.h.b16 %v867
  %v945 = vunpack.c.l.b16 %v868
  %v946 = vunpack.c.h.b16 %v868
  %v947 = vunpack.c.l.b16 %v869
  %v948 = vunpack.c.h.b16 %v869
  %v949 = vunpack.c.l.b16 %v870
  %v950 = vunpack.c.h.b16 %v870
  %v951 = vunpack.c.l.b16 %v871
  %v952 = vunpack.c.h.b16 %v871
  %v953 = vunpack.c.l.b16 %v872
  %v954 = vunpack.c.h.b16 %v872
  %v955 = vunpack.c.l.b16 %v873
  %v956 = vunpack.c.h.b16 %v873
  %v957 = vunpack.c.l.b16 %v874
  %v958 = vunpack.c.h.b16 %v874
  %v959 = vunpack.c.l.b16 %v875
  %v960 = vunpack.c.h.b16 %v875
  %v961 = vunpack.c.l.b16 %v876
  %v962 = vunpack.c.h.b16 %v876
  %v963 = vunpack.c.l.b16 %v877
  %v964 = vunpack.c.h.b16 %v877
  %v965 = vunpack.c.l.b16 %v878
  %v966 = vunpack.c.h.b16 %v878
  %v967 = vunpack.c.l.b16 %v879
  %v968 = vunpack.c.h.b16 %v879
  %v969 = vunpack.c.l.b16 %v880
  %v970 = vunpack.c.h.b16 %v880
  %v971 = vunpack.c.l.b16 %v881
  %v972 = vunpack.c.h.b16 %v881
  %v973 = vunpack.c.l.b16 %v882
  %v974 = vunpack.c.h.b16 %v882
  %v975 = vunpack.c.l.b16 %v883
  %v976 = vunpack.c.h.b16 %v883
  %v977 = vunpack.c.l.b16 %v884
  %v978 = vunpack.c.h.b16 %v884
  %v979 = vunpack.c.l.b16 %v885
  %v980 = vunpack.c.h.b16 %v885
  %v981 = vunpack.c.l.b16 %v886
  %v982 = vunpack.c.h.b16 %v886
  %v983 = vpack.c.b16 %v919, %v919
  %v984 = vpack.c.b16 %v920, %v920
  %v985 = vpack.c.b16 %v921, %v921
  %v986 = vpack.c.b16 %v922, %v922
  %v987 = vpack.c.b16 %v923, %v923
  %v988 = vpack.c.b16 %v924, %v924
  %v989 = vpack.c.b16 %v925, %v925
  %v990 = vpack.c.b16 %v926, %v926
  %v991 = vpack.c.b16 %v927, %v927
  %v992 = vpack.c.b16 %v928, %v928
  %v993 = vpack.c.b16 %v929, %v929
  %v994 = vpack.c.b16 %v930, %v930
  %v995 = vpack.c.b16 %v931, %v931
  %v996 = vpack.c.b16 %v932, %v932
  %v997 = vpack.c.b16 %v933, %v933
  %v998 = vpack.c.b16 %v934, %v934
  %v999 = vpack.c.b16 %v935, %v935
  %v1000 = vpack.c.b16 %v936, %v936
  %v1001 = vpack.c.b16 %v937, %v937
  %v1002 = vpack.c.b16 %v938, %v938
  %v1003 = vpack.c.b16 %v939, %v939
  %v1004 = vpack.c.b16 %v940, %v940
  %v1005 = vpack.c.b16 %v941, %v941
  %v1006 = vpack.c.b16 %v942, %v942
  %v1007 = vpack.c.b16 %v943, %v943
  %v1008 = vpack.c.b16 %v944, %v944
  %v1009 = vpack.c.b16 %v945, %v945
  %v1010 = vpack.c.b16 %v946, %v946
  %v1011 = vpack.c.b16 %v947, %v947
  %v1012 = vpack.c.b16 %v948, %v948
  %v1013 = vpack.c.b16 %v949, %v949
  %v1014 = vpack.c.b16 %v950, %v950
  %v1015 = vpack.c.b16 %v951, %v951
  %v1016 = vpack.c.b16 %v952, %v952
  %v1017 = vpack.c.b16 %v953, %v953
  %v1018 = vpack.c.b16 %v954, %v954
  %v1019 = vpack.c.b16 %v955, %v955
  %v1020 = vpack.c.b16 %v956, %v956
  %v1021 = vpack.c.b16 %v957, %v957
  %v1022 = vpack.c.b16 %v958, %v958
  %v1023 = vpack.c.b16 %v959, %v959
  %v1024 = vpack.c.b16 %v960, %v960
  %v1025 = vpack.c.b16 %v961, %v961
  %v1026 = vpack.c.b16 %v962, %v962
  %v1027 = vpack.c.b16 %v963, %v963
  %v1028 = vpack.c.b16 %v964, %v964
  %v1029 = vpack.c.b16 %v965, %v965
  %v1030 = vpack.c.b16 %v966, %v966
  %v1031 = vpack.c.b16 %v967, %v967
  %v1032 = vpack.c.b16 %v968, %v968
  %v1033 = vpack.c.b16 %v969, %v969
  %v1034 = vpack.c.b16 %v970, %v970
  %v1035 = vpack.c.b16 %v971, %v971
  %v1036 = vpack.c.b16 %v972, %v972
  %v1037 = vpack.c.b16 %v973, %v973
  %v1038 = vpack.c.b16 %v974, %v974
  %v1039 = vpack.c.b16 %v975, %v975
  %v1040 = vpack.c.b16 %v976, %v976
  %v1041 = vpack.c.b16 %v977, %v977
  %v1042 = vpack.c.b16 %v978, %v978
  %v1043 = vpack.c.b16 %v979, %v979
  %v1044 = vpack.c.b16 %v980, %v980
  %v1045 = vpack.c.b16 %v981, %v981
  %v1046 = vpack.c.b16 %v982, %v982
  %1111 = vst [vmem:[%s5] sm:$0xf] %v983
  %1112 = vst [vmem:[%s5 + $0x4] sm:$0xf] %v984
  %1113 = vst [vmem:[%s5 + $0x8] sm:$0xf] %v985
  %1114 = vst [vmem:[%s5 + $0xc] sm:$0xf] %v986
  %1115 = vst [vmem:[%s5 + $0x10] sm:$0xf] %v987
  %1116 = vst [vmem:[%s5 + $0x14] sm:$0xf] %v988
  %1117 = vst [vmem:[%s5 + $0x18] sm:$0xf] %v989
  %1118 = vst [vmem:[%s5 + $0x1c] sm:$0xf] %v990
  %1119 = vst [vmem:[%s5 + $0x20] sm:$0xf] %v991
  %1120 = vst [vmem:[%s5 + $0x24] sm:$0xf] %v992
  %1121 = vst [vmem:[%s5 + $0x28] sm:$0xf] %v993
  %1122 = vst [vmem:[%s5 + $0x2c] sm:$0xf] %v994
  %1123 = vst [vmem:[%s5 + $0x30] sm:$0xf] %v995
  %1124 = vst [vmem:[%s5 + $0x34] sm:$0xf] %v996
  %1125 = vst [vmem:[%s5 + $0x38] sm:$0xf] %v997
  %1126 = vst [vmem:[%s5 + $0x3c] sm:$0xf] %v998
  %1127 = vst [vmem:[%s5 + $0x40] sm:$0xf] %v999
  %1128 = vst [vmem:[%s5 + $0x44] sm:$0xf] %v1000
  %1129 = vst [vmem:[%s5 + $0x48] sm:$0xf] %v1001
  %1130 = vst [vmem:[%s5 + $0x4c] sm:$0xf] %v1002
  %1131 = vst [vmem:[%s5 + $0x50] sm:$0xf] %v1003
  %1132 = vst [vmem:[%s5 + $0x54] sm:$0xf] %v1004
  %1133 = vst [vmem:[%s5 + $0x58] sm:$0xf] %v1005
  %1134 = vst [vmem:[%s5 + $0x5c] sm:$0xf] %v1006
  %1135 = vst [vmem:[%s5 + $0x60] sm:$0xf] %v1007
  %1136 = vst [vmem:[%s5 + $0x64] sm:$0xf] %v1008
  %1137 = vst [vmem:[%s5 + $0x68] sm:$0xf] %v1009
  %1138 = vst [vmem:[%s5 + $0x6c] sm:$0xf] %v1010
  %1139 = vst [vmem:[%s5 + $0x70] sm:$0xf] %v1011
  %1140 = vst [vmem:[%s5 + $0x74] sm:$0xf] %v1012
  %1141 = vst [vmem:[%s5 + $0x78] sm:$0xf] %v1013
  %1142 = vst [vmem:[%s5 + $0x7c] sm:$0xf] %v1014
  %1143 = vst [vmem:[%s5 + $0x80] sm:$0xf] %v1015
  %1144 = vst [vmem:[%s5 + $0x84] sm:$0xf] %v1016
  %1145 = vst [vmem:[%s5 + $0x88] sm:$0xf] %v1017
  %1146 = vst [vmem:[%s5 + $0x8c] sm:$0xf] %v1018
  %1147 = vst [vmem:[%s5 + $0x90] sm:$0xf] %v1019
  %1148 = vst [vmem:[%s5 + $0x94] sm:$0xf] %v1020
  %1149 = vst [vmem:[%s5 + $0x98] sm:$0xf] %v1021
  %1150 = vst [vmem:[%s5 + $0x9c] sm:$0xf] %v1022
  %1151 = vst [vmem:[%s5 + $0xa0] sm:$0xf] %v1023
  %1152 = vst [vmem:[%s5 + $0xa4] sm:$0xf] %v1024
  %1153 = vst [vmem:[%s5 + $0xa8] sm:$0xf] %v1025
  %1154 = vst [vmem:[%s5 + $0xac] sm:$0xf] %v1026
  %1155 = vst [vmem:[%s5 + $0xb0] sm:$0xf] %v1027
  %1156 = vst [vmem:[%s5 + $0xb4] sm:$0xf] %v1028
  %1157 = vst [vmem:[%s5 + $0xb8] sm:$0xf] %v1029
  %1158 = vst [vmem:[%s5 + $0xbc] sm:$0xf] %v1030
  %1159 = vst [vmem:[%s5 + $0xc0] sm:$0xf] %v1031
  %1160 = vst [vmem:[%s5 + $0xc4] sm:$0xf] %v1032
  %1161 = vst [vmem:[%s5 + $0xc8] sm:$0xf] %v1033
  %1162 = vst [vmem:[%s5 + $0xcc] sm:$0xf] %v1034
  %1163 = vst [vmem:[%s5 + $0xd0] sm:$0xf] %v1035
  %1164 = vst [vmem:[%s5 + $0xd4] sm:$0xf] %v1036
  %1165 = vst [vmem:[%s5 + $0xd8] sm:$0xf] %v1037
  %1166 = vst [vmem:[%s5 + $0xdc] sm:$0xf] %v1038
  %1167 = vst [vmem:[%s5 + $0xe0] sm:$0xf] %v1039
  %1168 = vst [vmem:[%s5 + $0xe4] sm:$0xf] %v1040
  %1169 = vst [vmem:[%s5 + $0xe8] sm:$0xf] %v1041
  %1170 = vst [vmem:[%s5 + $0xec] sm:$0xf] %v1042
  %1171 = vst [vmem:[%s5 + $0xf0] sm:$0xf] %v1043
  %1172 = vst [vmem:[%s5 + $0xf4] sm:$0xf] %v1044
  %1173 = vst [vmem:[%s5 + $0xf8] sm:$0xf] %v1045
  %1174 = vst [vmem:[%s5 + $0xfc] sm:$0xf] %v1046
  %v1175 = vmul.f32 %v601, 0.1
  %v1176 = vmul.f32 %v604, 0.1
  %v1177 = vmul.f32 %v609, 0.1
  %v1178 = vmul.f32 %v612, 0.1
  %v1179 = vmul.f32 %v617, 0.1
  %v1180 = vmul.f32 %v620, 0.1
  %v1181 = vmul.f32 %v625, 0.1
  %v1182 = vmul.f32 %v628, 0.1
  %v1183 = vmul.f32 %v633, 0.1
  %v1184 = vmul.f32 %v636, 0.1
  %v1185 = vmul.f32 %v641, 0.1
  %v1186 = vmul.f32 %v644, 0.1
  %v1187 = vmul.f32 %v649, 0.1
  %v1188 = vmul.f32 %v652, 0.1
  %v1189 = vmul.f32 %v657, 0.1
  %v1190 = vmul.f32 %v660, 0.1
  %v1191 = vmul.f32 %v665, 0.1
  %v1192 = vmul.f32 %v668, 0.1
  %v1193 = vmul.f32 %v673, 0.1
  %v1194 = vmul.f32 %v676, 0.1
  %v1195 = vmul.f32 %v681, 0.1
  %v1196 = vmul.f32 %v684, 0.1
  %v1197 = vmul.f32 %v689, 0.1
  %v1198 = vmul.f32 %v692, 0.1
  %v1199 = vmul.f32 %v697, 0.1
  %v1200 = vmul.f32 %v700, 0.1
  %v1201 = vmul.f32 %v705, 0.1
  %v1202 = vmul.f32 %v708, 0.1
  %v1203 = vmul.f32 %v713, 0.1
  %v1204 = vmul.f32 %v716, 0.1
  %v1205 = vmul.f32 %v721, 0.1
  %v1206 = vmul.f32 %v724, 0.1
  %v1207 = vmul.f32 %v729, 0.1
  %v1208 = vmul.f32 %v732, 0.1
  %v1209 = vmul.f32 %v737, 0.1
  %v1210 = vmul.f32 %v740, 0.1
  %v1211 = vmul.f32 %v745, 0.1
  %v1212 = vmul.f32 %v748, 0.1
  %v1213 = vmul.f32 %v753, 0.1
  %v1214 = vmul.f32 %v756, 0.1
  %v1215 = vmul.f32 %v761, 0.1
  %v1216 = vmul.f32 %v764, 0.1
  %v1217 = vmul.f32 %v769, 0.1
  %v1218 = vmul.f32 %v772, 0.1
  %v1219 = vmul.f32 %v777, 0.1
  %v1220 = vmul.f32 %v780, 0.1
  %v1221 = vmul.f32 %v785, 0.1
  %v1222 = vmul.f32 %v788, 0.1
  %v1223 = vmul.f32 %v793, 0.1
  %v1224 = vmul.f32 %v796, 0.1
  %v1225 = vmul.f32 %v801, 0.1
  %v1226 = vmul.f32 %v804, 0.1
  %v1227 = vmul.f32 %v809, 0.1
  %v1228 = vmul.f32 %v812, 0.1
  %v1229 = vmul.f32 %v817, 0.1
  %v1230 = vmul.f32 %v820, 0.1
  %v1231 = vmul.f32 %v825, 0.1
  %v1232 = vmul.f32 %v828, 0.1
  %v1233 = vmul.f32 %v833, 0.1
  %v1234 = vmul.f32 %v836, 0.1
  %v1235 = vmul.f32 %v841, 0.1
  %v1236 = vmul.f32 %v844, 0.1
  %v1237 = vmul.f32 %v849, 0.1
  %v1238 = vmul.f32 %v852, 0.1
  %1239 = vst [vmem:[%s6] sm:$0xff] %v1175
  %1240 = vst [vmem:[%s6 + $0x8] sm:$0xff] %v1176
  %1241 = vst [vmem:[%s6 + $0x10] sm:$0xff] %v1177
  %1242 = vst [vmem:[%s6 + $0x18] sm:$0xff] %v1178
  %1243 = vst [vmem:[%s6 + $0x20] sm:$0xff] %v1179
  %1244 = vst [vmem:[%s6 + $0x28] sm:$0xff] %v1180
  %1245 = vst [vmem:[%s6 + $0x30] sm:$0xff] %v1181
  %1246 = vst [vmem:[%s6 + $0x38] sm:$0xff] %v1182
  %1247 = vst [vmem:[%s6 + $0x40] sm:$0xff] %v1183
  %1248 = vst [vmem:[%s6 + $0x48] sm:$0xff] %v1184
  %1249 = vst [vmem:[%s6 + $0x50] sm:$0xff] %v1185
  %1250 = vst [vmem:[%s6 + $0x58] sm:$0xff] %v1186
  %1251 = vst [vmem:[%s6 + $0x60] sm:$0xff] %v1187
  %1252 = vst [vmem:[%s6 + $0x68] sm:$0xff] %v1188
  %1253 = vst [vmem:[%s6 + $0x70] sm:$0xff] %v1189
  %1254 = vst [vmem:[%s6 + $0x78] sm:$0xff] %v1190
  %1255 = vst [vmem:[%s6 + $0x80] sm:$0xff] %v1191
  %1256 = vst [vmem:[%s6 + $0x88] sm:$0xff] %v1192
  %1257 = vst [vmem:[%s6 + $0x90] sm:$0xff] %v1193
  %1258 = vst [vmem:[%s6 + $0x98] sm:$0xff] %v1194
  %1259 = vst [vmem:[%s6 + $0xa0] sm:$0xff] %v1195
  %1260 = vst [vmem:[%s6 + $0xa8] sm:$0xff] %v1196
  %1261 = vst [vmem:[%s6 + $0xb0] sm:$0xff] %v1197
  %1262 = vst [vmem:[%s6 + $0xb8] sm:$0xff] %v1198
  %1263 = vst [vmem:[%s6 + $0xc0] sm:$0xff] %v1199
  %1264 = vst [vmem:[%s6 + $0xc8] sm:$0xff] %v1200
  %1265 = vst [vmem:[%s6 + $0xd0] sm:$0xff] %v1201
  %1266 = vst [vmem:[%s6 + $0xd8] sm:$0xff] %v1202
  %1267 = vst [vmem:[%s6 + $0xe0] sm:$0xff] %v1203
  %1268 = vst [vmem:[%s6 + $0xe8] sm:$0xff] %v1204
  %1269 = vst [vmem:[%s6 + $0xf0] sm:$0xff] %v1205
  %1270 = vst [vmem:[%s6 + $0xf8] sm:$0xff] %v1206
  %1271 = vst [vmem:[%s6 + $0x100] sm:$0xff] %v1207
  %1272 = vst [vmem:[%s6 + $0x108] sm:$0xff] %v1208
  %1273 = vst [vmem:[%s6 + $0x110] sm:$0xff] %v1209
  %1274 = vst [vmem:[%s6 + $0x118] sm:$0xff] %v1210
  %1275 = vst [vmem:[%s6 + $0x120] sm:$0xff] %v1211
  %1276 = vst [vmem:[%s6 + $0x128] sm:$0xff] %v1212
  %1277 = vst [vmem:[%s6 + $0x130] sm:$0xff] %v1213
  %1278 = vst [vmem:[%s6 + $0x138] sm:$0xff] %v1214
  %1279 = vst [vmem:[%s6 + $0x140] sm:$0xff] %v1215
  %1280 = vst [vmem:[%s6 + $0x148] sm:$0xff] %v1216
  %1281 = vst [vmem:[%s6 + $0x150] sm:$0xff] %v1217
  %1282 = vst [vmem:[%s6 + $0x158] sm:$0xff] %v1218
  %1283 = vst [vmem:[%s6 + $0x160] sm:$0xff] %v1219
  %1284 = vst [vmem:[%s6 + $0x168] sm:$0xff] %v1220
  %1285 = vst [vmem:[%s6 + $0x170] sm:$0xff] %v1221
  %1286 = vst [vmem:[%s6 + $0x178] sm:$0xff] %v1222
  %1287 = vst [vmem:[%s6 + $0x180] sm:$0xff] %v1223
  %1288 = vst [vmem:[%s6 + $0x188] sm:$0xff] %v1224
  %1289 = vst [vmem:[%s6 + $0x190] sm:$0xff] %v1225
  %1290 = vst [vmem:[%s6 + $0x198] sm:$0xff] %v1226
  %1291 = vst [vmem:[%s6 + $0x1a0] sm:$0xff] %v1227
  %1292 = vst [vmem:[%s6 + $0x1a8] sm:$0xff] %v1228
  %1293 = vst [vmem:[%s6 + $0x1b0] sm:$0xff] %v1229
  %1294 = vst [vmem:[%s6 + $0x1b8] sm:$0xff] %v1230
  %1295 = vst [vmem:[%s6 + $0x1c0] sm:$0xff] %v1231
  %1296 = vst [vmem:[%s6 + $0x1c8] sm:$0xff] %v1232
  %1297 = vst [vmem:[%s6 + $0x1d0] sm:$0xff] %v1233
  %1298 = vst [vmem:[%s6 + $0x1d8] sm:$0xff] %v1234
  %1299 = vst [vmem:[%s6 + $0x1e0] sm:$0xff] %v1235
  %1300 = vst [vmem:[%s6 + $0x1e8] sm:$0xff] %v1236
  %1301 = vst [vmem:[%s6 + $0x1f0] sm:$0xff] %v1237
  %1302 = vst [vmem:[%s6 + $0x1f8] sm:$0xff] %v1238
  // Predicated region
  $region22: #{appnp_net_forward.2} parent=0 // pred_check
    _
  $region23: #{appnp_net_forward.2} parent=0 // pred_check_branch
    %1304 = sbr.rel (0) target = $region25
  $region24: #{appnp_net_forward.2} parent=0 // pred_region
    _
  $region25: #{appnp_net_forward.2} parent=0 // pred_fallthru
    _
  // Predicated region
  $region26: #{appnp_net_forward.2} parent=0 // pred_check
    _
  $region27: #{appnp_net_forward.2} parent=0 // pred_check_branch
    %1306 = sbr.rel (0) target = $region29
  $region28: #{appnp_net_forward.2} parent=0 // pred_region
    _
  $region29: #{appnp_net_forward.2} parent=0 // pred_fallthru
    _
  // Predicated region
  $region30: #{appnp_net_forward.2} parent=0 // pred_check
    _
  $region31: #{appnp_net_forward.2} parent=0 // pred_check_branch
    %1308 = sbr.rel (0) target = $region33
  $region32: #{appnp_net_forward.2} parent=0 // pred_region
    _
  $region33: #{appnp_net_forward.2} parent=0 // pred_fallthru
    _
  // Predicated region
  $region34: #{appnp_net_forward.2} parent=0 // pred_check
    _
  $region35: #{appnp_net_forward.2} parent=0 // pred_check_branch
    %1310 = sbr.rel (0) target = $region37
  $region36: #{appnp_net_forward.2} parent=0 // pred_region
    _
  $region37: #{appnp_net_forward.2} parent=0 // pred_fallthru
    _

// kernel: appnp_net_forward.3
$region0: #{appnp_net_forward.3}
  #allocation0 [shape = 'u32[]', space=smem, size = 0x4, offset = 0x4, fixed_abs, tag = 'smem constant byte address 0x4 - core index']
  #allocation1 [shape = 'u32[144,128]{1,0:T(1,128)}', space=vmem, size = 0x12000, scoped, tag = 'internal scratch']
  #allocation2 [shape = 'bf16[2,512,128]{2,1,0:T(8,128)(2,1)}', space=vmem, size = 0x40000, scoped, tag = 'scratch operand']
  %s0 = inlined_call_operand.vmem [shape: bf16[512,512], index: 0, kind: input, shape index: {}]
  %s1 = inlined_call_operand.vmem [shape: bf16[512,128], index: 1, kind: input, shape index: {}]
  %s2 = inlined_call_operand.vmem [shape: f32[512,128], index: 2, kind: input, shape index: {}]
  %s3 = inlined_call_operand.vmem [shape: f32[512,128], index: 3, kind: output, shape index: {}]
  %s4 = sld [smem:[#allocation0]]
  $region61: #{appnp_net_forward.3} parent=0
    _
  %s6 = ssub.s32 1, %s4
  %s7 = scalar_select 0, %s6, %s4
  loop: start=0, step=1, limit=12
  $region2: #{appnp_net_forward.3} parent=0 // loop_pre_header
    _
  $region3: #{appnp_net_forward.3} parent=0 // loop_header
    %s9 = sphi 0, %s13
    %p10 = scmp.ge.s32.totalorder %s9, 12
    %s16 = sphi 0, %s35
    %s17 = sphi 0, %s31
    %s18 = sphi 0, %s27
    %s19 = sphi 0, %s16
    %s20 = sphi 0, %s17
    %s21 = sphi 0, %s18
    %s22 = sphi 0, %s19
    %s23 = sphi 0, %s20
    %s24 = sphi 0, %s21
    %s40 = sphi 0, %s42
    %s43 = sphi 0, %s40
    %s44 = sphi 0, %s43
    %s60 = sphi 0, %s44
    %s64 = sphi 0, %s64
    %s66 = sphi 0, %s64
    %s67 = sphi 0, %s66
    %s81 = sphi 0, %s67
    %s85 = sphi 0, %s85
    %s87 = sphi 0, %s85
    %s88 = sphi 0, %s87
    %s102 = sphi 0, %s88
    %s108 = sphi 0, %s110
    %s111 = sphi 0, %s108
    %s112 = sphi 0, %s111
    %s128 = sphi 0, %s112
  $region4: #{appnp_net_forward.3} parent=0 // loop_header_branch
    %12 = sbr.rel (%p10) target = $region8
  $region5: #{appnp_net_forward.3} parent=0 // loop_body
    %s14 = ssub.s32 %s9, 1
    %s15 = ssub.s32 %s9, 2
    %s25 = sadd.s32 1, %s18
    %p26 = scmp.ge.s32.totalorder %s25, 1
    %s27 = scalar_select %p26, 0, %s25
    %s28 = sadd.s32 1, %s17
    %s29 = scalar_select %p26, %s28, %s17
    %p30 = scmp.ge.s32.totalorder %s29, 1
    %s31 = scalar_select %p30, 0, %s29
    %s32 = sadd.s32 1, %s16
    %s33 = scalar_select %p30, %s32, %s16
    %p34 = scmp.ge.s32.totalorder %s33, 10
    %s35 = scalar_select %p34, 0, %s33
    %s36 = ssub.s32 %s17, %s31
    %s37 = ssub.s32 %s18, %s27
    %s38 = sor.u32 %s36, %s37
    %p39 = scmp.eq.s32.totalorder %s38, 0
    %s41 = sadd.s32 %s40, 1
    %s42 = scalar_select %p39, %s40, %s41
    %p45 = pneg %p39
    %p46 = scmp.eq.s32.totalorder %s9, 9
    %p47 = por %p45, %p46
    %p48 = scmp.ne.s32.totalorder %s40, %s43
    %p49 = scmp.eq.s32.totalorder %s9, 0
    %p50 = por %p48, %p49
    %p51 = scmp.ne.s32.totalorder %s40, %s43
    %p52 = scmp.eq.s32.totalorder %s14, 9
    %p53 = por %p51, %p52
    %p54 = scmp.ne.s32.totalorder %s43, %s44
    %p55 = scmp.eq.s32.totalorder %s14, 0
    %p56 = por %p54, %p55
    %p57 = scmp.ne.s32.totalorder %s43, %s44
    %p58 = scmp.eq.s32.totalorder %s15, 9
    %p59 = por %p57, %p58
    %p61 = scmp.ne.s32.totalorder %s44, %s60
    %p62 = scmp.eq.s32.totalorder %s15, 0
    %p63 = por %p61, %p62
    %s65 = sadd.s32 %s64, 1
    %p68 = scmp.eq.s32.totalorder %s9, 9
    %p69 = scmp.ne.s32.totalorder %s64, %s66
    %p70 = scmp.eq.s32.totalorder %s9, 0
    %p71 = por %p69, %p70
    %p72 = scmp.ne.s32.totalorder %s64, %s66
    %p73 = scmp.eq.s32.totalorder %s14, 9
    %p74 = por %p72, %p73
    %p75 = scmp.ne.s32.totalorder %s66, %s67
    %p76 = scmp.eq.s32.totalorder %s14, 0
    %p77 = por %p75, %p76
    %p78 = scmp.ne.s32.totalorder %s66, %s67
    %p79 = scmp.eq.s32.totalorder %s15, 9
    %p80 = por %p78, %p79
    %p82 = scmp.ne.s32.totalorder %s67, %s81
    %p83 = scmp.eq.s32.totalorder %s15, 0
    %p84 = por %p82, %p83
    %s86 = sadd.s32 %s85, 1
    %p89 = scmp.eq.s32.totalorder %s9, 9
    %p90 = scmp.ne.s32.totalorder %s85, %s87
    %p91 = scmp.eq.s32.totalorder %s9, 0
    %p92 = por %p90, %p91
    %p93 = scmp.ne.s32.totalorder %s85, %s87
    %p94 = scmp.eq.s32.totalorder %s14, 9
    %p95 = por %p93, %p94
    %p96 = scmp.ne.s32.totalorder %s87, %s88
    %p97 = scmp.eq.s32.totalorder %s14, 0
    %p98 = por %p96, %p97
    %p99 = scmp.ne.s32.totalorder %s87, %s88
    %p100 = scmp.eq.s32.totalorder %s15, 9
    %p101 = por %p99, %p100
    %p103 = scmp.ne.s32.totalorder %s88, %s102
    %p104 = scmp.eq.s32.totalorder %s15, 0
    %p105 = por %p103, %p104
    %s106 = ssub.s32 %s17, %s31
    %p107 = scmp.eq.s32.totalorder %s106, 0
    %s109 = sadd.s32 %s108, 1
    %s110 = scalar_select %p107, %s108, %s109
    %p113 = pneg %p107
    %p114 = scmp.eq.s32.totalorder %s9, 9
    %p115 = por %p113, %p114
    %p116 = scmp.ne.s32.totalorder %s108, %s111
    %p117 = scmp.eq.s32.totalorder %s9, 0
    %p118 = por %p116, %p117
    %p119 = scmp.ne.s32.totalorder %s108, %s111
    %p120 = scmp.eq.s32.totalorder %s14, 9
    %p121 = por %p119, %p120
    %p122 = scmp.ne.s32.totalorder %s111, %s112
    %p123 = scmp.eq.s32.totalorder %s14, 0
    %p124 = por %p122, %p123
    %p125 = scmp.ne.s32.totalorder %s111, %s112
    %p126 = scmp.eq.s32.totalorder %s15, 9
    %p127 = por %p125, %p126
    %p129 = scmp.ne.s32.totalorder %s112, %s128
    %p130 = scmp.eq.s32.totalorder %s15, 0
    %p131 = por %p129, %p130
    %p132 = scmp.le.s32.totalorder 1, %s9
    %p133 = scmp.lt.s32.totalorder %s9, 11
    %p134 = pnand %p132, %p133
    %p135 = pneg %p134
    // Predicated region
    $region9: #{appnp_net_forward.3} parent=5 // pred_check
      _
    $region10: #{appnp_net_forward.3} parent=5 // pred_check_branch
      %137 = sbr.rel (%p134) target = $region12
    $region11: #{appnp_net_forward.3} parent=5 // pred_region
      %s138 = ssub.s32 %s9, 1
      // Predicated region
      $region13: #{appnp_net_forward.3} parent=11 // pred_check
        %p139 = pneg %p56
      $region14: #{appnp_net_forward.3} parent=11 // pred_check_branch
        %141 = sbr.rel (%p139) target = $region16
      $region15: #{appnp_net_forward.3} parent=11 // pred_region
        %s142 = smul.u32 64, %s20
        %s143 = smul.u32 4, %s21
        %p144 = scmp.lt.s32.totalorder %s142, 63
        %s145 = scalar_select %p144, %s142, 63
        %p146 = scmp.lt.s32.totalorder %s143, 3
        %s147 = scalar_select %p146, %s143, 3
        %s148 = smul.addr %s145, 4
        %s149 = sadd.s32 %s147, %s148
        %s150 = smul.addr %s149, 4
        %s151 = scalar_lea.vmem %s0, %s150
        %s152 = smul.u32 64, %s20
        %s153 = smul.u32 4, %s21
      $region16: #{appnp_net_forward.3} parent=11 // pred_fallthru
        _
      // Predicated region
      $region17: #{appnp_net_forward.3} parent=11 // pred_check
        %p154 = pneg %p77
      $region18: #{appnp_net_forward.3} parent=11 // pred_check_branch
        %156 = sbr.rel (%p154) target = $region20
      $region19: #{appnp_net_forward.3} parent=11 // pred_region
        _
      $region20: #{appnp_net_forward.3} parent=11 // pred_fallthru
        _
      // Predicated region
      $region21: #{appnp_net_forward.3} parent=11 // pred_check
        %p157 = pneg %p98
      $region22: #{appnp_net_forward.3} parent=11 // pred_check_branch
        %159 = sbr.rel (%p157) target = $region24
      $region23: #{appnp_net_forward.3} parent=11 // pred_region
        _
      $region24: #{appnp_net_forward.3} parent=11 // pred_fallthru
        _
    $region12: #{appnp_net_forward.3} parent=5 // pred_fallthru
      _
    %p160 = scmp.lt.s32.totalorder %s9, 10
    // Predicated region
    $region25: #{appnp_net_forward.3} parent=5 // pred_check
      %p161 = pneg %p160
    $region26: #{appnp_net_forward.3} parent=5 // pred_check_branch
      %163 = sbr.rel (%p161) target = $region28
    $region27: #{appnp_net_forward.3} parent=5 // pred_region
      _
    $region28: #{appnp_net_forward.3} parent=5 // pred_fallthru
      _
    %p164 = scmp.le.s32.totalorder 1, %s9
    %p165 = scmp.lt.s32.totalorder %s9, 11
    %p166 = pnand %p164, %p165
    %p167 = pneg %p166
    // Predicated region
    $region29: #{appnp_net_forward.3} parent=5 // pred_check
      _
    $region30: #{appnp_net_forward.3} parent=5 // pred_check_branch
      %169 = sbr.rel (%p166) target = $region32
    $region31: #{appnp_net_forward.3} parent=5 // pred_region
      %s170 = ssub.s32 %s9, 1
      %s171 = smul.u32 64, %s20
      %s172 = smul.u32 4, %s21
      %p173 = scmp.lt.s32.totalorder %s171, 63
      %s174 = scalar_select %p173, %s171, 63
      %p175 = scmp.lt.s32.totalorder %s172, 3
      %s176 = scalar_select %p175, %s172, 3
      %s177 = smul.addr %s174, 4
      %s178 = sadd.s32 %s176, %s177
      %s179 = smul.addr %s178, 4
      %s180 = scalar_lea.vmem %s0, %s179
      %p181 = pneg %p56
      %p182 = pneg %p53
      %p183 = pneg %p77
      %p184 = pneg %p74
      %p185 = pneg %p98
      %p186 = pneg %p95
      %p187 = pneg %p124
      %p188 = pneg %p121
      %s189 = smul.u32 64, %s20
      %p190 = scmp.lt.s32.totalorder %s189, 63
      %s191 = scalar_select %p190, %s189, 63
      %s192 = smul.addr %s191, 8
      %s193 = scalar_lea.vmem %s3, %s192
      %s194 = smul.u32 64, %s20
      %s195 = smul.u32 4, %s21
      %p196 = scmp.lt.s32.totalorder %s194, 63
      %s197 = scalar_select %p196, %s194, 63
      %p198 = scmp.lt.s32.totalorder %s195, 3
      %s199 = scalar_select %p198, %s195, 3
      %s200 = smul.addr %s197, 4
      %s201 = sadd.s32 %s199, %s200
      %s202 = smul.addr %s201, 4
      %s203 = scalar_lea.vmem %s0, %s202
      %s204 = smul.u32 64, %s20
      %s205 = smul.u32 4, %s21
      %s206 = smul.u32 64, %s20
      %p207 = scmp.lt.s32.totalorder %s206, 63
      %s208 = scalar_select %p207, %s206, 63
      %s209 = smul.addr %s208, 8
      %s210 = scalar_lea.vmem %s3, %s209
      %s211 = smul.u32 64, %s20
      %p213 = scmp.eq.s32.totalorder %s19, 0
      %p214 = scmp.eq.s32.totalorder %s20, 0
      %p215 = pnand %p213, %p214
      %p216 = pneg %p215
      %p217 = scmp.eq.s32.totalorder %s21, 0
      %p218 = pnand %p216, %p217
      %p219 = pneg %p218
      // Predicated region
      $region33: #{appnp_net_forward.3} parent=31 // pred_check
        _
      $region34: #{appnp_net_forward.3} parent=31 // pred_check_branch
        %221 = sbr.rel (%p218) target = $region36
      $region35: #{appnp_net_forward.3} parent=31 // pred_region
        %v222 = vld [vmem:[%s1] sm:$0xf]
        %v223 = vld [vmem:[%s1 + $0x4] sm:$0xf]
        %v224 = vld [vmem:[%s1 + $0x8] sm:$0xf]
        %v225 = vld [vmem:[%s1 + $0xc] sm:$0xf]
        %v226 = vld [vmem:[%s1 + $0x10] sm:$0xf]
        %v227 = vld [vmem:[%s1 + $0x14] sm:$0xf]
        %v228 = vld [vmem:[%s1 + $0x18] sm:$0xf]
        %v229 = vld [vmem:[%s1 + $0x1c] sm:$0xf]
        %v230 = vld [vmem:[%s1 + $0x20] sm:$0xf]
        %v231 = vld [vmem:[%s1 + $0x24] sm:$0xf]
        %v232 = vld [vmem:[%s1 + $0x28] sm:$0xf]
        %v233 = vld [vmem:[%s1 + $0x2c] sm:$0xf]
        %v234 = vld [vmem:[%s1 + $0x30] sm:$0xf]
        %v235 = vld [vmem:[%s1 + $0x34] sm:$0xf]
        %v236 = vld [vmem:[%s1 + $0x38] sm:$0xf]
        %v237 = vld [vmem:[%s1 + $0x3c] sm:$0xf]
        %v238 = vld [vmem:[%s1 + $0x40] sm:$0xf]
        %v239 = vld [vmem:[%s1 + $0x44] sm:$0xf]
        %v240 = vld [vmem:[%s1 + $0x48] sm:$0xf]
        %v241 = vld [vmem:[%s1 + $0x4c] sm:$0xf]
        %v242 = vld [vmem:[%s1 + $0x50] sm:$0xf]
        %v243 = vld [vmem:[%s1 + $0x54] sm:$0xf]
        %v244 = vld [vmem:[%s1 + $0x58] sm:$0xf]
        %v245 = vld [vmem:[%s1 + $0x5c] sm:$0xf]
        %v246 = vld [vmem:[%s1 + $0x60] sm:$0xf]
        %v247 = vld [vmem:[%s1 + $0x64] sm:$0xf]
        %v248 = vld [vmem:[%s1 + $0x68] sm:$0xf]
        %v249 = vld [vmem:[%s1 + $0x6c] sm:$0xf]
        %v250 = vld [vmem:[%s1 + $0x70] sm:$0xf]
        %v251 = vld [vmem:[%s1 + $0x74] sm:$0xf]
        %v252 = vld [vmem:[%s1 + $0x78] sm:$0xf]
        %v253 = vld [vmem:[%s1 + $0x7c] sm:$0xf]
        %v254 = vld [vmem:[%s1 + $0x80] sm:$0xf]
        %v255 = vld [vmem:[%s1 + $0x84] sm:$0xf]
        %v256 = vld [vmem:[%s1 + $0x88] sm:$0xf]
        %v257 = vld [vmem:[%s1 + $0x8c] sm:$0xf]
        %v258 = vld [vmem:[%s1 + $0x90] sm:$0xf]
        %v259 = vld [vmem:[%s1 + $0x94] sm:$0xf]
        %v260 = vld [vmem:[%s1 + $0x98] sm:$0xf]
        %v261 = vld [vmem:[%s1 + $0x9c] sm:$0xf]
        %v262 = vld [vmem:[%s1 + $0xa0] sm:$0xf]
        %v263 = vld [vmem:[%s1 + $0xa4] sm:$0xf]
        %v264 = vld [vmem:[%s1 + $0xa8] sm:$0xf]
        %v265 = vld [vmem:[%s1 + $0xac] sm:$0xf]
        %v266 = vld [vmem:[%s1 + $0xb0] sm:$0xf]
        %v267 = vld [vmem:[%s1 + $0xb4] sm:$0xf]
        %v268 = vld [vmem:[%s1 + $0xb8] sm:$0xf]
        %v269 = vld [vmem:[%s1 + $0xbc] sm:$0xf]
        %v270 = vld [vmem:[%s1 + $0xc0] sm:$0xf]
        %v271 = vld [vmem:[%s1 + $0xc4] sm:$0xf]
        %v272 = vld [vmem:[%s1 + $0xc8] sm:$0xf]
        %v273 = vld [vmem:[%s1 + $0xcc] sm:$0xf]
        %v274 = vld [vmem:[%s1 + $0xd0] sm:$0xf]
        %v275 = vld [vmem:[%s1 + $0xd4] sm:$0xf]
        %v276 = vld [vmem:[%s1 + $0xd8] sm:$0xf]
        %v277 = vld [vmem:[%s1 + $0xdc] sm:$0xf]
        %v278 = vld [vmem:[%s1 + $0xe0] sm:$0xf]
        %v279 = vld [vmem:[%s1 + $0xe4] sm:$0xf]
        %v280 = vld [vmem:[%s1 + $0xe8] sm:$0xf]
        %v281 = vld [vmem:[%s1 + $0xec] sm:$0xf]
        %v282 = vld [vmem:[%s1 + $0xf0] sm:$0xf]
        %v283 = vld [vmem:[%s1 + $0xf4] sm:$0xf]
        %v284 = vld [vmem:[%s1 + $0xf8] sm:$0xf]
        %v285 = vld [vmem:[%s1 + $0xfc] sm:$0xf]
        %286 = vst [vmem:[#allocation2] sm:$0xf] %v222
        %287 = vst [vmem:[#allocation2 + $0x4] sm:$0xf] %v223
        %288 = vst [vmem:[#allocation2 + $0x8] sm:$0xf] %v224
        %289 = vst [vmem:[#allocation2 + $0xc] sm:$0xf] %v225
        %290 = vst [vmem:[#allocation2 + $0x10] sm:$0xf] %v226
        %291 = vst [vmem:[#allocation2 + $0x14] sm:$0xf] %v227
        %292 = vst [vmem:[#allocation2 + $0x18] sm:$0xf] %v228
        %293 = vst [vmem:[#allocation2 + $0x1c] sm:$0xf] %v229
        %294 = vst [vmem:[#allocation2 + $0x20] sm:$0xf] %v230
        %295 = vst [vmem:[#allocation2 + $0x24] sm:$0xf] %v231
        %296 = vst [vmem:[#allocation2 + $0x28] sm:$0xf] %v232
        %297 = vst [vmem:[#allocation2 + $0x2c] sm:$0xf] %v233
        %298 = vst [vmem:[#allocation2 + $0x30] sm:$0xf] %v234
        %299 = vst [vmem:[#allocation2 + $0x34] sm:$0xf] %v235
        %300 = vst [vmem:[#allocation2 + $0x38] sm:$0xf] %v236
        %301 = vst [vmem:[#allocation2 + $0x3c] sm:$0xf] %v237
        %302 = vst [vmem:[#allocation2 + $0x40] sm:$0xf] %v238
        %303 = vst [vmem:[#allocation2 + $0x44] sm:$0xf] %v239
        %304 = vst [vmem:[#allocation2 + $0x48] sm:$0xf] %v240
        %305 = vst [vmem:[#allocation2 + $0x4c] sm:$0xf] %v241
        %306 = vst [vmem:[#allocation2 + $0x50] sm:$0xf] %v242
        %307 = vst [vmem:[#allocation2 + $0x54] sm:$0xf] %v243
        %308 = vst [vmem:[#allocation2 + $0x58] sm:$0xf] %v244
        %309 = vst [vmem:[#allocation2 + $0x5c] sm:$0xf] %v245
        %310 = vst [vmem:[#allocation2 + $0x60] sm:$0xf] %v246
        %311 = vst [vmem:[#allocation2 + $0x64] sm:$0xf] %v247
        %312 = vst [vmem:[#allocation2 + $0x68] sm:$0xf] %v248
        %313 = vst [vmem:[#allocation2 + $0x6c] sm:$0xf] %v249
        %314 = vst [vmem:[#allocation2 + $0x70] sm:$0xf] %v250
        %315 = vst [vmem:[#allocation2 + $0x74] sm:$0xf] %v251
        %316 = vst [vmem:[#allocation2 + $0x78] sm:$0xf] %v252
        %317 = vst [vmem:[#allocation2 + $0x7c] sm:$0xf] %v253
        %318 = vst [vmem:[#allocation2 + $0x80] sm:$0xf] %v254
        %319 = vst [vmem:[#allocation2 + $0x84] sm:$0xf] %v255
        %320 = vst [vmem:[#allocation2 + $0x88] sm:$0xf] %v256
        %321 = vst [vmem:[#allocation2 + $0x8c] sm:$0xf] %v257
        %322 = vst [vmem:[#allocation2 + $0x90] sm:$0xf] %v258
        %323 = vst [vmem:[#allocation2 + $0x94] sm:$0xf] %v259
        %324 = vst [vmem:[#allocation2 + $0x98] sm:$0xf] %v260
        %325 = vst [vmem:[#allocation2 + $0x9c] sm:$0xf] %v261
        %326 = vst [vmem:[#allocation2 + $0xa0] sm:$0xf] %v262
        %327 = vst [vmem:[#allocation2 + $0xa4] sm:$0xf] %v263
        %328 = vst [vmem:[#allocation2 + $0xa8] sm:$0xf] %v264
        %329 = vst [vmem:[#allocation2 + $0xac] sm:$0xf] %v265
        %330 = vst [vmem:[#allocation2 + $0xb0] sm:$0xf] %v266
        %331 = vst [vmem:[#allocation2 + $0xb4] sm:$0xf] %v267
        %332 = vst [vmem:[#allocation2 + $0xb8] sm:$0xf] %v268
        %333 = vst [vmem:[#allocation2 + $0xbc] sm:$0xf] %v269
        %334 = vst [vmem:[#allocation2 + $0xc0] sm:$0xf] %v270
        %335 = vst [vmem:[#allocation2 + $0xc4] sm:$0xf] %v271
        %336 = vst [vmem:[#allocation2 + $0xc8] sm:$0xf] %v272
        %337 = vst [vmem:[#allocation2 + $0xcc] sm:$0xf] %v273
        %338 = vst [vmem:[#allocation2 + $0xd0] sm:$0xf] %v274
        %339 = vst [vmem:[#allocation2 + $0xd4] sm:$0xf] %v275
        %340 = vst [vmem:[#allocation2 + $0xd8] sm:$0xf] %v276
        %341 = vst [vmem:[#allocation2 + $0xdc] sm:$0xf] %v277
        %342 = vst [vmem:[#allocation2 + $0xe0] sm:$0xf] %v278
        %343 = vst [vmem:[#allocation2 + $0xe4] sm:$0xf] %v279
        %344 = vst [vmem:[#allocation2 + $0xe8] sm:$0xf] %v280
        %345 = vst [vmem:[#allocation2 + $0xec] sm:$0xf] %v281
        %346 = vst [vmem:[#allocation2 + $0xf0] sm:$0xf] %v282
        %347 = vst [vmem:[#allocation2 + $0xf4] sm:$0xf] %v283
        %348 = vst [vmem:[#allocation2 + $0xf8] sm:$0xf] %v284
        %349 = vst [vmem:[#allocation2 + $0xfc] sm:$0xf] %v285
      $region36: #{appnp_net_forward.3} parent=31 // pred_fallthru
        _
      %p350 = scmp.lt.s32.totalorder %s19, 0
      %s351 = ssub.s32 0, %s19
      %s352 = scalar_select %p350, %s351, %s19
      %s353 = sand.u32 %s352, 1
      %s354 = ssub.s32 0, %s353
      %s355 = scalar_select %p350, %s354, %s353
      %s356 = smul.u32 %s20, 512
      // Predicated region
      $region37: #{appnp_net_forward.3} parent=31 // pred_check
        %p357 = pneg %p217
      $region38: #{appnp_net_forward.3} parent=31 // pred_check_branch
        %359 = sbr.rel (%p357) target = $region40
      $region39: #{appnp_net_forward.3} parent=31 // pred_region
        %s360 = scalar_lea.vmem %s2, %s356
        %v361 = vld [vmem:[%s360] sm:$0xff]
        %v362 = vld [vmem:[%s360 + $0x8] sm:$0xff]
        %v363 = vld [vmem:[%s360 + $0x10] sm:$0xff]
        %v364 = vld [vmem:[%s360 + $0x18] sm:$0xff]
        %v365 = vld [vmem:[%s360 + $0x20] sm:$0xff]
        %v366 = vld [vmem:[%s360 + $0x28] sm:$0xff]
        %v367 = vld [vmem:[%s360 + $0x30] sm:$0xff]
        %v368 = vld [vmem:[%s360 + $0x38] sm:$0xff]
        %v369 = vld [vmem:[%s360 + $0x40] sm:$0xff]
        %v370 = vld [vmem:[%s360 + $0x48] sm:$0xff]
        %v371 = vld [vmem:[%s360 + $0x50] sm:$0xff]
        %v372 = vld [vmem:[%s360 + $0x58] sm:$0xff]
        %v373 = vld [vmem:[%s360 + $0x60] sm:$0xff]
        %v374 = vld [vmem:[%s360 + $0x68] sm:$0xff]
        %v375 = vld [vmem:[%s360 + $0x70] sm:$0xff]
        %v376 = vld [vmem:[%s360 + $0x78] sm:$0xff]
        %v377 = vld [vmem:[%s360 + $0x80] sm:$0xff]
        %v378 = vld [vmem:[%s360 + $0x88] sm:$0xff]
        %v379 = vld [vmem:[%s360 + $0x90] sm:$0xff]
        %v380 = vld [vmem:[%s360 + $0x98] sm:$0xff]
        %v381 = vld [vmem:[%s360 + $0xa0] sm:$0xff]
        %v382 = vld [vmem:[%s360 + $0xa8] sm:$0xff]
        %v383 = vld [vmem:[%s360 + $0xb0] sm:$0xff]
        %v384 = vld [vmem:[%s360 + $0xb8] sm:$0xff]
        %v385 = vld [vmem:[%s360 + $0xc0] sm:$0xff]
        %v386 = vld [vmem:[%s360 + $0xc8] sm:$0xff]
        %v387 = vld [vmem:[%s360 + $0xd0] sm:$0xff]
        %v388 = vld [vmem:[%s360 + $0xd8] sm:$0xff]
        %v389 = vld [vmem:[%s360 + $0xe0] sm:$0xff]
        %v390 = vld [vmem:[%s360 + $0xe8] sm:$0xff]
        %v391 = vld [vmem:[%s360 + $0xf0] sm:$0xff]
        %v392 = vld [vmem:[%s360 + $0xf8] sm:$0xff]
        %v393 = vld [vmem:[%s360 + $0x100] sm:$0xff]
        %v394 = vld [vmem:[%s360 + $0x108] sm:$0xff]
        %v395 = vld [vmem:[%s360 + $0x110] sm:$0xff]
        %v396 = vld [vmem:[%s360 + $0x118] sm:$0xff]
        %v397 = vld [vmem:[%s360 + $0x120] sm:$0xff]
        %v398 = vld [vmem:[%s360 + $0x128] sm:$0xff]
        %v399 = vld [vmem:[%s360 + $0x130] sm:$0xff]
        %v400 = vld [vmem:[%s360 + $0x138] sm:$0xff]
        %v401 = vld [vmem:[%s360 + $0x140] sm:$0xff]
        %v402 = vld [vmem:[%s360 + $0x148] sm:$0xff]
        %v403 = vld [vmem:[%s360 + $0x150] sm:$0xff]
        %v404 = vld [vmem:[%s360 + $0x158] sm:$0xff]
        %v405 = vld [vmem:[%s360 + $0x160] sm:$0xff]
        %v406 = vld [vmem:[%s360 + $0x168] sm:$0xff]
        %v407 = vld [vmem:[%s360 + $0x170] sm:$0xff]
        %v408 = vld [vmem:[%s360 + $0x178] sm:$0xff]
        %v409 = vld [vmem:[%s360 + $0x180] sm:$0xff]
        %v410 = vld [vmem:[%s360 + $0x188] sm:$0xff]
        %v411 = vld [vmem:[%s360 + $0x190] sm:$0xff]
        %v412 = vld [vmem:[%s360 + $0x198] sm:$0xff]
        %v413 = vld [vmem:[%s360 + $0x1a0] sm:$0xff]
        %v414 = vld [vmem:[%s360 + $0x1a8] sm:$0xff]
        %v415 = vld [vmem:[%s360 + $0x1b0] sm:$0xff]
        %v416 = vld [vmem:[%s360 + $0x1b8] sm:$0xff]
        %v417 = vld [vmem:[%s360 + $0x1c0] sm:$0xff]
        %v418 = vld [vmem:[%s360 + $0x1c8] sm:$0xff]
        %v419 = vld [vmem:[%s360 + $0x1d0] sm:$0xff]
        %v420 = vld [vmem:[%s360 + $0x1d8] sm:$0xff]
        %v421 = vld [vmem:[%s360 + $0x1e0] sm:$0xff]
        %v422 = vld [vmem:[%s360 + $0x1e8] sm:$0xff]
        %v423 = vld [vmem:[%s360 + $0x1f0] sm:$0xff]
        %v424 = vld [vmem:[%s360 + $0x1f8] sm:$0xff]
        %425 = vst [vmem:[%s210] sm:$0xff] %v361
        %426 = vst [vmem:[%s210 + $0x8] sm:$0xff] %v362
        %427 = vst [vmem:[%s210 + $0x10] sm:$0xff] %v363
        %428 = vst [vmem:[%s210 + $0x18] sm:$0xff] %v364
        %429 = vst [vmem:[%s210 + $0x20] sm:$0xff] %v365
        %430 = vst [vmem:[%s210 + $0x28] sm:$0xff] %v366
        %431 = vst [vmem:[%s210 + $0x30] sm:$0xff] %v367
        %432 = vst [vmem:[%s210 + $0x38] sm:$0xff] %v368
        %433 = vst [vmem:[%s210 + $0x40] sm:$0xff] %v369
        %434 = vst [vmem:[%s210 + $0x48] sm:$0xff] %v370
        %435 = vst [vmem:[%s210 + $0x50] sm:$0xff] %v371
        %436 = vst [vmem:[%s210 + $0x58] sm:$0xff] %v372
        %437 = vst [vmem:[%s210 + $0x60] sm:$0xff] %v373
        %438 = vst [vmem:[%s210 + $0x68] sm:$0xff] %v374
        %439 = vst [vmem:[%s210 + $0x70] sm:$0xff] %v375
        %440 = vst [vmem:[%s210 + $0x78] sm:$0xff] %v376
        %441 = vst [vmem:[%s210 + $0x80] sm:$0xff] %v377
        %442 = vst [vmem:[%s210 + $0x88] sm:$0xff] %v378
        %443 = vst [vmem:[%s210 + $0x90] sm:$0xff] %v379
        %444 = vst [vmem:[%s210 + $0x98] sm:$0xff] %v380
        %445 = vst [vmem:[%s210 + $0xa0] sm:$0xff] %v381
        %446 = vst [vmem:[%s210 + $0xa8] sm:$0xff] %v382
        %447 = vst [vmem:[%s210 + $0xb0] sm:$0xff] %v383
        %448 = vst [vmem:[%s210 + $0xb8] sm:$0xff] %v384
        %449 = vst [vmem:[%s210 + $0xc0] sm:$0xff] %v385
        %450 = vst [vmem:[%s210 + $0xc8] sm:$0xff] %v386
        %451 = vst [vmem:[%s210 + $0xd0] sm:$0xff] %v387
        %452 = vst [vmem:[%s210 + $0xd8] sm:$0xff] %v388
        %453 = vst [vmem:[%s210 + $0xe0] sm:$0xff] %v389
        %454 = vst [vmem:[%s210 + $0xe8] sm:$0xff] %v390
        %455 = vst [vmem:[%s210 + $0xf0] sm:$0xff] %v391
        %456 = vst [vmem:[%s210 + $0xf8] sm:$0xff] %v392
        %457 = vst [vmem:[%s210 + $0x100] sm:$0xff] %v393
        %458 = vst [vmem:[%s210 + $0x108] sm:$0xff] %v394
        %459 = vst [vmem:[%s210 + $0x110] sm:$0xff] %v395
        %460 = vst [vmem:[%s210 + $0x118] sm:$0xff] %v396
        %461 = vst [vmem:[%s210 + $0x120] sm:$0xff] %v397
        %462 = vst [vmem:[%s210 + $0x128] sm:$0xff] %v398
        %463 = vst [vmem:[%s210 + $0x130] sm:$0xff] %v399
        %464 = vst [vmem:[%s210 + $0x138] sm:$0xff] %v400
        %465 = vst [vmem:[%s210 + $0x140] sm:$0xff] %v401
        %466 = vst [vmem:[%s210 + $0x148] sm:$0xff] %v402
        %467 = vst [vmem:[%s210 + $0x150] sm:$0xff] %v403
        %468 = vst [vmem:[%s210 + $0x158] sm:$0xff] %v404
        %469 = vst [vmem:[%s210 + $0x160] sm:$0xff] %v405
        %470 = vst [vmem:[%s210 + $0x168] sm:$0xff] %v406
        %471 = vst [vmem:[%s210 + $0x170] sm:$0xff] %v407
        %472 = vst [vmem:[%s210 + $0x178] sm:$0xff] %v408
        %473 = vst [vmem:[%s210 + $0x180] sm:$0xff] %v409
        %474 = vst [vmem:[%s210 + $0x188] sm:$0xff] %v410
        %475 = vst [vmem:[%s210 + $0x190] sm:$0xff] %v411
        %476 = vst [vmem:[%s210 + $0x198] sm:$0xff] %v412
        %477 = vst [vmem:[%s210 + $0x1a0] sm:$0xff] %v413
        %478 = vst [vmem:[%s210 + $0x1a8] sm:$0xff] %v414
        %479 = vst [vmem:[%s210 + $0x1b0] sm:$0xff] %v415
        %480 = vst [vmem:[%s210 + $0x1b8] sm:$0xff] %v416
        %481 = vst [vmem:[%s210 + $0x1c0] sm:$0xff] %v417
        %482 = vst [vmem:[%s210 + $0x1c8] sm:$0xff] %v418
        %483 = vst [vmem:[%s210 + $0x1d0] sm:$0xff] %v419
        %484 = vst [vmem:[%s210 + $0x1d8] sm:$0xff] %v420
        %485 = vst [vmem:[%s210 + $0x1e0] sm:$0xff] %v421
        %486 = vst [vmem:[%s210 + $0x1e8] sm:$0xff] %v422
        %487 = vst [vmem:[%s210 + $0x1f0] sm:$0xff] %v423
        %488 = vst [vmem:[%s210 + $0x1f8] sm:$0xff] %v424
      $region40: #{appnp_net_forward.3} parent=31 // pred_fallthru
        _
      %s489 = smul.u32 %s21, 512
      %s490 = sshra.s32 %s489, 3
      %s491 = sand.u32 %s489, 7
      %s492 = smul.u32 %s355, 64
      %s493 = sadd.s32 %s490, %s492
      %s494 = smul.addr %s493, 4
      %s495 = scalar_lea.vmem [#allocation2], %s494
      %v496 = vld [vmem:[%s495] sm:$0xf]
      %v497 = vld [vmem:[%s495 + $0x4] sm:$0xf]
      %v498 = vld [vmem:[%s495 + $0x8] sm:$0xf]
      %v499 = vld [vmem:[%s495 + $0xc] sm:$0xf]
      %v500 = vld [vmem:[%s495 + $0x10] sm:$0xf]
      %v501 = vld [vmem:[%s495 + $0x14] sm:$0xf]
      %v502 = vld [vmem:[%s495 + $0x18] sm:$0xf]
      %v503 = vld [vmem:[%s495 + $0x1c] sm:$0xf]
      %v504 = vld [vmem:[%s495 + $0x20] sm:$0xf]
      %v505 = vld [vmem:[%s495 + $0x24] sm:$0xf]
      %v506 = vld [vmem:[%s495 + $0x28] sm:$0xf]
      %v507 = vld [vmem:[%s495 + $0x2c] sm:$0xf]
      %v508 = vld [vmem:[%s495 + $0x30] sm:$0xf]
      %v509 = vld [vmem:[%s495 + $0x34] sm:$0xf]
      %v510 = vld [vmem:[%s495 + $0x38] sm:$0xf]
      %v511 = vld [vmem:[%s495 + $0x3c] sm:$0xf]
      %v512 = vld [vmem:[%s495 + $0x40] sm:$0xf]
      %v513 = vld [vmem:[%s495 + $0x44] sm:$0xf]
      %v514 = vld [vmem:[%s495 + $0x48] sm:$0xf]
      %v515 = vld [vmem:[%s495 + $0x4c] sm:$0xf]
      %v516 = vld [vmem:[%s495 + $0x50] sm:$0xf]
      %v517 = vld [vmem:[%s495 + $0x54] sm:$0xf]
      %v518 = vld [vmem:[%s495 + $0x58] sm:$0xf]
      %v519 = vld [vmem:[%s495 + $0x5c] sm:$0xf]
      %v520 = vld [vmem:[%s495 + $0x60] sm:$0xf]
      %v521 = vld [vmem:[%s495 + $0x64] sm:$0xf]
      %v522 = vld [vmem:[%s495 + $0x68] sm:$0xf]
      %v523 = vld [vmem:[%s495 + $0x6c] sm:$0xf]
      %v524 = vld [vmem:[%s495 + $0x70] sm:$0xf]
      %v525 = vld [vmem:[%s495 + $0x74] sm:$0xf]
      %v526 = vld [vmem:[%s495 + $0x78] sm:$0xf]
      %v527 = vld [vmem:[%s495 + $0x7c] sm:$0xf]
      %v528 = vld [vmem:[%s495 + $0x80] sm:$0xf]
      %v529 = vld [vmem:[%s495 + $0x84] sm:$0xf]
      %v530 = vld [vmem:[%s495 + $0x88] sm:$0xf]
      %v531 = vld [vmem:[%s495 + $0x8c] sm:$0xf]
      %v532 = vld [vmem:[%s495 + $0x90] sm:$0xf]
      %v533 = vld [vmem:[%s495 + $0x94] sm:$0xf]
      %v534 = vld [vmem:[%s495 + $0x98] sm:$0xf]
      %v535 = vld [vmem:[%s495 + $0x9c] sm:$0xf]
      %v536 = vld [vmem:[%s495 + $0xa0] sm:$0xf]
      %v537 = vld [vmem:[%s495 + $0xa4] sm:$0xf]
      %v538 = vld [vmem:[%s495 + $0xa8] sm:$0xf]
      %v539 = vld [vmem:[%s495 + $0xac] sm:$0xf]
      %v540 = vld [vmem:[%s495 + $0xb0] sm:$0xf]
      %v541 = vld [vmem:[%s495 + $0xb4] sm:$0xf]
      %v542 = vld [vmem:[%s495 + $0xb8] sm:$0xf]
      %v543 = vld [vmem:[%s495 + $0xbc] sm:$0xf]
      %v544 = vld [vmem:[%s495 + $0xc0] sm:$0xf]
      %v545 = vld [vmem:[%s495 + $0xc4] sm:$0xf]
      %v546 = vld [vmem:[%s495 + $0xc8] sm:$0xf]
      %v547 = vld [vmem:[%s495 + $0xcc] sm:$0xf]
      %v548 = vld [vmem:[%s495 + $0xd0] sm:$0xf]
      %v549 = vld [vmem:[%s495 + $0xd4] sm:$0xf]
      %v550 = vld [vmem:[%s495 + $0xd8] sm:$0xf]
      %v551 = vld [vmem:[%s495 + $0xdc] sm:$0xf]
      %v552 = vld [vmem:[%s495 + $0xe0] sm:$0xf]
      %v553 = vld [vmem:[%s495 + $0xe4] sm:$0xf]
      %v554 = vld [vmem:[%s495 + $0xe8] sm:$0xf]
      %v555 = vld [vmem:[%s495 + $0xec] sm:$0xf]
      %v556 = vld [vmem:[%s495 + $0xf0] sm:$0xf]
      %v557 = vld [vmem:[%s495 + $0xf4] sm:$0xf]
      %v558 = vld [vmem:[%s495 + $0xf8] sm:$0xf]
      %v559 = vld [vmem:[%s495 + $0xfc] sm:$0xf]
      %v560 = vld [vmem:[%s210] sm:$0xff]
      %v561 = vld [vmem:[%s210 + $0x8] sm:$0xff]
      %v562 = vld [vmem:[%s210 + $0x10] sm:$0xff]
      %v563 = vld [vmem:[%s210 + $0x18] sm:$0xff]
      %v564 = vld [vmem:[%s210 + $0x20] sm:$0xff]
      %v565 = vld [vmem:[%s210 + $0x28] sm:$0xff]
      %v566 = vld [vmem:[%s210 + $0x30] sm:$0xff]
      %v567 = vld [vmem:[%s210 + $0x38] sm:$0xff]
      %v568 = vld [vmem:[%s210 + $0x40] sm:$0xff]
      %v569 = vld [vmem:[%s210 + $0x48] sm:$0xff]
      %v570 = vld [vmem:[%s210 + $0x50] sm:$0xff]
      %v571 = vld [vmem:[%s210 + $0x58] sm:$0xff]
      %v572 = vld [vmem:[%s210 + $0x60] sm:$0xff]
      %v573 = vld [vmem:[%s210 + $0x68] sm:$0xff]
      %v574 = vld [vmem:[%s210 + $0x70] sm:$0xff]
      %v575 = vld [vmem:[%s210 + $0x78] sm:$0xff]
      %v576 = vld [vmem:[%s210 + $0x80] sm:$0xff]
      %v577 = vld [vmem:[%s210 + $0x88] sm:$0xff]
      %v578 = vld [vmem:[%s210 + $0x90] sm:$0xff]
      %v579 = vld [vmem:[%s210 + $0x98] sm:$0xff]
      %v580 = vld [vmem:[%s210 + $0xa0] sm:$0xff]
      %v581 = vld [vmem:[%s210 + $0xa8] sm:$0xff]
      %v582 = vld [vmem:[%s210 + $0xb0] sm:$0xff]
      %v583 = vld [vmem:[%s210 + $0xb8] sm:$0xff]
      %v584 = vld [vmem:[%s210 + $0xc0] sm:$0xff]
      %v585 = vld [vmem:[%s210 + $0xc8] sm:$0xff]
      %v586 = vld [vmem:[%s210 + $0xd0] sm:$0xff]
      %v587 = vld [vmem:[%s210 + $0xd8] sm:$0xff]
      %v588 = vld [vmem:[%s210 + $0xe0] sm:$0xff]
      %v589 = vld [vmem:[%s210 + $0xe8] sm:$0xff]
      %v590 = vld [vmem:[%s210 + $0xf0] sm:$0xff]
      %v591 = vld [vmem:[%s210 + $0xf8] sm:$0xff]
      %v592 = vld [vmem:[%s210 + $0x100] sm:$0xff]
      %v593 = vld [vmem:[%s210 + $0x108] sm:$0xff]
      %v594 = vld [vmem:[%s210 + $0x110] sm:$0xff]
      %v595 = vld [vmem:[%s210 + $0x118] sm:$0xff]
      %v596 = vld [vmem:[%s210 + $0x120] sm:$0xff]
      %v597 = vld [vmem:[%s210 + $0x128] sm:$0xff]
      %v598 = vld [vmem:[%s210 + $0x130] sm:$0xff]
      %v599 = vld [vmem:[%s210 + $0x138] sm:$0xff]
      %v600 = vld [vmem:[%s210 + $0x140] sm:$0xff]
      %v601 = vld [vmem:[%s210 + $0x148] sm:$0xff]
      %v602 = vld [vmem:[%s210 + $0x150] sm:$0xff]
      %v603 = vld [vmem:[%s210 + $0x158] sm:$0xff]
      %v604 = vld [vmem:[%s210 + $0x160] sm:$0xff]
      %v605 = vld [vmem:[%s210 + $0x168] sm:$0xff]
      %v606 = vld [vmem:[%s210 + $0x170] sm:$0xff]
      %v607 = vld [vmem:[%s210 + $0x178] sm:$0xff]
      %v608 = vld [vmem:[%s210 + $0x180] sm:$0xff]
      %v609 = vld [vmem:[%s210 + $0x188] sm:$0xff]
      %v610 = vld [vmem:[%s210 + $0x190] sm:$0xff]
      %v611 = vld [vmem:[%s210 + $0x198] sm:$0xff]
      %v612 = vld [vmem:[%s210 + $0x1a0] sm:$0xff]
      %v613 = vld [vmem:[%s210 + $0x1a8] sm:$0xff]
      %v614 = vld [vmem:[%s210 + $0x1b0] sm:$0xff]
      %v615 = vld [vmem:[%s210 + $0x1b8] sm:$0xff]
      %v616 = vld [vmem:[%s210 + $0x1c0] sm:$0xff]
      %v617 = vld [vmem:[%s210 + $0x1c8] sm:$0xff]
      %v618 = vld [vmem:[%s210 + $0x1d0] sm:$0xff]
      %v619 = vld [vmem:[%s210 + $0x1d8] sm:$0xff]
      %v620 = vld [vmem:[%s210 + $0x1e0] sm:$0xff]
      %v621 = vld [vmem:[%s210 + $0x1e8] sm:$0xff]
      %v622 = vld [vmem:[%s210 + $0x1f0] sm:$0xff]
      %v623 = vld [vmem:[%s210 + $0x1f8] sm:$0xff]
      %v624 = vld [vmem:[%s203] sm:$0xff]
      %v625 = vld [vmem:[%s203 + $0x8] sm:$0xff]
      %v626 = vld [vmem:[%s203 + $0x10] sm:$0xff]
      %v627 = vld [vmem:[%s203 + $0x18] sm:$0xff]
      %v628 = vld [vmem:[%s203 + $0x20] sm:$0xff]
      %v629 = vld [vmem:[%s203 + $0x28] sm:$0xff]
      %v630 = vld [vmem:[%s203 + $0x30] sm:$0xff]
      %v631 = vld [vmem:[%s203 + $0x38] sm:$0xff]
      %v632 = vld [vmem:[%s203 + $0x40] sm:$0xff]
      %v633 = vld [vmem:[%s203 + $0x48] sm:$0xff]
      %v634 = vld [vmem:[%s203 + $0x50] sm:$0xff]
      %v635 = vld [vmem:[%s203 + $0x58] sm:$0xff]
      %v636 = vld [vmem:[%s203 + $0x60] sm:$0xff]
      %v637 = vld [vmem:[%s203 + $0x68] sm:$0xff]
      %v638 = vld [vmem:[%s203 + $0x70] sm:$0xff]
      %v639 = vld [vmem:[%s203 + $0x78] sm:$0xff]
      %v640 = vld [vmem:[%s203 + $0x80] sm:$0xff]
      %v641 = vld [vmem:[%s203 + $0x88] sm:$0xff]
      %v642 = vld [vmem:[%s203 + $0x90] sm:$0xff]
      %v643 = vld [vmem:[%s203 + $0x98] sm:$0xff]
      %v644 = vld [vmem:[%s203 + $0xa0] sm:$0xff]
      %v645 = vld [vmem:[%s203 + $0xa8] sm:$0xff]
      %v646 = vld [vmem:[%s203 + $0xb0] sm:$0xff]
      %v647 = vld [vmem:[%s203 + $0xb8] sm:$0xff]
      %v648 = vld [vmem:[%s203 + $0xc0] sm:$0xff]
      %v649 = vld [vmem:[%s203 + $0xc8] sm:$0xff]
      %v650 = vld [vmem:[%s203 + $0xd0] sm:$0xff]
      %v651 = vld [vmem:[%s203 + $0xd8] sm:$0xff]
      %v652 = vld [vmem:[%s203 + $0xe0] sm:$0xff]
      %v653 = vld [vmem:[%s203 + $0xe8] sm:$0xff]
      %v654 = vld [vmem:[%s203 + $0xf0] sm:$0xff]
      %v655 = vld [vmem:[%s203 + $0xf8] sm:$0xff]
      %v656 = vld [vmem:[%s203 + $0x100] sm:$0xff]
      %v657 = vld [vmem:[%s203 + $0x108] sm:$0xff]
      %v658 = vld [vmem:[%s203 + $0x110] sm:$0xff]
      %v659 = vld [vmem:[%s203 + $0x118] sm:$0xff]
      %v660 = vld [vmem:[%s203 + $0x120] sm:$0xff]
      %v661 = vld [vmem:[%s203 + $0x128] sm:$0xff]
      %v662 = vld [vmem:[%s203 + $0x130] sm:$0xff]
      %v663 = vld [vmem:[%s203 + $0x138] sm:$0xff]
      %v664 = vld [vmem:[%s203 + $0x140] sm:$0xff]
      %v665 = vld [vmem:[%s203 + $0x148] sm:$0xff]
      %v666 = vld [vmem:[%s203 + $0x150] sm:$0xff]
      %v667 = vld [vmem:[%s203 + $0x158] sm:$0xff]
      %v668 = vld [vmem:[%s203 + $0x160] sm:$0xff]
      %v669 = vld [vmem:[%s203 + $0x168] sm:$0xff]
      %v670 = vld [vmem:[%s203 + $0x170] sm:$0xff]
      %v671 = vld [vmem:[%s203 + $0x178] sm:$0xff]
      %v672 = vld [vmem:[%s203 + $0x180] sm:$0xff]
      %v673 = vld [vmem:[%s203 + $0x188] sm:$0xff]
      %v674 = vld [vmem:[%s203 + $0x190] sm:$0xff]
      %v675 = vld [vmem:[%s203 + $0x198] sm:$0xff]
      %v676 = vld [vmem:[%s203 + $0x1a0] sm:$0xff]
      %v677 = vld [vmem:[%s203 + $0x1a8] sm:$0xff]
      %v678 = vld [vmem:[%s203 + $0x1b0] sm:$0xff]
      %v679 = vld [vmem:[%s203 + $0x1b8] sm:$0xff]
      %v680 = vld [vmem:[%s203 + $0x1c0] sm:$0xff]
      %v681 = vld [vmem:[%s203 + $0x1c8] sm:$0xff]
      %v682 = vld [vmem:[%s203 + $0x1d0] sm:$0xff]
      %v683 = vld [vmem:[%s203 + $0x1d8] sm:$0xff]
      %v684 = vld [vmem:[%s203 + $0x1e0] sm:$0xff]
      %v685 = vld [vmem:[%s203 + $0x1e8] sm:$0xff]
      %v686 = vld [vmem:[%s203 + $0x1f0] sm:$0xff]
      %v687 = vld [vmem:[%s203 + $0x1f8] sm:$0xff]
      %v688 = vld [vmem:[%s203 + $0x200] sm:$0xff]
      %v689 = vld [vmem:[%s203 + $0x208] sm:$0xff]
      %v690 = vld [vmem:[%s203 + $0x210] sm:$0xff]
      %v691 = vld [vmem:[%s203 + $0x218] sm:$0xff]
      %v692 = vld [vmem:[%s203 + $0x220] sm:$0xff]
      %v693 = vld [vmem:[%s203 + $0x228] sm:$0xff]
      %v694 = vld [vmem:[%s203 + $0x230] sm:$0xff]
      %v695 = vld [vmem:[%s203 + $0x238] sm:$0xff]
      %v696 = vld [vmem:[%s203 + $0x240] sm:$0xff]
      %v697 = vld [vmem:[%s203 + $0x248] sm:$0xff]
      %v698 = vld [vmem:[%s203 + $0x250] sm:$0xff]
      %v699 = vld [vmem:[%s203 + $0x258] sm:$0xff]
      %v700 = vld [vmem:[%s203 + $0x260] sm:$0xff]
      %v701 = vld [vmem:[%s203 + $0x268] sm:$0xff]
      %v702 = vld [vmem:[%s203 + $0x270] sm:$0xff]
      %v703 = vld [vmem:[%s203 + $0x278] sm:$0xff]
      %v704 = vld [vmem:[%s203 + $0x280] sm:$0xff]
      %v705 = vld [vmem:[%s203 + $0x288] sm:$0xff]
      %v706 = vld [vmem:[%s203 + $0x290] sm:$0xff]
      %v707 = vld [vmem:[%s203 + $0x298] sm:$0xff]
      %v708 = vld [vmem:[%s203 + $0x2a0] sm:$0xff]
      %v709 = vld [vmem:[%s203 + $0x2a8] sm:$0xff]
      %v710 = vld [vmem:[%s203 + $0x2b0] sm:$0xff]
      %v711 = vld [vmem:[%s203 + $0x2b8] sm:$0xff]
      %v712 = vld [vmem:[%s203 + $0x2c0] sm:$0xff]
      %v713 = vld [vmem:[%s203 + $0x2c8] sm:$0xff]
      %v714 = vld [vmem:[%s203 + $0x2d0] sm:$0xff]
      %v715 = vld [vmem:[%s203 + $0x2d8] sm:$0xff]
      %v716 = vld [vmem:[%s203 + $0x2e0] sm:$0xff]
      %v717 = vld [vmem:[%s203 + $0x2e8] sm:$0xff]
      %v718 = vld [vmem:[%s203 + $0x2f0] sm:$0xff]
      %v719 = vld [vmem:[%s203 + $0x2f8] sm:$0xff]
      %v720 = vld [vmem:[%s203 + $0x300] sm:$0xff]
      %v721 = vld [vmem:[%s203 + $0x308] sm:$0xff]
      %v722 = vld [vmem:[%s203 + $0x310] sm:$0xff]
      %v723 = vld [vmem:[%s203 + $0x318] sm:$0xff]
      %v724 = vld [vmem:[%s203 + $0x320] sm:$0xff]
      %v725 = vld [vmem:[%s203 + $0x328] sm:$0xff]
      %v726 = vld [vmem:[%s203 + $0x330] sm:$0xff]
      %v727 = vld [vmem:[%s203 + $0x338] sm:$0xff]
      %v728 = vld [vmem:[%s203 + $0x340] sm:$0xff]
      %v729 = vld [vmem:[%s203 + $0x348] sm:$0xff]
      %v730 = vld [vmem:[%s203 + $0x350] sm:$0xff]
      %v731 = vld [vmem:[%s203 + $0x358] sm:$0xff]
      %v732 = vld [vmem:[%s203 + $0x360] sm:$0xff]
      %v733 = vld [vmem:[%s203 + $0x368] sm:$0xff]
      %v734 = vld [vmem:[%s203 + $0x370] sm:$0xff]
      %v735 = vld [vmem:[%s203 + $0x378] sm:$0xff]
      %v736 = vld [vmem:[%s203 + $0x380] sm:$0xff]
      %v737 = vld [vmem:[%s203 + $0x388] sm:$0xff]
      %v738 = vld [vmem:[%s203 + $0x390] sm:$0xff]
      %v739 = vld [vmem:[%s203 + $0x398] sm:$0xff]
      %v740 = vld [vmem:[%s203 + $0x3a0] sm:$0xff]
      %v741 = vld [vmem:[%s203 + $0x3a8] sm:$0xff]
      %v742 = vld [vmem:[%s203 + $0x3b0] sm:$0xff]
      %v743 = vld [vmem:[%s203 + $0x3b8] sm:$0xff]
      %v744 = vld [vmem:[%s203 + $0x3c0] sm:$0xff]
      %v745 = vld [vmem:[%s203 + $0x3c8] sm:$0xff]
      %v746 = vld [vmem:[%s203 + $0x3d0] sm:$0xff]
      %v747 = vld [vmem:[%s203 + $0x3d8] sm:$0xff]
      %v748 = vld [vmem:[%s203 + $0x3e0] sm:$0xff]
      %v749 = vld [vmem:[%s203 + $0x3e8] sm:$0xff]
      %v750 = vld [vmem:[%s203 + $0x3f0] sm:$0xff]
      %v751 = vld [vmem:[%s203 + $0x3f8] sm:$0xff]
      %v880 = vunpack.c.l.b16 %v624
      %v881 = vunpack.c.h.b16 %v624
      %v882 = vunpack.c.l.b16 %v625
      %v883 = vunpack.c.h.b16 %v625
      %v884 = vunpack.c.l.b16 %v626
      %v885 = vunpack.c.h.b16 %v626
      %v886 = vunpack.c.l.b16 %v627
      %v887 = vunpack.c.h.b16 %v627
      %v888 = vunpack.c.l.b16 %v628
      %v889 = vunpack.c.h.b16 %v628
      %v890 = vunpack.c.l.b16 %v629
      %v891 = vunpack.c.h.b16 %v629
      %v892 = vunpack.c.l.b16 %v630
      %v893 = vunpack.c.h.b16 %v630
      %v894 = vunpack.c.l.b16 %v631
      %v895 = vunpack.c.h.b16 %v631
      %v896 = vunpack.c.l.b16 %v632
      %v897 = vunpack.c.h.b16 %v632
      %v898 = vunpack.c.l.b16 %v633
      %v899 = vunpack.c.h.b16 %v633
      %v900 = vunpack.c.l.b16 %v634
      %v901 = vunpack.c.h.b16 %v634
      %v902 = vunpack.c.l.b16 %v635
      %v903 = vunpack.c.h.b16 %v635
      %v904 = vunpack.c.l.b16 %v636
      %v905 = vunpack.c.h.b16 %v636
      %v906 = vunpack.c.l.b16 %v637
      %v907 = vunpack.c.h.b16 %v637
      %v908 = vunpack.c.l.b16 %v638
      %v909 = vunpack.c.h.b16 %v638
      %v910 = vunpack.c.l.b16 %v639
      %v911 = vunpack.c.h.b16 %v639
      %v912 = vunpack.c.l.b16 %v640
      %v913 = vunpack.c.h.b16 %v640
      %v914 = vunpack.c.l.b16 %v641
      %v915 = vunpack.c.h.b16 %v641
      %v916 = vunpack.c.l.b16 %v642
      %v917 = vunpack.c.h.b16 %v642
      %v918 = vunpack.c.l.b16 %v643
      %v919 = vunpack.c.h.b16 %v643
      %v920 = vunpack.c.l.b16 %v644
      %v921 = vunpack.c.h.b16 %v644
      %v922 = vunpack.c.l.b16 %v645
      %v923 = vunpack.c.h.b16 %v645
      %v924 = vunpack.c.l.b16 %v646
      %v925 = vunpack.c.h.b16 %v646
      %v926 = vunpack.c.l.b16 %v647
      %v927 = vunpack.c.h.b16 %v647
      %v928 = vunpack.c.l.b16 %v648
      %v929 = vunpack.c.h.b16 %v648
      %v930 = vunpack.c.l.b16 %v649
      %v931 = vunpack.c.h.b16 %v649
      %v932 = vunpack.c.l.b16 %v650
      %v933 = vunpack.c.h.b16 %v650
      %v934 = vunpack.c.l.b16 %v651
      %v935 = vunpack.c.h.b16 %v651
      %v936 = vunpack.c.l.b16 %v652
      %v937 = vunpack.c.h.b16 %v652
      %v938 = vunpack.c.l.b16 %v653
      %v939 = vunpack.c.h.b16 %v653
      %v940 = vunpack.c.l.b16 %v654
      %v941 = vunpack.c.h.b16 %v654
      %v942 = vunpack.c.l.b16 %v655
      %v943 = vunpack.c.h.b16 %v655
      %v944 = vunpack.c.l.b16 %v656
      %v945 = vunpack.c.h.b16 %v656
      %v946 = vunpack.c.l.b16 %v657
      %v947 = vunpack.c.h.b16 %v657
      %v948 = vunpack.c.l.b16 %v658
      %v949 = vunpack.c.h.b16 %v658
      %v950 = vunpack.c.l.b16 %v659
      %v951 = vunpack.c.h.b16 %v659
      %v952 = vunpack.c.l.b16 %v660
      %v953 = vunpack.c.h.b16 %v660
      %v954 = vunpack.c.l.b16 %v661
      %v955 = vunpack.c.h.b16 %v661
      %v956 = vunpack.c.l.b16 %v662
      %v957 = vunpack.c.h.b16 %v662
      %v958 = vunpack.c.l.b16 %v663
      %v959 = vunpack.c.h.b16 %v663
      %v960 = vunpack.c.l.b16 %v664
      %v961 = vunpack.c.h.b16 %v664
      %v962 = vunpack.c.l.b16 %v665
      %v963 = vunpack.c.h.b16 %v665
      %v964 = vunpack.c.l.b16 %v666
      %v965 = vunpack.c.h.b16 %v666
      %v966 = vunpack.c.l.b16 %v667
      %v967 = vunpack.c.h.b16 %v667
      %v968 = vunpack.c.l.b16 %v668
      %v969 = vunpack.c.h.b16 %v668
      %v970 = vunpack.c.l.b16 %v669
      %v971 = vunpack.c.h.b16 %v669
      %v972 = vunpack.c.l.b16 %v670
      %v973 = vunpack.c.h.b16 %v670
      %v974 = vunpack.c.l.b16 %v671
      %v975 = vunpack.c.h.b16 %v671
      %v976 = vunpack.c.l.b16 %v672
      %v977 = vunpack.c.h.b16 %v672
      %v978 = vunpack.c.l.b16 %v673
      %v979 = vunpack.c.h.b16 %v673
      %v980 = vunpack.c.l.b16 %v674
      %v981 = vunpack.c.h.b16 %v674
      %v982 = vunpack.c.l.b16 %v675
      %v983 = vunpack.c.h.b16 %v675
      %v984 = vunpack.c.l.b16 %v676
      %v985 = vunpack.c.h.b16 %v676
      %v986 = vunpack.c.l.b16 %v677
      %v987 = vunpack.c.h.b16 %v677
      %v988 = vunpack.c.l.b16 %v678
      %v989 = vunpack.c.h.b16 %v678
      %v990 = vunpack.c.l.b16 %v679
      %v991 = vunpack.c.h.b16 %v679
      %v992 = vunpack.c.l.b16 %v680
      %v993 = vunpack.c.h.b16 %v680
      %v994 = vunpack.c.l.b16 %v681
      %v995 = vunpack.c.h.b16 %v681
      %v996 = vunpack.c.l.b16 %v682
      %v997 = vunpack.c.h.b16 %v682
      %v998 = vunpack.c.l.b16 %v683
      %v999 = vunpack.c.h.b16 %v683
      %v1000 = vunpack.c.l.b16 %v684
      %v1001 = vunpack.c.h.b16 %v684
      %v1002 = vunpack.c.l.b16 %v685
      %v1003 = vunpack.c.h.b16 %v685
      %v1004 = vunpack.c.l.b16 %v686
      %v1005 = vunpack.c.h.b16 %v686
      %v1006 = vunpack.c.l.b16 %v687
      %v1007 = vunpack.c.h.b16 %v687
      %v1008 = vunpack.c.l.b16 %v688
      %v1009 = vunpack.c.h.b16 %v688
      %v1010 = vunpack.c.l.b16 %v689
      %v1011 = vunpack.c.h.b16 %v689
      %v1012 = vunpack.c.l.b16 %v690
      %v1013 = vunpack.c.h.b16 %v690
      %v1014 = vunpack.c.l.b16 %v691
      %v1015 = vunpack.c.h.b16 %v691
      %v1016 = vunpack.c.l.b16 %v692
      %v1017 = vunpack.c.h.b16 %v692
      %v1018 = vunpack.c.l.b16 %v693
      %v1019 = vunpack.c.h.b16 %v693
      %v1020 = vunpack.c.l.b16 %v694
      %v1021 = vunpack.c.h.b16 %v694
      %v1022 = vunpack.c.l.b16 %v695
      %v1023 = vunpack.c.h.b16 %v695
      %v1024 = vunpack.c.l.b16 %v696
      %v1025 = vunpack.c.h.b16 %v696
      %v1026 = vunpack.c.l.b16 %v697
      %v1027 = vunpack.c.h.b16 %v697
      %v1028 = vunpack.c.l.b16 %v698
      %v1029 = vunpack.c.h.b16 %v698
      %v1030 = vunpack.c.l.b16 %v699
      %v1031 = vunpack.c.h.b16 %v699
      %v1032 = vunpack.c.l.b16 %v700
      %v1033 = vunpack.c.h.b16 %v700
      %v1034 = vunpack.c.l.b16 %v701
      %v1035 = vunpack.c.h.b16 %v701
      %v1036 = vunpack.c.l.b16 %v702
      %v1037 = vunpack.c.h.b16 %v702
      %v1038 = vunpack.c.l.b16 %v703
      %v1039 = vunpack.c.h.b16 %v703
      %v1040 = vunpack.c.l.b16 %v704
      %v1041 = vunpack.c.h.b16 %v704
      %v1042 = vunpack.c.l.b16 %v705
      %v1043 = vunpack.c.h.b16 %v705
      %v1044 = vunpack.c.l.b16 %v706
      %v1045 = vunpack.c.h.b16 %v706
      %v1046 = vunpack.c.l.b16 %v707
      %v1047 = vunpack.c.h.b16 %v707
      %v1048 = vunpack.c.l.b16 %v708
      %v1049 = vunpack.c.h.b16 %v708
      %v1050 = vunpack.c.l.b16 %v709
      %v1051 = vunpack.c.h.b16 %v709
      %v1052 = vunpack.c.l.b16 %v710
      %v1053 = vunpack.c.h.b16 %v710
      %v1054 = vunpack.c.l.b16 %v711
      %v1055 = vunpack.c.h.b16 %v711
      %v1056 = vunpack.c.l.b16 %v712
      %v1057 = vunpack.c.h.b16 %v712
      %v1058 = vunpack.c.l.b16 %v713
      %v1059 = vunpack.c.h.b16 %v713
      %v1060 = vunpack.c.l.b16 %v714
      %v1061 = vunpack.c.h.b16 %v714
      %v1062 = vunpack.c.l.b16 %v715
      %v1063 = vunpack.c.h.b16 %v715
      %v1064 = vunpack.c.l.b16 %v716
      %v1065 = vunpack.c.h.b16 %v716
      %v1066 = vunpack.c.l.b16 %v717
      %v1067 = vunpack.c.h.b16 %v717
      %v1068 = vunpack.c.l.b16 %v718
      %v1069 = vunpack.c.h.b16 %v718
      %v1070 = vunpack.c.l.b16 %v719
      %v1071 = vunpack.c.h.b16 %v719
      %v1072 = vunpack.c.l.b16 %v720
      %v1073 = vunpack.c.h.b16 %v720
      %v1074 = vunpack.c.l.b16 %v721
      %v1075 = vunpack.c.h.b16 %v721
      %v1076 = vunpack.c.l.b16 %v722
      %v1077 = vunpack.c.h.b16 %v722
      %v1078 = vunpack.c.l.b16 %v723
      %v1079 = vunpack.c.h.b16 %v723
      %v1080 = vunpack.c.l.b16 %v724
      %v1081 = vunpack.c.h.b16 %v724
      %v1082 = vunpack.c.l.b16 %v725
      %v1083 = vunpack.c.h.b16 %v725
      %v1084 = vunpack.c.l.b16 %v726
      %v1085 = vunpack.c.h.b16 %v726
      %v1086 = vunpack.c.l.b16 %v727
      %v1087 = vunpack.c.h.b16 %v727
      %v1088 = vunpack.c.l.b16 %v728
      %v1089 = vunpack.c.h.b16 %v728
      %v1090 = vunpack.c.l.b16 %v729
      %v1091 = vunpack.c.h.b16 %v729
      %v1092 = vunpack.c.l.b16 %v730
      %v1093 = vunpack.c.h.b16 %v730
      %v1094 = vunpack.c.l.b16 %v731
      %v1095 = vunpack.c.h.b16 %v731
      %v1096 = vunpack.c.l.b16 %v732
      %v1097 = vunpack.c.h.b16 %v732
      %v1098 = vunpack.c.l.b16 %v733
      %v1099 = vunpack.c.h.b16 %v733
      %v1100 = vunpack.c.l.b16 %v734
      %v1101 = vunpack.c.h.b16 %v734
      %v1102 = vunpack.c.l.b16 %v735
      %v1103 = vunpack.c.h.b16 %v735
      %v1104 = vunpack.c.l.b16 %v736
      %v1105 = vunpack.c.h.b16 %v736
      %v1106 = vunpack.c.l.b16 %v737
      %v1107 = vunpack.c.h.b16 %v737
      %v1108 = vunpack.c.l.b16 %v738
      %v1109 = vunpack.c.h.b16 %v738
      %v1110 = vunpack.c.l.b16 %v739
      %v1111 = vunpack.c.h.b16 %v739
      %v1112 = vunpack.c.l.b16 %v740
      %v1113 = vunpack.c.h.b16 %v740
      %v1114 = vunpack.c.l.b16 %v741
      %v1115 = vunpack.c.h.b16 %v741
      %v1116 = vunpack.c.l.b16 %v742
      %v1117 = vunpack.c.h.b16 %v742
      %v1118 = vunpack.c.l.b16 %v743
      %v1119 = vunpack.c.h.b16 %v743
      %v1120 = vunpack.c.l.b16 %v744
      %v1121 = vunpack.c.h.b16 %v744
      %v1122 = vunpack.c.l.b16 %v745
      %v1123 = vunpack.c.h.b16 %v745
      %v1124 = vunpack.c.l.b16 %v746
      %v1125 = vunpack.c.h.b16 %v746
      %v1126 = vunpack.c.l.b16 %v747
      %v1127 = vunpack.c.h.b16 %v747
      %v1128 = vunpack.c.l.b16 %v748
      %v1129 = vunpack.c.h.b16 %v748
      %v1130 = vunpack.c.l.b16 %v749
      %v1131 = vunpack.c.h.b16 %v749
      %v1132 = vunpack.c.l.b16 %v750
      %v1133 = vunpack.c.h.b16 %v750
      %v1134 = vunpack.c.l.b16 %v751
      %v1135 = vunpack.c.h.b16 %v751
      %v1136 = vpack.c.b16 %v884, %v880
      %v1137 = vpack.c.b16 %v885, %v881
      %v1138 = vpack.c.b16 %v886, %v882
      %v1139 = vpack.c.b16 %v887, %v883
      %v1140 = vpack.c.b16 %v892, %v888
      %v1141 = vpack.c.b16 %v893, %v889
      %v1142 = vpack.c.b16 %v894, %v890
      %v1143 = vpack.c.b16 %v895, %v891
      %v1144 = vpack.c.b16 %v900, %v896
      %v1145 = vpack.c.b16 %v901, %v897
      %v1146 = vpack.c.b16 %v902, %v898
      %v1147 = vpack.c.b16 %v903, %v899
      %v1148 = vpack.c.b16 %v908, %v904
      %v1149 = vpack.c.b16 %v909, %v905
      %v1150 = vpack.c.b16 %v910, %v906
      %v1151 = vpack.c.b16 %v911, %v907
      %v1152 = vpack.c.b16 %v916, %v912
      %v1153 = vpack.c.b16 %v917, %v913
      %v1154 = vpack.c.b16 %v918, %v914
      %v1155 = vpack.c.b16 %v919, %v915
      %v1156 = vpack.c.b16 %v924, %v920
      %v1157 = vpack.c.b16 %v925, %v921
      %v1158 = vpack.c.b16 %v926, %v922
      %v1159 = vpack.c.b16 %v927, %v923
      %v1160 = vpack.c.b16 %v932, %v928
      %v1161 = vpack.c.b16 %v933, %v929
      %v1162 = vpack.c.b16 %v934, %v930
      %v1163 = vpack.c.b16 %v935, %v931
      %v1164 = vpack.c.b16 %v940, %v936
      %v1165 = vpack.c.b16 %v941, %v937
      %v1166 = vpack.c.b16 %v942, %v938
      %v1167 = vpack.c.b16 %v943, %v939
      %v1168 = vpack.c.b16 %v948, %v944
      %v1169 = vpack.c.b16 %v949, %v945
      %v1170 = vpack.c.b16 %v950, %v946
      %v1171 = vpack.c.b16 %v951, %v947
      %v1172 = vpack.c.b16 %v956, %v952
      %v1173 = vpack.c.b16 %v957, %v953
      %v1174 = vpack.c.b16 %v958, %v954
      %v1175 = vpack.c.b16 %v959, %v955
      %v1176 = vpack.c.b16 %v964, %v960
      %v1177 = vpack.c.b16 %v965, %v961
      %v1178 = vpack.c.b16 %v966, %v962
      %v1179 = vpack.c.b16 %v967, %v963
      %v1180 = vpack.c.b16 %v972, %v968
      %v1181 = vpack.c.b16 %v973, %v969
      %v1182 = vpack.c.b16 %v974, %v970
      %v1183 = vpack.c.b16 %v975, %v971
      %v1184 = vpack.c.b16 %v980, %v976
      %v1185 = vpack.c.b16 %v981, %v977
      %v1186 = vpack.c.b16 %v982, %v978
      %v1187 = vpack.c.b16 %v983, %v979
      %v1188 = vpack.c.b16 %v988, %v984
      %v1189 = vpack.c.b16 %v989, %v985
      %v1190 = vpack.c.b16 %v990, %v986
      %v1191 = vpack.c.b16 %v991, %v987
      %v1192 = vpack.c.b16 %v996, %v992
      %v1193 = vpack.c.b16 %v997, %v993
      %v1194 = vpack.c.b16 %v998, %v994
      %v1195 = vpack.c.b16 %v999, %v995
      %v1196 = vpack.c.b16 %v1004, %v1000
      %v1197 = vpack.c.b16 %v1005, %v1001
      %v1198 = vpack.c.b16 %v1006, %v1002
      %v1199 = vpack.c.b16 %v1007, %v1003
      %v1200 = vpack.c.b16 %v1012, %v1008
      %v1201 = vpack.c.b16 %v1013, %v1009
      %v1202 = vpack.c.b16 %v1014, %v1010
      %v1203 = vpack.c.b16 %v1015, %v1011
      %v1204 = vpack.c.b16 %v1020, %v1016
      %v1205 = vpack.c.b16 %v1021, %v1017
      %v1206 = vpack.c.b16 %v1022, %v1018
      %v1207 = vpack.c.b16 %v1023, %v1019
      %v1208 = vpack.c.b16 %v1028, %v1024
      %v1209 = vpack.c.b16 %v1029, %v1025
      %v1210 = vpack.c.b16 %v1030, %v1026
      %v1211 = vpack.c.b16 %v1031, %v1027
      %v1212 = vpack.c.b16 %v1036, %v1032
      %v1213 = vpack.c.b16 %v1037, %v1033
      %v1214 = vpack.c.b16 %v1038, %v1034
      %v1215 = vpack.c.b16 %v1039, %v1035
      %v1216 = vpack.c.b16 %v1044, %v1040
      %v1217 = vpack.c.b16 %v1045, %v1041
      %v1218 = vpack.c.b16 %v1046, %v1042
      %v1219 = vpack.c.b16 %v1047, %v1043
      %v1220 = vpack.c.b16 %v1052, %v1048
      %v1221 = vpack.c.b16 %v1053, %v1049
      %v1222 = vpack.c.b16 %v1054, %v1050
      %v1223 = vpack.c.b16 %v1055, %v1051
      %v1224 = vpack.c.b16 %v1060, %v1056
      %v1225 = vpack.c.b16 %v1061, %v1057
      %v1226 = vpack.c.b16 %v1062, %v1058
      %v1227 = vpack.c.b16 %v1063, %v1059
      %v1228 = vpack.c.b16 %v1068, %v1064
      %v1229 = vpack.c.b16 %v1069, %v1065
      %v1230 = vpack.c.b16 %v1070, %v1066
      %v1231 = vpack.c.b16 %v1071, %v1067
      %v1232 = vpack.c.b16 %v1076, %v1072
      %v1233 = vpack.c.b16 %v1077, %v1073
      %v1234 = vpack.c.b16 %v1078, %v1074
      %v1235 = vpack.c.b16 %v1079, %v1075
      %v1236 = vpack.c.b16 %v1084, %v1080
      %v1237 = vpack.c.b16 %v1085, %v1081
      %v1238 = vpack.c.b16 %v1086, %v1082
      %v1239 = vpack.c.b16 %v1087, %v1083
      %v1240 = vpack.c.b16 %v1092, %v1088
      %v1241 = vpack.c.b16 %v1093, %v1089
      %v1242 = vpack.c.b16 %v1094, %v1090
      %v1243 = vpack.c.b16 %v1095, %v1091
      %v1244 = vpack.c.b16 %v1100, %v1096
      %v1245 = vpack.c.b16 %v1101, %v1097
      %v1246 = vpack.c.b16 %v1102, %v1098
      %v1247 = vpack.c.b16 %v1103, %v1099
      %v1248 = vpack.c.b16 %v1108, %v1104
      %v1249 = vpack.c.b16 %v1109, %v1105
      %v1250 = vpack.c.b16 %v1110, %v1106
      %v1251 = vpack.c.b16 %v1111, %v1107
      %v1252 = vpack.c.b16 %v1116, %v1112
      %v1253 = vpack.c.b16 %v1117, %v1113
      %v1254 = vpack.c.b16 %v1118, %v1114
      %v1255 = vpack.c.b16 %v1119, %v1115
      %v1256 = vpack.c.b16 %v1124, %v1120
      %v1257 = vpack.c.b16 %v1125, %v1121
      %v1258 = vpack.c.b16 %v1126, %v1122
      %v1259 = vpack.c.b16 %v1127, %v1123
      %v1260 = vpack.c.b16 %v1132, %v1128
      %v1261 = vpack.c.b16 %v1133, %v1129
      %v1262 = vpack.c.b16 %v1134, %v1130
      %v1263 = vpack.c.b16 %v1135, %v1131
      %v1456 = vunpack.c.l.b16 %v496
      %v1457 = vunpack.c.l.b16 %v497
      %v1458 = vunpack.c.l.b16 %v498
      %v1459 = vunpack.c.l.b16 %v499
      %v1460 = vunpack.c.l.b16 %v500
      %v1461 = vunpack.c.l.b16 %v501
      %v1462 = vunpack.c.l.b16 %v502
      %v1463 = vunpack.c.l.b16 %v503
      %v1464 = vunpack.c.l.b16 %v504
      %v1465 = vunpack.c.l.b16 %v505
      %v1466 = vunpack.c.l.b16 %v506
      %v1467 = vunpack.c.l.b16 %v507
      %v1468 = vunpack.c.l.b16 %v508
      %v1469 = vunpack.c.l.b16 %v509
      %v1470 = vunpack.c.l.b16 %v510
      %v1471 = vunpack.c.l.b16 %v511
      %v1472 = vunpack.c.l.b16 %v512
      %v1473 = vunpack.c.l.b16 %v513
      %v1474 = vunpack.c.l.b16 %v514
      %v1475 = vunpack.c.l.b16 %v515
      %v1476 = vunpack.c.l.b16 %v516
      %v1477 = vunpack.c.l.b16 %v517
      %v1478 = vunpack.c.l.b16 %v518
      %v1479 = vunpack.c.l.b16 %v519
      %v1480 = vunpack.c.l.b16 %v520
      %v1481 = vunpack.c.l.b16 %v521
      %v1482 = vunpack.c.l.b16 %v522
      %v1483 = vunpack.c.l.b16 %v523
      %v1484 = vunpack.c.l.b16 %v524
      %v1485 = vunpack.c.l.b16 %v525
      %v1486 = vunpack.c.l.b16 %v526
      %v1487 = vunpack.c.l.b16 %v527
      %v1488 = vunpack.c.l.b16 %v528
      %v1489 = vunpack.c.l.b16 %v529
      %v1490 = vunpack.c.l.b16 %v530
      %v1491 = vunpack.c.l.b16 %v531
      %v1492 = vunpack.c.l.b16 %v532
      %v1493 = vunpack.c.l.b16 %v533
      %v1494 = vunpack.c.l.b16 %v534
      %v1495 = vunpack.c.l.b16 %v535
      %v1496 = vunpack.c.l.b16 %v536
      %v1497 = vunpack.c.l.b16 %v537
      %v1498 = vunpack.c.l.b16 %v538
      %v1499 = vunpack.c.l.b16 %v539
      %v1500 = vunpack.c.l.b16 %v540
      %v1501 = vunpack.c.l.b16 %v541
      %v1502 = vunpack.c.l.b16 %v542
      %v1503 = vunpack.c.l.b16 %v543
      %v1504 = vunpack.c.l.b16 %v544
      %v1505 = vunpack.c.l.b16 %v545
      %v1506 = vunpack.c.l.b16 %v546
      %v1507 = vunpack.c.l.b16 %v547
      %v1508 = vunpack.c.l.b16 %v548
      %v1509 = vunpack.c.l.b16 %v549
      %v1510 = vunpack.c.l.b16 %v550
      %v1511 = vunpack.c.l.b16 %v551
      %v1512 = vunpack.c.l.b16 %v552
      %v1513 = vunpack.c.l.b16 %v553
      %v1514 = vunpack.c.l.b16 %v554
      %v1515 = vunpack.c.l.b16 %v555
      %v1516 = vunpack.c.l.b16 %v556
      %v1517 = vunpack.c.l.b16 %v557
      %v1518 = vunpack.c.l.b16 %v558
      %v1519 = vunpack.c.l.b16 %v559
      %v1520 = vpack.c.b16 %v1457, %v1456
      %v1521 = vpack.c.b16 %v1459, %v1458
      %v1522 = vpack.c.b16 %v1461, %v1460
      %v1523 = vpack.c.b16 %v1463, %v1462
      %v1524 = vpack.c.b16 %v1465, %v1464
      %v1525 = vpack.c.b16 %v1467, %v1466
      %v1526 = vpack.c.b16 %v1469, %v1468
      %v1527 = vpack.c.b16 %v1471, %v1470
      %v1528 = vpack.c.b16 %v1473, %v1472
      %v1529 = vpack.c.b16 %v1475, %v1474
      %v1530 = vpack.c.b16 %v1477, %v1476
      %v1531 = vpack.c.b16 %v1479, %v1478
      %v1532 = vpack.c.b16 %v1481, %v1480
      %v1533 = vpack.c.b16 %v1483, %v1482
      %v1534 = vpack.c.b16 %v1485, %v1484
      %v1535 = vpack.c.b16 %v1487, %v1486
      %v1536 = vpack.c.b16 %v1489, %v1488
      %v1537 = vpack.c.b16 %v1491, %v1490
      %v1538 = vpack.c.b16 %v1493, %v1492
      %v1539 = vpack.c.b16 %v1495, %v1494
      %v1540 = vpack.c.b16 %v1497, %v1496
      %v1541 = vpack.c.b16 %v1499, %v1498
      %v1542 = vpack.c.b16 %v1501, %v1500
      %v1543 = vpack.c.b16 %v1503, %v1502
      %v1544 = vpack.c.b16 %v1505, %v1504
      %v1545 = vpack.c.b16 %v1507, %v1506
      %v1546 = vpack.c.b16 %v1509, %v1508
      %v1547 = vpack.c.b16 %v1511, %v1510
      %v1548 = vpack.c.b16 %v1513, %v1512
      %v1549 = vpack.c.b16 %v1515, %v1514
      %v1550 = vpack.c.b16 %v1517, %v1516
      %v1551 = vpack.c.b16 %v1519, %v1518
      %1584 = vmatprep.subr.bf16.mxu0 0
      %1585 = vmatpush1.bf16.msra.mxu0 %v1527
      %1586 = vmatprep.subr.bf16.mxu0 0
      %1587 = vmatpush1.bf16.msra.mxu0 %v1526
      %1588 = vmatprep.subr.bf16.mxu0 0
      %1589 = vmatpush1.bf16.msra.mxu0 %v1525
      %1590 = vmatprep.subr.bf16.mxu0 0
      %1591 = vmatpush1.bf16.msra.mxu0 %v1524
      %1592 = vmatprep.subr.bf16.mxu0 0
      %1593 = vmatpush1.bf16.msra.mxu0 %v1523
      %1594 = vmatprep.subr.bf16.mxu0 0
      %1595 = vmatpush1.bf16.msra.mxu0 %v1522
      %1596 = vmatprep.subr.bf16.mxu0 0
      %1597 = vmatpush1.bf16.msra.mxu0 %v1521
      %1598 = vmatprep.subr.bf16.mxu0 0
      %1599 = vmatpush1.bf16.msra.mxu0 %v1520
      %1600 = vmatprep.subr.bf16.mxu0 0
      %1601 = vmatpush2.bf16.msra.mxu0 %v1535
      %1602 = vmatprep.subr.bf16.mxu0 0
      %1603 = vmatpush2.bf16.msra.mxu0 %v1534
      %1604 = vmatprep.subr.bf16.mxu0 0
      %1605 = vmatpush2.bf16.msra.mxu0 %v1533
      %1606 = vmatprep.subr.bf16.mxu0 0
      %1607 = vmatpush2.bf16.msra.mxu0 %v1532
      %1608 = vmatprep.subr.bf16.mxu0 0
      %1609 = vmatpush2.bf16.msra.mxu0 %v1531
      %1610 = vmatprep.subr.bf16.mxu0 0
      %1611 = vmatpush2.bf16.msra.mxu0 %v1530
      %1612 = vmatprep.subr.bf16.mxu0 0
      %1613 = vmatpush2.bf16.msra.mxu0 %v1529
      %1614 = vmatprep.subr.bf16.mxu0 0
      %1615 = vmatpush2.bf16.msra.mxu0 %v1528
      %1616 = vmatprep.mubr.bf16.mxu0 %v1137
      %1617 = vmatmul.mubr.bf16.gmra.mxu0 %v1136
      %v1618 = vpop.f32.mrf.mxu0
      %v1619 = vadd.f32 0.0, %v1618
      %v1620 = vpop.f32.mrf.mxu0
      %v1621 = vpop.f32.mrf.mxu0
      %v1622 = vadd.f32 0.0, %v1621
      %v1623 = vpop.f32.mrf.mxu0
      %1624 = vmatprep.mubr.bf16.mxu0 %v1141
      %1625 = vmatmul.mubr.bf16.gmra.mxu0 %v1140
      %v1626 = vpop.f32.mrf.mxu0
      %v1627 = vadd.f32 0.0, %v1626
      %v1628 = vpop.f32.mrf.mxu0
      %v1629 = vpop.f32.mrf.mxu0
      %v1630 = vadd.f32 0.0, %v1629
      %v1631 = vpop.f32.mrf.mxu0
      %1632 = vmatprep.mubr.bf16.mxu0 %v1145
      %1633 = vmatmul.mubr.bf16.gmra.mxu0 %v1144
      %v1634 = vpop.f32.mrf.mxu0
      %v1635 = vadd.f32 0.0, %v1634
      %v1636 = vpop.f32.mrf.mxu0
      %v1637 = vpop.f32.mrf.mxu0
      %v1638 = vadd.f32 0.0, %v1637
      %v1639 = vpop.f32.mrf.mxu0
      %1640 = vmatprep.mubr.bf16.mxu0 %v1149
      %1641 = vmatmul.mubr.bf16.gmra.mxu0 %v1148
      %v1642 = vpop.f32.mrf.mxu0
      %v1643 = vadd.f32 0.0, %v1642
      %v1644 = vpop.f32.mrf.mxu0
      %v1645 = vpop.f32.mrf.mxu0
      %v1646 = vadd.f32 0.0, %v1645
      %v1647 = vpop.f32.mrf.mxu0
      %1648 = vmatprep.mubr.bf16.mxu0 %v1153
      %1649 = vmatmul.mubr.bf16.gmra.mxu0 %v1152
      %v1650 = vpop.f32.mrf.mxu0
      %v1651 = vadd.f32 0.0, %v1650
      %v1652 = vpop.f32.mrf.mxu0
      %v1653 = vpop.f32.mrf.mxu0
      %v1654 = vadd.f32 0.0, %v1653
      %v1655 = vpop.f32.mrf.mxu0
      %1656 = vmatprep.mubr.bf16.mxu0 %v1157
      %1657 = vmatmul.mubr.bf16.gmra.mxu0 %v1156
      %v1658 = vpop.f32.mrf.mxu0
      %v1659 = vadd.f32 0.0, %v1658
      %v1660 = vpop.f32.mrf.mxu0
      %v1661 = vpop.f32.mrf.mxu0
      %v1662 = vadd.f32 0.0, %v1661
      %v1663 = vpop.f32.mrf.mxu0
      %1664 = vmatprep.mubr.bf16.mxu0 %v1161
      %1665 = vmatmul.mubr.bf16.gmra.mxu0 %v1160
      %v1666 = vpop.f32.mrf.mxu0
      %v1667 = vadd.f32 0.0, %v1666
      %v1668 = vpop.f32.mrf.mxu0
      %v1669 = vpop.f32.mrf.mxu0
      %v1670 = vadd.f32 0.0, %v1669
      %v1671 = vpop.f32.mrf.mxu0
      %1672 = vmatprep.mubr.bf16.mxu0 %v1165
      %1673 = vmatmul.mubr.bf16.gmra.mxu0 %v1164
      %v1674 = vpop.f32.mrf.mxu0
      %v1675 = vadd.f32 0.0, %v1674
      %v1676 = vpop.f32.mrf.mxu0
      %v1677 = vpop.f32.mrf.mxu0
      %v1678 = vadd.f32 0.0, %v1677
      %v1679 = vpop.f32.mrf.mxu0
      %1680 = vmatprep.mubr.bf16.mxu0 %v1169
      %1681 = vmatmul.mubr.bf16.gmra.mxu0 %v1168
      %v1682 = vpop.f32.mrf.mxu0
      %v1683 = vadd.f32 0.0, %v1682
      %v1684 = vpop.f32.mrf.mxu0
      %v1685 = vpop.f32.mrf.mxu0
      %v1686 = vadd.f32 0.0, %v1685
      %v1687 = vpop.f32.mrf.mxu0
      %1688 = vmatprep.mubr.bf16.mxu0 %v1173
      %1689 = vmatmul.mubr.bf16.gmra.mxu0 %v1172
      %v1690 = vpop.f32.mrf.mxu0
      %v1691 = vadd.f32 0.0, %v1690
      %v1692 = vpop.f32.mrf.mxu0
      %v1693 = vpop.f32.mrf.mxu0
      %v1694 = vadd.f32 0.0, %v1693
      %v1695 = vpop.f32.mrf.mxu0
      %1696 = vmatprep.mubr.bf16.mxu0 %v1177
      %1697 = vmatmul.mubr.bf16.gmra.mxu0 %v1176
      %v1698 = vpop.f32.mrf.mxu0
      %v1699 = vadd.f32 0.0, %v1698
      %v1700 = vpop.f32.mrf.mxu0
      %v1701 = vpop.f32.mrf.mxu0
      %v1702 = vadd.f32 0.0, %v1701
      %v1703 = vpop.f32.mrf.mxu0
      %1704 = vmatprep.mubr.bf16.mxu0 %v1181
      %1705 = vmatmul.mubr.bf16.gmra.mxu0 %v1180
      %v1706 = vpop.f32.mrf.mxu0
      %v1707 = vadd.f32 0.0, %v1706
      %v1708 = vpop.f32.mrf.mxu0
      %v1709 = vpop.f32.mrf.mxu0
      %v1710 = vadd.f32 0.0, %v1709
      %v1711 = vpop.f32.mrf.mxu0
      %1712 = vmatprep.mubr.bf16.mxu0 %v1185
      %1713 = vmatmul.mubr.bf16.gmra.mxu0 %v1184
      %v1714 = vpop.f32.mrf.mxu0
      %v1715 = vadd.f32 0.0, %v1714
      %v1716 = vpop.f32.mrf.mxu0
      %v1717 = vpop.f32.mrf.mxu0
      %v1718 = vadd.f32 0.0, %v1717
      %v1719 = vpop.f32.mrf.mxu0
      %1720 = vmatprep.mubr.bf16.mxu0 %v1189
      %1721 = vmatmul.mubr.bf16.gmra.mxu0 %v1188
      %v1722 = vpop.f32.mrf.mxu0
      %v1723 = vadd.f32 0.0, %v1722
      %v1724 = vpop.f32.mrf.mxu0
      %v1725 = vpop.f32.mrf.mxu0
      %v1726 = vadd.f32 0.0, %v1725
      %v1727 = vpop.f32.mrf.mxu0
      %1728 = vmatprep.mubr.bf16.mxu0 %v1193
      %1729 = vmatmul.mubr.bf16.gmra.mxu0 %v1192
      %v1730 = vpop.f32.mrf.mxu0
      %v1731 = vadd.f32 0.0, %v1730
      %v1732 = vpop.f32.mrf.mxu0
      %v1733 = vpop.f32.mrf.mxu0
      %v1734 = vadd.f32 0.0, %v1733
      %v1735 = vpop.f32.mrf.mxu0
      %1736 = vmatprep.mubr.bf16.mxu0 %v1197
      %1737 = vmatmul.mubr.bf16.gmra.mxu0 %v1196
      %v1738 = vpop.f32.mrf.mxu0
      %v1739 = vadd.f32 0.0, %v1738
      %v1740 = vpop.f32.mrf.mxu0
      %v1741 = vpop.f32.mrf.mxu0
      %v1742 = vadd.f32 0.0, %v1741
      %v1743 = vpop.f32.mrf.mxu0
      %1744 = vmatprep.mubr.bf16.mxu0 %v1201
      %1745 = vmatmul.mubr.bf16.gmra.mxu0 %v1200
      %v1746 = vpop.f32.mrf.mxu0
      %v1747 = vadd.f32 0.0, %v1746
      %v1748 = vpop.f32.mrf.mxu0
      %v1749 = vpop.f32.mrf.mxu0
      %v1750 = vadd.f32 0.0, %v1749
      %v1751 = vpop.f32.mrf.mxu0
      %1752 = vmatprep.mubr.bf16.mxu0 %v1205
      %1753 = vmatmul.mubr.bf16.gmra.mxu0 %v1204
      %v1754 = vpop.f32.mrf.mxu0
      %v1755 = vadd.f32 0.0, %v1754
      %v1756 = vpop.f32.mrf.mxu0
      %v1757 = vpop.f32.mrf.mxu0
      %v1758 = vadd.f32 0.0, %v1757
      %v1759 = vpop.f32.mrf.mxu0
      %1760 = vmatprep.mubr.bf16.mxu0 %v1209
      %1761 = vmatmul.mubr.bf16.gmra.mxu0 %v1208
      %v1762 = vpop.f32.mrf.mxu0
      %v1763 = vadd.f32 0.0, %v1762
      %v1764 = vpop.f32.mrf.mxu0
      %v1765 = vpop.f32.mrf.mxu0
      %v1766 = vadd.f32 0.0, %v1765
      %v1767 = vpop.f32.mrf.mxu0
      %1768 = vmatprep.mubr.bf16.mxu0 %v1213
      %1769 = vmatmul.mubr.bf16.gmra.mxu0 %v1212
      %v1770 = vpop.f32.mrf.mxu0
      %v1771 = vadd.f32 0.0, %v1770
      %v1772 = vpop.f32.mrf.mxu0
      %v1773 = vpop.f32.mrf.mxu0
      %v1774 = vadd.f32 0.0, %v1773
      %v1775 = vpop.f32.mrf.mxu0
      %1776 = vmatprep.mubr.bf16.mxu0 %v1217
      %1777 = vmatmul.mubr.bf16.gmra.mxu0 %v1216
      %v1778 = vpop.f32.mrf.mxu0
      %v1779 = vadd.f32 0.0, %v1778
      %v1780 = vpop.f32.mrf.mxu0
      %v1781 = vpop.f32.mrf.mxu0
      %v1782 = vadd.f32 0.0, %v1781
      %v1783 = vpop.f32.mrf.mxu0
      %1784 = vmatprep.mubr.bf16.mxu0 %v1221
      %1785 = vmatmul.mubr.bf16.gmra.mxu0 %v1220
      %v1786 = vpop.f32.mrf.mxu0
      %v1787 = vadd.f32 0.0, %v1786
      %v1788 = vpop.f32.mrf.mxu0
      %v1789 = vpop.f32.mrf.mxu0
      %v1790 = vadd.f32 0.0, %v1789
      %v1791 = vpop.f32.mrf.mxu0
      %1792 = vmatprep.mubr.bf16.mxu0 %v1225
      %1793 = vmatmul.mubr.bf16.gmra.mxu0 %v1224
      %v1794 = vpop.f32.mrf.mxu0
      %v1795 = vadd.f32 0.0, %v1794
      %v1796 = vpop.f32.mrf.mxu0
      %v1797 = vpop.f32.mrf.mxu0
      %v1798 = vadd.f32 0.0, %v1797
      %v1799 = vpop.f32.mrf.mxu0
      %1800 = vmatprep.mubr.bf16.mxu0 %v1229
      %1801 = vmatmul.mubr.bf16.gmra.mxu0 %v1228
      %v1802 = vpop.f32.mrf.mxu0
      %v1803 = vadd.f32 0.0, %v1802
      %v1804 = vpop.f32.mrf.mxu0
      %v1805 = vpop.f32.mrf.mxu0
      %v1806 = vadd.f32 0.0, %v1805
      %v1807 = vpop.f32.mrf.mxu0
      %1808 = vmatprep.mubr.bf16.mxu0 %v1233
      %1809 = vmatmul.mubr.bf16.gmra.mxu0 %v1232
      %v1810 = vpop.f32.mrf.mxu0
      %v1811 = vadd.f32 0.0, %v1810
      %v1812 = vpop.f32.mrf.mxu0
      %v1813 = vpop.f32.mrf.mxu0
      %v1814 = vadd.f32 0.0, %v1813
      %v1815 = vpop.f32.mrf.mxu0
      %1816 = vmatprep.mubr.bf16.mxu0 %v1237
      %1817 = vmatmul.mubr.bf16.gmra.mxu0 %v1236
      %v1818 = vpop.f32.mrf.mxu0
      %v1819 = vadd.f32 0.0, %v1818
      %v1820 = vpop.f32.mrf.mxu0
      %v1821 = vpop.f32.mrf.mxu0
      %v1822 = vadd.f32 0.0, %v1821
      %v1823 = vpop.f32.mrf.mxu0
      %1824 = vmatprep.mubr.bf16.mxu0 %v1241
      %1825 = vmatmul.mubr.bf16.gmra.mxu0 %v1240
      %v1826 = vpop.f32.mrf.mxu0
      %v1827 = vadd.f32 0.0, %v1826
      %v1828 = vpop.f32.mrf.mxu0
      %v1829 = vpop.f32.mrf.mxu0
      %v1830 = vadd.f32 0.0, %v1829
      %v1831 = vpop.f32.mrf.mxu0
      %1832 = vmatprep.mubr.bf16.mxu0 %v1245
      %1833 = vmatmul.mubr.bf16.gmra.mxu0 %v1244
      %v1834 = vpop.f32.mrf.mxu0
      %v1835 = vadd.f32 0.0, %v1834
      %v1836 = vpop.f32.mrf.mxu0
      %v1837 = vpop.f32.mrf.mxu0
      %v1838 = vadd.f32 0.0, %v1837
      %v1839 = vpop.f32.mrf.mxu0
      %1840 = vmatprep.mubr.bf16.mxu0 %v1249
      %1841 = vmatmul.mubr.bf16.gmra.mxu0 %v1248
      %v1842 = vpop.f32.mrf.mxu0
      %v1843 = vadd.f32 0.0, %v1842
      %v1844 = vpop.f32.mrf.mxu0
      %v1845 = vpop.f32.mrf.mxu0
      %v1846 = vadd.f32 0.0, %v1845
      %v1847 = vpop.f32.mrf.mxu0
      %1848 = vmatprep.mubr.bf16.mxu0 %v1253
      %1849 = vmatmul.mubr.bf16.gmra.mxu0 %v1252
      %v1850 = vpop.f32.mrf.mxu0
      %v1851 = vadd.f32 0.0, %v1850
      %v1852 = vpop.f32.mrf.mxu0
      %v1853 = vpop.f32.mrf.mxu0
      %v1854 = vadd.f32 0.0, %v1853
      %v1855 = vpop.f32.mrf.mxu0
      %1856 = vmatprep.mubr.bf16.mxu0 %v1257
      %1857 = vmatmul.mubr.bf16.gmra.mxu0 %v1256
      %v1858 = vpop.f32.mrf.mxu0
      %v1859 = vadd.f32 0.0, %v1858
      %v1860 = vpop.f32.mrf.mxu0
      %v1861 = vpop.f32.mrf.mxu0
      %v1862 = vadd.f32 0.0, %v1861
      %v1863 = vpop.f32.mrf.mxu0
      %1864 = vmatprep.mubr.bf16.mxu0 %v1261
      %1865 = vmatmul.mubr.bf16.gmra.mxu0 %v1260
      %v1866 = vpop.f32.mrf.mxu0
      %v1867 = vadd.f32 0.0, %v1866
      %v1868 = vpop.f32.mrf.mxu0
      %v1869 = vpop.f32.mrf.mxu0
      %v1870 = vadd.f32 0.0, %v1869
      %v1871 = vpop.f32.mrf.mxu0
      %1872 = vdwg.mxu0
      %1873 = vmatprep.subr.bf16.mxu0 0
      %1874 = vmatpush1.bf16.msra.mxu0 %v1543
      %1875 = vmatprep.subr.bf16.mxu0 0
      %1876 = vmatpush1.bf16.msra.mxu0 %v1542
      %1877 = vmatprep.subr.bf16.mxu0 0
      %1878 = vmatpush1.bf16.msra.mxu0 %v1541
      %1879 = vmatprep.subr.bf16.mxu0 0
      %1880 = vmatpush1.bf16.msra.mxu0 %v1540
      %1881 = vmatprep.subr.bf16.mxu0 0
      %1882 = vmatpush1.bf16.msra.mxu0 %v1539
      %1883 = vmatprep.subr.bf16.mxu0 0
      %1884 = vmatpush1.bf16.msra.mxu0 %v1538
      %1885 = vmatprep.subr.bf16.mxu0 0
      %1886 = vmatpush1.bf16.msra.mxu0 %v1537
      %1887 = vmatprep.subr.bf16.mxu0 0
      %1888 = vmatpush1.bf16.msra.mxu0 %v1536
      %1889 = vmatprep.subr.bf16.mxu0 0
      %1890 = vmatpush2.bf16.msra.mxu0 %v1551
      %1891 = vmatprep.subr.bf16.mxu0 0
      %1892 = vmatpush2.bf16.msra.mxu0 %v1550
      %1893 = vmatprep.subr.bf16.mxu0 0
      %1894 = vmatpush2.bf16.msra.mxu0 %v1549
      %1895 = vmatprep.subr.bf16.mxu0 0
      %1896 = vmatpush2.bf16.msra.mxu0 %v1548
      %1897 = vmatprep.subr.bf16.mxu0 0
      %1898 = vmatpush2.bf16.msra.mxu0 %v1547
      %1899 = vmatprep.subr.bf16.mxu0 0
      %1900 = vmatpush2.bf16.msra.mxu0 %v1546
      %1901 = vmatprep.subr.bf16.mxu0 0
      %1902 = vmatpush2.bf16.msra.mxu0 %v1545
      %1903 = vmatprep.subr.bf16.mxu0 0
      %1904 = vmatpush2.bf16.msra.mxu0 %v1544
      %1905 = vmatprep.mubr.bf16.mxu0 %v1139
      %1906 = vmatmul.mubr.bf16.gmra.mxu0 %v1138
      %v1907 = vpop.f32.mrf.mxu0
      %v1908 = vadd.f32 %v1619, %v1907
      %v1909 = vpop.f32.mrf.mxu0
      %v1910 = vpop.f32.mrf.mxu0
      %v1911 = vadd.f32 %v1622, %v1910
      %v1912 = vpop.f32.mrf.mxu0
      %1913 = vmatprep.mubr.bf16.mxu0 %v1143
      %1914 = vmatmul.mubr.bf16.gmra.mxu0 %v1142
      %v1915 = vpop.f32.mrf.mxu0
      %v1916 = vadd.f32 %v1627, %v1915
      %v1917 = vpop.f32.mrf.mxu0
      %v1918 = vpop.f32.mrf.mxu0
      %v1919 = vadd.f32 %v1630, %v1918
      %v1920 = vpop.f32.mrf.mxu0
      %1921 = vmatprep.mubr.bf16.mxu0 %v1147
      %1922 = vmatmul.mubr.bf16.gmra.mxu0 %v1146
      %v1923 = vpop.f32.mrf.mxu0
      %v1924 = vadd.f32 %v1635, %v1923
      %v1925 = vpop.f32.mrf.mxu0
      %v1926 = vpop.f32.mrf.mxu0
      %v1927 = vadd.f32 %v1638, %v1926
      %v1928 = vpop.f32.mrf.mxu0
      %1929 = vmatprep.mubr.bf16.mxu0 %v1151
      %1930 = vmatmul.mubr.bf16.gmra.mxu0 %v1150
      %v1931 = vpop.f32.mrf.mxu0
      %v1932 = vadd.f32 %v1643, %v1931
      %v1933 = vpop.f32.mrf.mxu0
      %v1934 = vpop.f32.mrf.mxu0
      %v1935 = vadd.f32 %v1646, %v1934
      %v1936 = vpop.f32.mrf.mxu0
      %1937 = vmatprep.mubr.bf16.mxu0 %v1155
      %1938 = vmatmul.mubr.bf16.gmra.mxu0 %v1154
      %v1939 = vpop.f32.mrf.mxu0
      %v1940 = vadd.f32 %v1651, %v1939
      %v1941 = vpop.f32.mrf.mxu0
      %v1942 = vpop.f32.mrf.mxu0
      %v1943 = vadd.f32 %v1654, %v1942
      %v1944 = vpop.f32.mrf.mxu0
      %1945 = vmatprep.mubr.bf16.mxu0 %v1159
      %1946 = vmatmul.mubr.bf16.gmra.mxu0 %v1158
      %v1947 = vpop.f32.mrf.mxu0
      %v1948 = vadd.f32 %v1659, %v1947
      %v1949 = vpop.f32.mrf.mxu0
      %v1950 = vpop.f32.mrf.mxu0
      %v1951 = vadd.f32 %v1662, %v1950
      %v1952 = vpop.f32.mrf.mxu0
      %1953 = vmatprep.mubr.bf16.mxu0 %v1163
      %1954 = vmatmul.mubr.bf16.gmra.mxu0 %v1162
      %v1955 = vpop.f32.mrf.mxu0
      %v1956 = vadd.f32 %v1667, %v1955
      %v1957 = vpop.f32.mrf.mxu0
      %v1958 = vpop.f32.mrf.mxu0
      %v1959 = vadd.f32 %v1670, %v1958
      %v1960 = vpop.f32.mrf.mxu0
      %1961 = vmatprep.mubr.bf16.mxu0 %v1167
      %1962 = vmatmul.mubr.bf16.gmra.mxu0 %v1166
      %v1963 = vpop.f32.mrf.mxu0
      %v1964 = vadd.f32 %v1675, %v1963
      %v1965 = vpop.f32.mrf.mxu0
      %v1966 = vpop.f32.mrf.mxu0
      %v1967 = vadd.f32 %v1678, %v1966
      %v1968 = vpop.f32.mrf.mxu0
      %1969 = vmatprep.mubr.bf16.mxu0 %v1171
      %1970 = vmatmul.mubr.bf16.gmra.mxu0 %v1170
      %v1971 = vpop.f32.mrf.mxu0
      %v1972 = vadd.f32 %v1683, %v1971
      %v1973 = vpop.f32.mrf.mxu0
      %v1974 = vpop.f32.mrf.mxu0
      %v1975 = vadd.f32 %v1686, %v1974
      %v1976 = vpop.f32.mrf.mxu0
      %1977 = vmatprep.mubr.bf16.mxu0 %v1175
      %1978 = vmatmul.mubr.bf16.gmra.mxu0 %v1174
      %v1979 = vpop.f32.mrf.mxu0
      %v1980 = vadd.f32 %v1691, %v1979
      %v1981 = vpop.f32.mrf.mxu0
      %v1982 = vpop.f32.mrf.mxu0
      %v1983 = vadd.f32 %v1694, %v1982
      %v1984 = vpop.f32.mrf.mxu0
      %1985 = vmatprep.mubr.bf16.mxu0 %v1179
      %1986 = vmatmul.mubr.bf16.gmra.mxu0 %v1178
      %v1987 = vpop.f32.mrf.mxu0
      %v1988 = vadd.f32 %v1699, %v1987
      %v1989 = vpop.f32.mrf.mxu0
      %v1990 = vpop.f32.mrf.mxu0
      %v1991 = vadd.f32 %v1702, %v1990
      %v1992 = vpop.f32.mrf.mxu0
      %1993 = vmatprep.mubr.bf16.mxu0 %v1183
      %1994 = vmatmul.mubr.bf16.gmra.mxu0 %v1182
      %v1995 = vpop.f32.mrf.mxu0
      %v1996 = vadd.f32 %v1707, %v1995
      %v1997 = vpop.f32.mrf.mxu0
      %v1998 = vpop.f32.mrf.mxu0
      %v1999 = vadd.f32 %v1710, %v1998
      %v2000 = vpop.f32.mrf.mxu0
      %2001 = vmatprep.mubr.bf16.mxu0 %v1187
      %2002 = vmatmul.mubr.bf16.gmra.mxu0 %v1186
      %v2003 = vpop.f32.mrf.mxu0
      %v2004 = vadd.f32 %v1715, %v2003
      %v2005 = vpop.f32.mrf.mxu0
      %v2006 = vpop.f32.mrf.mxu0
      %v2007 = vadd.f32 %v1718, %v2006
      %v2008 = vpop.f32.mrf.mxu0
      %2009 = vmatprep.mubr.bf16.mxu0 %v1191
      %2010 = vmatmul.mubr.bf16.gmra.mxu0 %v1190
      %v2011 = vpop.f32.mrf.mxu0
      %v2012 = vadd.f32 %v1723, %v2011
      %v2013 = vpop.f32.mrf.mxu0
      %v2014 = vpop.f32.mrf.mxu0
      %v2015 = vadd.f32 %v1726, %v2014
      %v2016 = vpop.f32.mrf.mxu0
      %2017 = vmatprep.mubr.bf16.mxu0 %v1195
      %2018 = vmatmul.mubr.bf16.gmra.mxu0 %v1194
      %v2019 = vpop.f32.mrf.mxu0
      %v2020 = vadd.f32 %v1731, %v2019
      %v2021 = vpop.f32.mrf.mxu0
      %v2022 = vpop.f32.mrf.mxu0
      %v2023 = vadd.f32 %v1734, %v2022
      %v2024 = vpop.f32.mrf.mxu0
      %2025 = vmatprep.mubr.bf16.mxu0 %v1199
      %2026 = vmatmul.mubr.bf16.gmra.mxu0 %v1198
      %v2027 = vpop.f32.mrf.mxu0
      %v2028 = vadd.f32 %v1739, %v2027
      %v2029 = vpop.f32.mrf.mxu0
      %v2030 = vpop.f32.mrf.mxu0
      %v2031 = vadd.f32 %v1742, %v2030
      %v2032 = vpop.f32.mrf.mxu0
      %2033 = vmatprep.mubr.bf16.mxu0 %v1203
      %2034 = vmatmul.mubr.bf16.gmra.mxu0 %v1202
      %v2035 = vpop.f32.mrf.mxu0
      %v2036 = vadd.f32 %v1747, %v2035
      %v2037 = vpop.f32.mrf.mxu0
      %v2038 = vpop.f32.mrf.mxu0
      %v2039 = vadd.f32 %v1750, %v2038
      %v2040 = vpop.f32.mrf.mxu0
      %2041 = vmatprep.mubr.bf16.mxu0 %v1207
      %2042 = vmatmul.mubr.bf16.gmra.mxu0 %v1206
      %v2043 = vpop.f32.mrf.mxu0
      %v2044 = vadd.f32 %v1755, %v2043
      %v2045 = vpop.f32.mrf.mxu0
      %v2046 = vpop.f32.mrf.mxu0
      %v2047 = vadd.f32 %v1758, %v2046
      %v2048 = vpop.f32.mrf.mxu0
      %2049 = vmatprep.mubr.bf16.mxu0 %v1211
      %2050 = vmatmul.mubr.bf16.gmra.mxu0 %v1210
      %v2051 = vpop.f32.mrf.mxu0
      %v2052 = vadd.f32 %v1763, %v2051
      %v2053 = vpop.f32.mrf.mxu0
      %v2054 = vpop.f32.mrf.mxu0
      %v2055 = vadd.f32 %v1766, %v2054
      %v2056 = vpop.f32.mrf.mxu0
      %2057 = vmatprep.mubr.bf16.mxu0 %v1215
      %2058 = vmatmul.mubr.bf16.gmra.mxu0 %v1214
      %v2059 = vpop.f32.mrf.mxu0
      %v2060 = vadd.f32 %v1771, %v2059
      %v2061 = vpop.f32.mrf.mxu0
      %v2062 = vpop.f32.mrf.mxu0
      %v2063 = vadd.f32 %v1774, %v2062
      %v2064 = vpop.f32.mrf.mxu0
      %2065 = vmatprep.mubr.bf16.mxu0 %v1219
      %2066 = vmatmul.mubr.bf16.gmra.mxu0 %v1218
      %v2067 = vpop.f32.mrf.mxu0
      %v2068 = vadd.f32 %v1779, %v2067
      %v2069 = vpop.f32.mrf.mxu0
      %v2070 = vpop.f32.mrf.mxu0
      %v2071 = vadd.f32 %v1782, %v2070
      %v2072 = vpop.f32.mrf.mxu0
      %2073 = vmatprep.mubr.bf16.mxu0 %v1223
      %2074 = vmatmul.mubr.bf16.gmra.mxu0 %v1222
      %v2075 = vpop.f32.mrf.mxu0
      %v2076 = vadd.f32 %v1787, %v2075
      %v2077 = vpop.f32.mrf.mxu0
      %v2078 = vpop.f32.mrf.mxu0
      %v2079 = vadd.f32 %v1790, %v2078
      %v2080 = vpop.f32.mrf.mxu0
      %2081 = vmatprep.mubr.bf16.mxu0 %v1227
      %2082 = vmatmul.mubr.bf16.gmra.mxu0 %v1226
      %v2083 = vpop.f32.mrf.mxu0
      %v2084 = vadd.f32 %v1795, %v2083
      %v2085 = vpop.f32.mrf.mxu0
      %v2086 = vpop.f32.mrf.mxu0
      %v2087 = vadd.f32 %v1798, %v2086
      %v2088 = vpop.f32.mrf.mxu0
      %2089 = vmatprep.mubr.bf16.mxu0 %v1231
      %2090 = vmatmul.mubr.bf16.gmra.mxu0 %v1230
      %v2091 = vpop.f32.mrf.mxu0
      %v2092 = vadd.f32 %v1803, %v2091
      %v2093 = vpop.f32.mrf.mxu0
      %v2094 = vpop.f32.mrf.mxu0
      %v2095 = vadd.f32 %v1806, %v2094
      %v2096 = vpop.f32.mrf.mxu0
      %2097 = vmatprep.mubr.bf16.mxu0 %v1235
      %2098 = vmatmul.mubr.bf16.gmra.mxu0 %v1234
      %v2099 = vpop.f32.mrf.mxu0
      %v2100 = vadd.f32 %v1811, %v2099
      %v2101 = vpop.f32.mrf.mxu0
      %v2102 = vpop.f32.mrf.mxu0
      %v2103 = vadd.f32 %v1814, %v2102
      %v2104 = vpop.f32.mrf.mxu0
      %2105 = vmatprep.mubr.bf16.mxu0 %v1239
      %2106 = vmatmul.mubr.bf16.gmra.mxu0 %v1238
      %v2107 = vpop.f32.mrf.mxu0
      %v2108 = vadd.f32 %v1819, %v2107
      %v2109 = vpop.f32.mrf.mxu0
      %v2110 = vpop.f32.mrf.mxu0
      %v2111 = vadd.f32 %v1822, %v2110
      %v2112 = vpop.f32.mrf.mxu0
      %2113 = vmatprep.mubr.bf16.mxu0 %v1243
      %2114 = vmatmul.mubr.bf16.gmra.mxu0 %v1242
      %v2115 = vpop.f32.mrf.mxu0
      %v2116 = vadd.f32 %v1827, %v2115
      %v2117 = vpop.f32.mrf.mxu0
      %v2118 = vpop.f32.mrf.mxu0
      %v2119 = vadd.f32 %v1830, %v2118
      %v2120 = vpop.f32.mrf.mxu0
      %2121 = vmatprep.mubr.bf16.mxu0 %v1247
      %2122 = vmatmul.mubr.bf16.gmra.mxu0 %v1246
      %v2123 = vpop.f32.mrf.mxu0
      %v2124 = vadd.f32 %v1835, %v2123
      %v2125 = vpop.f32.mrf.mxu0
      %v2126 = vpop.f32.mrf.mxu0
      %v2127 = vadd.f32 %v1838, %v2126
      %v2128 = vpop.f32.mrf.mxu0
      %2129 = vmatprep.mubr.bf16.mxu0 %v1251
      %2130 = vmatmul.mubr.bf16.gmra.mxu0 %v1250
      %v2131 = vpop.f32.mrf.mxu0
      %v2132 = vadd.f32 %v1843, %v2131
      %v2133 = vpop.f32.mrf.mxu0
      %v2134 = vpop.f32.mrf.mxu0
      %v2135 = vadd.f32 %v1846, %v2134
      %v2136 = vpop.f32.mrf.mxu0
      %2137 = vmatprep.mubr.bf16.mxu0 %v1255
      %2138 = vmatmul.mubr.bf16.gmra.mxu0 %v1254
      %v2139 = vpop.f32.mrf.mxu0
      %v2140 = vadd.f32 %v1851, %v2139
      %v2141 = vpop.f32.mrf.mxu0
      %v2142 = vpop.f32.mrf.mxu0
      %v2143 = vadd.f32 %v1854, %v2142
      %v2144 = vpop.f32.mrf.mxu0
      %2145 = vmatprep.mubr.bf16.mxu0 %v1259
      %2146 = vmatmul.mubr.bf16.gmra.mxu0 %v1258
      %v2147 = vpop.f32.mrf.mxu0
      %v2148 = vadd.f32 %v1859, %v2147
      %v2149 = vpop.f32.mrf.mxu0
      %v2150 = vpop.f32.mrf.mxu0
      %v2151 = vadd.f32 %v1862, %v2150
      %v2152 = vpop.f32.mrf.mxu0
      %2153 = vmatprep.mubr.bf16.mxu0 %v1263
      %2154 = vmatmul.mubr.bf16.gmra.mxu0 %v1262
      %v2155 = vpop.f32.mrf.mxu0
      %v2156 = vadd.f32 %v1867, %v2155
      %v2157 = vpop.f32.mrf.mxu0
      %v2158 = vpop.f32.mrf.mxu0
      %v2159 = vadd.f32 %v1870, %v2158
      %v2160 = vpop.f32.mrf.mxu0
      %2161 = vdwg.mxu0
      %v2162 = vadd.f32 %v560, %v1908
      %v2163 = vadd.f32 %v561, %v1911
      %v2164 = vadd.f32 %v562, %v1916
      %v2165 = vadd.f32 %v563, %v1919
      %v2166 = vadd.f32 %v564, %v1924
      %v2167 = vadd.f32 %v565, %v1927
      %v2168 = vadd.f32 %v566, %v1932
      %v2169 = vadd.f32 %v567, %v1935
      %v2170 = vadd.f32 %v568, %v1940
      %v2171 = vadd.f32 %v569, %v1943
      %v2172 = vadd.f32 %v570, %v1948
      %v2173 = vadd.f32 %v571, %v1951
      %v2174 = vadd.f32 %v572, %v1956
      %v2175 = vadd.f32 %v573, %v1959
      %v2176 = vadd.f32 %v574, %v1964
      %v2177 = vadd.f32 %v575, %v1967
      %v2178 = vadd.f32 %v576, %v1972
      %v2179 = vadd.f32 %v577, %v1975
      %v2180 = vadd.f32 %v578, %v1980
      %v2181 = vadd.f32 %v579, %v1983
      %v2182 = vadd.f32 %v580, %v1988
      %v2183 = vadd.f32 %v581, %v1991
      %v2184 = vadd.f32 %v582, %v1996
      %v2185 = vadd.f32 %v583, %v1999
      %v2186 = vadd.f32 %v584, %v2004
      %v2187 = vadd.f32 %v585, %v2007
      %v2188 = vadd.f32 %v586, %v2012
      %v2189 = vadd.f32 %v587, %v2015
      %v2190 = vadd.f32 %v588, %v2020
      %v2191 = vadd.f32 %v589, %v2023
      %v2192 = vadd.f32 %v590, %v2028
      %v2193 = vadd.f32 %v591, %v2031
      %v2194 = vadd.f32 %v592, %v2036
      %v2195 = vadd.f32 %v593, %v2039
      %v2196 = vadd.f32 %v594, %v2044
      %v2197 = vadd.f32 %v595, %v2047
      %v2198 = vadd.f32 %v596, %v2052
      %v2199 = vadd.f32 %v597, %v2055
      %v2200 = vadd.f32 %v598, %v2060
      %v2201 = vadd.f32 %v599, %v2063
      %v2202 = vadd.f32 %v600, %v2068
      %v2203 = vadd.f32 %v601, %v2071
      %v2204 = vadd.f32 %v602, %v2076
      %v2205 = vadd.f32 %v603, %v2079
      %v2206 = vadd.f32 %v604, %v2084
      %v2207 = vadd.f32 %v605, %v2087
      %v2208 = vadd.f32 %v606, %v2092
      %v2209 = vadd.f32 %v607, %v2095
      %v2210 = vadd.f32 %v608, %v2100
      %v2211 = vadd.f32 %v609, %v2103
      %v2212 = vadd.f32 %v610, %v2108
      %v2213 = vadd.f32 %v611, %v2111
      %v2214 = vadd.f32 %v612, %v2116
      %v2215 = vadd.f32 %v613, %v2119
      %v2216 = vadd.f32 %v614, %v2124
      %v2217 = vadd.f32 %v615, %v2127
      %v2218 = vadd.f32 %v616, %v2132
      %v2219 = vadd.f32 %v617, %v2135
      %v2220 = vadd.f32 %v618, %v2140
      %v2221 = vadd.f32 %v619, %v2143
      %v2222 = vadd.f32 %v620, %v2148
      %v2223 = vadd.f32 %v621, %v2151
      %v2224 = vadd.f32 %v622, %v2156
      %v2225 = vadd.f32 %v623, %v2159
      %2226 = vst [vmem:[%s210] sm:$0xff] %v2162
      %2227 = vst [vmem:[%s210 + $0x8] sm:$0xff] %v2163
      %2228 = vst [vmem:[%s210 + $0x10] sm:$0xff] %v2164
      %2229 = vst [vmem:[%s210 + $0x18] sm:$0xff] %v2165
      %2230 = vst [vmem:[%s210 + $0x20] sm:$0xff] %v2166
      %2231 = vst [vmem:[%s210 + $0x28] sm:$0xff] %v2167
      %2232 = vst [vmem:[%s210 + $0x30] sm:$0xff] %v2168
      %2233 = vst [vmem:[%s210 + $0x38] sm:$0xff] %v2169
      %2234 = vst [vmem:[%s210 + $0x40] sm:$0xff] %v2170
      %2235 = vst [vmem:[%s210 + $0x48] sm:$0xff] %v2171
      %2236 = vst [vmem:[%s210 + $0x50] sm:$0xff] %v2172
      %2237 = vst [vmem:[%s210 + $0x58] sm:$0xff] %v2173
      %2238 = vst [vmem:[%s210 + $0x60] sm:$0xff] %v2174
      %2239 = vst [vmem:[%s210 + $0x68] sm:$0xff] %v2175
      %2240 = vst [vmem:[%s210 + $0x70] sm:$0xff] %v2176
      %2241 = vst [vmem:[%s210 + $0x78] sm:$0xff] %v2177
      %2242 = vst [vmem:[%s210 + $0x80] sm:$0xff] %v2178
      %2243 = vst [vmem:[%s210 + $0x88] sm:$0xff] %v2179
      %2244 = vst [vmem:[%s210 + $0x90] sm:$0xff] %v2180
      %2245 = vst [vmem:[%s210 + $0x98] sm:$0xff] %v2181
      %2246 = vst [vmem:[%s210 + $0xa0] sm:$0xff] %v2182
      %2247 = vst [vmem:[%s210 + $0xa8] sm:$0xff] %v2183
      %2248 = vst [vmem:[%s210 + $0xb0] sm:$0xff] %v2184
      %2249 = vst [vmem:[%s210 + $0xb8] sm:$0xff] %v2185
      %2250 = vst [vmem:[%s210 + $0xc0] sm:$0xff] %v2186
      %2251 = vst [vmem:[%s210 + $0xc8] sm:$0xff] %v2187
      %2252 = vst [vmem:[%s210 + $0xd0] sm:$0xff] %v2188
      %2253 = vst [vmem:[%s210 + $0xd8] sm:$0xff] %v2189
      %2254 = vst [vmem:[%s210 + $0xe0] sm:$0xff] %v2190
      %2255 = vst [vmem:[%s210 + $0xe8] sm:$0xff] %v2191
      %2256 = vst [vmem:[%s210 + $0xf0] sm:$0xff] %v2192
      %2257 = vst [vmem:[%s210 + $0xf8] sm:$0xff] %v2193
      %2258 = vst [vmem:[%s210 + $0x100] sm:$0xff] %v2194
      %2259 = vst [vmem:[%s210 + $0x108] sm:$0xff] %v2195
      %2260 = vst [vmem:[%s210 + $0x110] sm:$0xff] %v2196
      %2261 = vst [vmem:[%s210 + $0x118] sm:$0xff] %v2197
      %2262 = vst [vmem:[%s210 + $0x120] sm:$0xff] %v2198
      %2263 = vst [vmem:[%s210 + $0x128] sm:$0xff] %v2199
      %2264 = vst [vmem:[%s210 + $0x130] sm:$0xff] %v2200
      %2265 = vst [vmem:[%s210 + $0x138] sm:$0xff] %v2201
      %2266 = vst [vmem:[%s210 + $0x140] sm:$0xff] %v2202
      %2267 = vst [vmem:[%s210 + $0x148] sm:$0xff] %v2203
      %2268 = vst [vmem:[%s210 + $0x150] sm:$0xff] %v2204
      %2269 = vst [vmem:[%s210 + $0x158] sm:$0xff] %v2205
      %2270 = vst [vmem:[%s210 + $0x160] sm:$0xff] %v2206
      %2271 = vst [vmem:[%s210 + $0x168] sm:$0xff] %v2207
      %2272 = vst [vmem:[%s210 + $0x170] sm:$0xff] %v2208
      %2273 = vst [vmem:[%s210 + $0x178] sm:$0xff] %v2209
      %2274 = vst [vmem:[%s210 + $0x180] sm:$0xff] %v2210
      %2275 = vst [vmem:[%s210 + $0x188] sm:$0xff] %v2211
      %2276 = vst [vmem:[%s210 + $0x190] sm:$0xff] %v2212
      %2277 = vst [vmem:[%s210 + $0x198] sm:$0xff] %v2213
      %2278 = vst [vmem:[%s210 + $0x1a0] sm:$0xff] %v2214
      %2279 = vst [vmem:[%s210 + $0x1a8] sm:$0xff] %v2215
      %2280 = vst [vmem:[%s210 + $0x1b0] sm:$0xff] %v2216
      %2281 = vst [vmem:[%s210 + $0x1b8] sm:$0xff] %v2217
      %2282 = vst [vmem:[%s210 + $0x1c0] sm:$0xff] %v2218
      %2283 = vst [vmem:[%s210 + $0x1c8] sm:$0xff] %v2219
      %2284 = vst [vmem:[%s210 + $0x1d0] sm:$0xff] %v2220
      %2285 = vst [vmem:[%s210 + $0x1d8] sm:$0xff] %v2221
      %2286 = vst [vmem:[%s210 + $0x1e0] sm:$0xff] %v2222
      %2287 = vst [vmem:[%s210 + $0x1e8] sm:$0xff] %v2223
      %2288 = vst [vmem:[%s210 + $0x1f0] sm:$0xff] %v2224
      %2289 = vst [vmem:[%s210 + $0x1f8] sm:$0xff] %v2225
      %p2290 = scmp.lt.s32.totalorder %s19, 9
      %p2291 = pnand %p217, %p2290
      %p2292 = pneg %p2291
      // Predicated region
      $region41: #{appnp_net_forward.3} parent=31 // pred_check
        _
      $region42: #{appnp_net_forward.3} parent=31 // pred_check_branch
        %2294 = sbr.rel (%p2291) target = $region44
      $region43: #{appnp_net_forward.3} parent=31 // pred_region
        %v2295 = vld [vmem:[%s210] sm:$0xff]
        %v2296 = vld [vmem:[%s210 + $0x8] sm:$0xff]
        %v2297 = vld [vmem:[%s210 + $0x10] sm:$0xff]
        %v2298 = vld [vmem:[%s210 + $0x18] sm:$0xff]
        %v2299 = vld [vmem:[%s210 + $0x20] sm:$0xff]
        %v2300 = vld [vmem:[%s210 + $0x28] sm:$0xff]
        %v2301 = vld [vmem:[%s210 + $0x30] sm:$0xff]
        %v2302 = vld [vmem:[%s210 + $0x38] sm:$0xff]
        %v2303 = vld [vmem:[%s210 + $0x40] sm:$0xff]
        %v2304 = vld [vmem:[%s210 + $0x48] sm:$0xff]
        %v2305 = vld [vmem:[%s210 + $0x50] sm:$0xff]
        %v2306 = vld [vmem:[%s210 + $0x58] sm:$0xff]
        %v2307 = vld [vmem:[%s210 + $0x60] sm:$0xff]
        %v2308 = vld [vmem:[%s210 + $0x68] sm:$0xff]
        %v2309 = vld [vmem:[%s210 + $0x70] sm:$0xff]
        %v2310 = vld [vmem:[%s210 + $0x78] sm:$0xff]
        %v2311 = vld [vmem:[%s210 + $0x80] sm:$0xff]
        %v2312 = vld [vmem:[%s210 + $0x88] sm:$0xff]
        %v2313 = vld [vmem:[%s210 + $0x90] sm:$0xff]
        %v2314 = vld [vmem:[%s210 + $0x98] sm:$0xff]
        %v2315 = vld [vmem:[%s210 + $0xa0] sm:$0xff]
        %v2316 = vld [vmem:[%s210 + $0xa8] sm:$0xff]
        %v2317 = vld [vmem:[%s210 + $0xb0] sm:$0xff]
        %v2318 = vld [vmem:[%s210 + $0xb8] sm:$0xff]
        %v2319 = vld [vmem:[%s210 + $0xc0] sm:$0xff]
        %v2320 = vld [vmem:[%s210 + $0xc8] sm:$0xff]
        %v2321 = vld [vmem:[%s210 + $0xd0] sm:$0xff]
        %v2322 = vld [vmem:[%s210 + $0xd8] sm:$0xff]
        %v2323 = vld [vmem:[%s210 + $0xe0] sm:$0xff]
        %v2324 = vld [vmem:[%s210 + $0xe8] sm:$0xff]
        %v2325 = vld [vmem:[%s210 + $0xf0] sm:$0xff]
        %v2326 = vld [vmem:[%s210 + $0xf8] sm:$0xff]
        %v2327 = vld [vmem:[%s210 + $0x100] sm:$0xff]
        %v2328 = vld [vmem:[%s210 + $0x108] sm:$0xff]
        %v2329 = vld [vmem:[%s210 + $0x110] sm:$0xff]
        %v2330 = vld [vmem:[%s210 + $0x118] sm:$0xff]
        %v2331 = vld [vmem:[%s210 + $0x120] sm:$0xff]
        %v2332 = vld [vmem:[%s210 + $0x128] sm:$0xff]
        %v2333 = vld [vmem:[%s210 + $0x130] sm:$0xff]
        %v2334 = vld [vmem:[%s210 + $0x138] sm:$0xff]
        %v2335 = vld [vmem:[%s210 + $0x140] sm:$0xff]
        %v2336 = vld [vmem:[%s210 + $0x148] sm:$0xff]
        %v2337 = vld [vmem:[%s210 + $0x150] sm:$0xff]
        %v2338 = vld [vmem:[%s210 + $0x158] sm:$0xff]
        %v2339 = vld [vmem:[%s210 + $0x160] sm:$0xff]
        %v2340 = vld [vmem:[%s210 + $0x168] sm:$0xff]
        %v2341 = vld [vmem:[%s210 + $0x170] sm:$0xff]
        %v2342 = vld [vmem:[%s210 + $0x178] sm:$0xff]
        %v2343 = vld [vmem:[%s210 + $0x180] sm:$0xff]
        %v2344 = vld [vmem:[%s210 + $0x188] sm:$0xff]
        %v2345 = vld [vmem:[%s210 + $0x190] sm:$0xff]
        %v2346 = vld [vmem:[%s210 + $0x198] sm:$0xff]
        %v2347 = vld [vmem:[%s210 + $0x1a0] sm:$0xff]
        %v2348 = vld [vmem:[%s210 + $0x1a8] sm:$0xff]
        %v2349 = vld [vmem:[%s210 + $0x1b0] sm:$0xff]
        %v2350 = vld [vmem:[%s210 + $0x1b8] sm:$0xff]
        %v2351 = vld [vmem:[%s210 + $0x1c0] sm:$0xff]
        %v2352 = vld [vmem:[%s210 + $0x1c8] sm:$0xff]
        %v2353 = vld [vmem:[%s210 + $0x1d0] sm:$0xff]
        %v2354 = vld [vmem:[%s210 + $0x1d8] sm:$0xff]
        %v2355 = vld [vmem:[%s210 + $0x1e0] sm:$0xff]
        %v2356 = vld [vmem:[%s210 + $0x1e8] sm:$0xff]
        %v2357 = vld [vmem:[%s210 + $0x1f0] sm:$0xff]
        %v2358 = vld [vmem:[%s210 + $0x1f8] sm:$0xff]
        %v2359 = vpack.c.bf16 %v2296, %v2295
        %v2360 = vpack.c.bf16 %v2298, %v2297
        %v2361 = vpack.c.bf16 %v2300, %v2299
        %v2362 = vpack.c.bf16 %v2302, %v2301
        %v2363 = vpack.c.bf16 %v2304, %v2303
        %v2364 = vpack.c.bf16 %v2306, %v2305
        %v2365 = vpack.c.bf16 %v2308, %v2307
        %v2366 = vpack.c.bf16 %v2310, %v2309
        %v2367 = vpack.c.bf16 %v2312, %v2311
        %v2368 = vpack.c.bf16 %v2314, %v2313
        %v2369 = vpack.c.bf16 %v2316, %v2315
        %v2370 = vpack.c.bf16 %v2318, %v2317
        %v2371 = vpack.c.bf16 %v2320, %v2319
        %v2372 = vpack.c.bf16 %v2322, %v2321
        %v2373 = vpack.c.bf16 %v2324, %v2323
        %v2374 = vpack.c.bf16 %v2326, %v2325
        %v2375 = vpack.c.bf16 %v2328, %v2327
        %v2376 = vpack.c.bf16 %v2330, %v2329
        %v2377 = vpack.c.bf16 %v2332, %v2331
        %v2378 = vpack.c.bf16 %v2334, %v2333
        %v2379 = vpack.c.bf16 %v2336, %v2335
        %v2380 = vpack.c.bf16 %v2338, %v2337
        %v2381 = vpack.c.bf16 %v2340, %v2339
        %v2382 = vpack.c.bf16 %v2342, %v2341
        %v2383 = vpack.c.bf16 %v2344, %v2343
        %v2384 = vpack.c.bf16 %v2346, %v2345
        %v2385 = vpack.c.bf16 %v2348, %v2347
        %v2386 = vpack.c.bf16 %v2350, %v2349
        %v2387 = vpack.c.bf16 %v2352, %v2351
        %v2388 = vpack.c.bf16 %v2354, %v2353
        %v2389 = vpack.c.bf16 %v2356, %v2355
        %v2390 = vpack.c.bf16 %v2358, %v2357
        %s2391 = ssub.s32 1, %s355
        %v2424 = vunpack.c.l.b16 %v2359
        %v2425 = vunpack.c.h.b16 %v2359
        %v2426 = vunpack.c.l.b16 %v2360
        %v2427 = vunpack.c.h.b16 %v2360
        %v2428 = vunpack.c.l.b16 %v2361
        %v2429 = vunpack.c.h.b16 %v2361
        %v2430 = vunpack.c.l.b16 %v2362
        %v2431 = vunpack.c.h.b16 %v2362
        %v2432 = vunpack.c.l.b16 %v2363
        %v2433 = vunpack.c.h.b16 %v2363
        %v2434 = vunpack.c.l.b16 %v2364
        %v2435 = vunpack.c.h.b16 %v2364
        %v2436 = vunpack.c.l.b16 %v2365
        %v2437 = vunpack.c.h.b16 %v2365
        %v2438 = vunpack.c.l.b16 %v2366
        %v2439 = vunpack.c.h.b16 %v2366
        %v2440 = vunpack.c.l.b16 %v2367
        %v2441 = vunpack.c.h.b16 %v2367
        %v2442 = vunpack.c.l.b16 %v2368
        %v2443 = vunpack.c.h.b16 %v2368
        %v2444 = vunpack.c.l.b16 %v2369
        %v2445 = vunpack.c.h.b16 %v2369
        %v2446 = vunpack.c.l.b16 %v2370
        %v2447 = vunpack.c.h.b16 %v2370
        %v2448 = vunpack.c.l.b16 %v2371
        %v2449 = vunpack.c.h.b16 %v2371
        %v2450 = vunpack.c.l.b16 %v2372
        %v2451 = vunpack.c.h.b16 %v2372
        %v2452 = vunpack.c.l.b16 %v2373
        %v2453 = vunpack.c.h.b16 %v2373
        %v2454 = vunpack.c.l.b16 %v2374
        %v2455 = vunpack.c.h.b16 %v2374
        %v2456 = vunpack.c.l.b16 %v2375
        %v2457 = vunpack.c.h.b16 %v2375
        %v2458 = vunpack.c.l.b16 %v2376
        %v2459 = vunpack.c.h.b16 %v2376
        %v2460 = vunpack.c.l.b16 %v2377
        %v2461 = vunpack.c.h.b16 %v2377
        %v2462 = vunpack.c.l.b16 %v2378
        %v2463 = vunpack.c.h.b16 %v2378
        %v2464 = vunpack.c.l.b16 %v2379
        %v2465 = vunpack.c.h.b16 %v2379
        %v2466 = vunpack.c.l.b16 %v2380
        %v2467 = vunpack.c.h.b16 %v2380
        %v2468 = vunpack.c.l.b16 %v2381
        %v2469 = vunpack.c.h.b16 %v2381
        %v2470 = vunpack.c.l.b16 %v2382
        %v2471 = vunpack.c.h.b16 %v2382
        %v2472 = vunpack.c.l.b16 %v2383
        %v2473 = vunpack.c.h.b16 %v2383
        %v2474 = vunpack.c.l.b16 %v2384
        %v2475 = vunpack.c.h.b16 %v2384
        %v2476 = vunpack.c.l.b16 %v2385
        %v2477 = vunpack.c.h.b16 %v2385
        %v2478 = vunpack.c.l.b16 %v2386
        %v2479 = vunpack.c.h.b16 %v2386
        %v2480 = vunpack.c.l.b16 %v2387
        %v2481 = vunpack.c.h.b16 %v2387
        %v2482 = vunpack.c.l.b16 %v2388
        %v2483 = vunpack.c.h.b16 %v2388
        %v2484 = vunpack.c.l.b16 %v2389
        %v2485 = vunpack.c.h.b16 %v2389
        %v2486 = vunpack.c.l.b16 %v2390
        %v2487 = vunpack.c.h.b16 %v2390
        %v2488 = vpack.c.b16 %v2424, %v2424
        %v2489 = vpack.c.b16 %v2425, %v2425
        %v2490 = vpack.c.b16 %v2426, %v2426
        %v2491 = vpack.c.b16 %v2427, %v2427
        %v2492 = vpack.c.b16 %v2428, %v2428
        %v2493 = vpack.c.b16 %v2429, %v2429
        %v2494 = vpack.c.b16 %v2430, %v2430
        %v2495 = vpack.c.b16 %v2431, %v2431
        %v2496 = vpack.c.b16 %v2432, %v2432
        %v2497 = vpack.c.b16 %v2433, %v2433
        %v2498 = vpack.c.b16 %v2434, %v2434
        %v2499 = vpack.c.b16 %v2435, %v2435
        %v2500 = vpack.c.b16 %v2436, %v2436
        %v2501 = vpack.c.b16 %v2437, %v2437
        %v2502 = vpack.c.b16 %v2438, %v2438
        %v2503 = vpack.c.b16 %v2439, %v2439
        %v2504 = vpack.c.b16 %v2440, %v2440
        %v2505 = vpack.c.b16 %v2441, %v2441
        %v2506 = vpack.c.b16 %v2442, %v2442
        %v2507 = vpack.c.b16 %v2443, %v2443
        %v2508 = vpack.c.b16 %v2444, %v2444
        %v2509 = vpack.c.b16 %v2445, %v2445
        %v2510 = vpack.c.b16 %v2446, %v2446
        %v2511 = vpack.c.b16 %v2447, %v2447
        %v2512 = vpack.c.b16 %v2448, %v2448
        %v2513 = vpack.c.b16 %v2449, %v2449
        %v2514 = vpack.c.b16 %v2450, %v2450
        %v2515 = vpack.c.b16 %v2451, %v2451
        %v2516 = vpack.c.b16 %v2452, %v2452
        %v2517 = vpack.c.b16 %v2453, %v2453
        %v2518 = vpack.c.b16 %v2454, %v2454
        %v2519 = vpack.c.b16 %v2455, %v2455
        %v2520 = vpack.c.b16 %v2456, %v2456
        %v2521 = vpack.c.b16 %v2457, %v2457
        %v2522 = vpack.c.b16 %v2458, %v2458
        %v2523 = vpack.c.b16 %v2459, %v2459
        %v2524 = vpack.c.b16 %v2460, %v2460
        %v2525 = vpack.c.b16 %v2461, %v2461
        %v2526 = vpack.c.b16 %v2462, %v2462
        %v2527 = vpack.c.b16 %v2463, %v2463
        %v2528 = vpack.c.b16 %v2464, %v2464
        %v2529 = vpack.c.b16 %v2465, %v2465
        %v2530 = vpack.c.b16 %v2466, %v2466
        %v2531 = vpack.c.b16 %v2467, %v2467
        %v2532 = vpack.c.b16 %v2468, %v2468
        %v2533 = vpack.c.b16 %v2469, %v2469
        %v2534 = vpack.c.b16 %v2470, %v2470
        %v2535 = vpack.c.b16 %v2471, %v2471
        %v2536 = vpack.c.b16 %v2472, %v2472
        %v2537 = vpack.c.b16 %v2473, %v2473
        %v2538 = vpack.c.b16 %v2474, %v2474
        %v2539 = vpack.c.b16 %v2475, %v2475
        %v2540 = vpack.c.b16 %v2476, %v2476
        %v2541 = vpack.c.b16 %v2477, %v2477
        %v2542 = vpack.c.b16 %v2478, %v2478
        %v2543 = vpack.c.b16 %v2479, %v2479
        %v2544 = vpack.c.b16 %v2480, %v2480
        %v2545 = vpack.c.b16 %v2481, %v2481
        %v2546 = vpack.c.b16 %v2482, %v2482
        %v2547 = vpack.c.b16 %v2483, %v2483
        %v2548 = vpack.c.b16 %v2484, %v2484
        %v2549 = vpack.c.b16 %v2485, %v2485
        %v2550 = vpack.c.b16 %v2486, %v2486
        %v2551 = vpack.c.b16 %v2487, %v2487
        %s2616 = sshra.s32 %s356, 3
        %s2617 = sand.u32 %s356, 7
        %s2618 = smul.u32 %s2391, 64
        %s2619 = sadd.s32 %s2616, %s2618
        %s2620 = smul.addr %s2619, 4
        %s2621 = scalar_lea.vmem [#allocation2], %s2620
        %2622 = vst [vmem:[%s2621] sm:$0xf] %v2488
        %2623 = vst [vmem:[%s2621 + $0x4] sm:$0xf] %v2489
        %2624 = vst [vmem:[%s2621 + $0x8] sm:$0xf] %v2490
        %2625 = vst [vmem:[%s2621 + $0xc] sm:$0xf] %v2491
        %2626 = vst [vmem:[%s2621 + $0x10] sm:$0xf] %v2492
        %2627 = vst [vmem:[%s2621 + $0x14] sm:$0xf] %v2493
        %2628 = vst [vmem:[%s2621 + $0x18] sm:$0xf] %v2494
        %2629 = vst [vmem:[%s2621 + $0x1c] sm:$0xf] %v2495
        %2630 = vst [vmem:[%s2621 + $0x20] sm:$0xf] %v2496
        %2631 = vst [vmem:[%s2621 + $0x24] sm:$0xf] %v2497
        %2632 = vst [vmem:[%s2621 + $0x28] sm:$0xf] %v2498
        %2633 = vst [vmem:[%s2621 + $0x2c] sm:$0xf] %v2499
        %2634 = vst [vmem:[%s2621 + $0x30] sm:$0xf] %v2500
        %2635 = vst [vmem:[%s2621 + $0x34] sm:$0xf] %v2501
        %2636 = vst [vmem:[%s2621 + $0x38] sm:$0xf] %v2502
        %2637 = vst [vmem:[%s2621 + $0x3c] sm:$0xf] %v2503
        %2638 = vst [vmem:[%s2621 + $0x40] sm:$0xf] %v2504
        %2639 = vst [vmem:[%s2621 + $0x44] sm:$0xf] %v2505
        %2640 = vst [vmem:[%s2621 + $0x48] sm:$0xf] %v2506
        %2641 = vst [vmem:[%s2621 + $0x4c] sm:$0xf] %v2507
        %2642 = vst [vmem:[%s2621 + $0x50] sm:$0xf] %v2508
        %2643 = vst [vmem:[%s2621 + $0x54] sm:$0xf] %v2509
        %2644 = vst [vmem:[%s2621 + $0x58] sm:$0xf] %v2510
        %2645 = vst [vmem:[%s2621 + $0x5c] sm:$0xf] %v2511
        %2646 = vst [vmem:[%s2621 + $0x60] sm:$0xf] %v2512
        %2647 = vst [vmem:[%s2621 + $0x64] sm:$0xf] %v2513
        %2648 = vst [vmem:[%s2621 + $0x68] sm:$0xf] %v2514
        %2649 = vst [vmem:[%s2621 + $0x6c] sm:$0xf] %v2515
        %2650 = vst [vmem:[%s2621 + $0x70] sm:$0xf] %v2516
        %2651 = vst [vmem:[%s2621 + $0x74] sm:$0xf] %v2517
        %2652 = vst [vmem:[%s2621 + $0x78] sm:$0xf] %v2518
        %2653 = vst [vmem:[%s2621 + $0x7c] sm:$0xf] %v2519
        %2654 = vst [vmem:[%s2621 + $0x80] sm:$0xf] %v2520
        %2655 = vst [vmem:[%s2621 + $0x84] sm:$0xf] %v2521
        %2656 = vst [vmem:[%s2621 + $0x88] sm:$0xf] %v2522
        %2657 = vst [vmem:[%s2621 + $0x8c] sm:$0xf] %v2523
        %2658 = vst [vmem:[%s2621 + $0x90] sm:$0xf] %v2524
        %2659 = vst [vmem:[%s2621 + $0x94] sm:$0xf] %v2525
        %2660 = vst [vmem:[%s2621 + $0x98] sm:$0xf] %v2526
        %2661 = vst [vmem:[%s2621 + $0x9c] sm:$0xf] %v2527
        %2662 = vst [vmem:[%s2621 + $0xa0] sm:$0xf] %v2528
        %2663 = vst [vmem:[%s2621 + $0xa4] sm:$0xf] %v2529
        %2664 = vst [vmem:[%s2621 + $0xa8] sm:$0xf] %v2530
        %2665 = vst [vmem:[%s2621 + $0xac] sm:$0xf] %v2531
        %2666 = vst [vmem:[%s2621 + $0xb0] sm:$0xf] %v2532
        %2667 = vst [vmem:[%s2621 + $0xb4] sm:$0xf] %v2533
        %2668 = vst [vmem:[%s2621 + $0xb8] sm:$0xf] %v2534
        %2669 = vst [vmem:[%s2621 + $0xbc] sm:$0xf] %v2535
        %2670 = vst [vmem:[%s2621 + $0xc0] sm:$0xf] %v2536
        %2671 = vst [vmem:[%s2621 + $0xc4] sm:$0xf] %v2537
        %2672 = vst [vmem:[%s2621 + $0xc8] sm:$0xf] %v2538
        %2673 = vst [vmem:[%s2621 + $0xcc] sm:$0xf] %v2539
        %2674 = vst [vmem:[%s2621 + $0xd0] sm:$0xf] %v2540
        %2675 = vst [vmem:[%s2621 + $0xd4] sm:$0xf] %v2541
        %2676 = vst [vmem:[%s2621 + $0xd8] sm:$0xf] %v2542
        %2677 = vst [vmem:[%s2621 + $0xdc] sm:$0xf] %v2543
        %2678 = vst [vmem:[%s2621 + $0xe0] sm:$0xf] %v2544
        %2679 = vst [vmem:[%s2621 + $0xe4] sm:$0xf] %v2545
        %2680 = vst [vmem:[%s2621 + $0xe8] sm:$0xf] %v2546
        %2681 = vst [vmem:[%s2621 + $0xec] sm:$0xf] %v2547
        %2682 = vst [vmem:[%s2621 + $0xf0] sm:$0xf] %v2548
        %2683 = vst [vmem:[%s2621 + $0xf4] sm:$0xf] %v2549
        %2684 = vst [vmem:[%s2621 + $0xf8] sm:$0xf] %v2550
        %2685 = vst [vmem:[%s2621 + $0xfc] sm:$0xf] %v2551
      $region44: #{appnp_net_forward.3} parent=31 // pred_fallthru
        _
      %p2686 = scmp.eq.s32.totalorder %s19, 9
      %p2687 = pnand %p217, %p2686
      %p2688 = pneg %p2687
      // Predicated region
      $region45: #{appnp_net_forward.3} parent=31 // pred_check
        _
      $region46: #{appnp_net_forward.3} parent=31 // pred_check_branch
        %2690 = sbr.rel (%p2687) target = $region48
      $region47: #{appnp_net_forward.3} parent=31 // pred_region
        %v2691 = vld [vmem:[%s210] sm:$0xff]
        %v2692 = vld [vmem:[%s210 + $0x8] sm:$0xff]
        %v2693 = vld [vmem:[%s210 + $0x10] sm:$0xff]
        %v2694 = vld [vmem:[%s210 + $0x18] sm:$0xff]
        %v2695 = vld [vmem:[%s210 + $0x20] sm:$0xff]
        %v2696 = vld [vmem:[%s210 + $0x28] sm:$0xff]
        %v2697 = vld [vmem:[%s210 + $0x30] sm:$0xff]
        %v2698 = vld [vmem:[%s210 + $0x38] sm:$0xff]
        %v2699 = vld [vmem:[%s210 + $0x40] sm:$0xff]
        %v2700 = vld [vmem:[%s210 + $0x48] sm:$0xff]
        %v2701 = vld [vmem:[%s210 + $0x50] sm:$0xff]
        %v2702 = vld [vmem:[%s210 + $0x58] sm:$0xff]
        %v2703 = vld [vmem:[%s210 + $0x60] sm:$0xff]
        %v2704 = vld [vmem:[%s210 + $0x68] sm:$0xff]
        %v2705 = vld [vmem:[%s210 + $0x70] sm:$0xff]
        %v2706 = vld [vmem:[%s210 + $0x78] sm:$0xff]
        %v2707 = vld [vmem:[%s210 + $0x80] sm:$0xff]
        %v2708 = vld [vmem:[%s210 + $0x88] sm:$0xff]
        %v2709 = vld [vmem:[%s210 + $0x90] sm:$0xff]
        %v2710 = vld [vmem:[%s210 + $0x98] sm:$0xff]
        %v2711 = vld [vmem:[%s210 + $0xa0] sm:$0xff]
        %v2712 = vld [vmem:[%s210 + $0xa8] sm:$0xff]
        %v2713 = vld [vmem:[%s210 + $0xb0] sm:$0xff]
        %v2714 = vld [vmem:[%s210 + $0xb8] sm:$0xff]
        %v2715 = vld [vmem:[%s210 + $0xc0] sm:$0xff]
        %v2716 = vld [vmem:[%s210 + $0xc8] sm:$0xff]
        %v2717 = vld [vmem:[%s210 + $0xd0] sm:$0xff]
        %v2718 = vld [vmem:[%s210 + $0xd8] sm:$0xff]
        %v2719 = vld [vmem:[%s210 + $0xe0] sm:$0xff]
        %v2720 = vld [vmem:[%s210 + $0xe8] sm:$0xff]
        %v2721 = vld [vmem:[%s210 + $0xf0] sm:$0xff]
        %v2722 = vld [vmem:[%s210 + $0xf8] sm:$0xff]
        %v2723 = vld [vmem:[%s210 + $0x100] sm:$0xff]
        %v2724 = vld [vmem:[%s210 + $0x108] sm:$0xff]
        %v2725 = vld [vmem:[%s210 + $0x110] sm:$0xff]
        %v2726 = vld [vmem:[%s210 + $0x118] sm:$0xff]
        %v2727 = vld [vmem:[%s210 + $0x120] sm:$0xff]
        %v2728 = vld [vmem:[%s210 + $0x128] sm:$0xff]
        %v2729 = vld [vmem:[%s210 + $0x130] sm:$0xff]
        %v2730 = vld [vmem:[%s210 + $0x138] sm:$0xff]
        %v2731 = vld [vmem:[%s210 + $0x140] sm:$0xff]
        %v2732 = vld [vmem:[%s210 + $0x148] sm:$0xff]
        %v2733 = vld [vmem:[%s210 + $0x150] sm:$0xff]
        %v2734 = vld [vmem:[%s210 + $0x158] sm:$0xff]
        %v2735 = vld [vmem:[%s210 + $0x160] sm:$0xff]
        %v2736 = vld [vmem:[%s210 + $0x168] sm:$0xff]
        %v2737 = vld [vmem:[%s210 + $0x170] sm:$0xff]
        %v2738 = vld [vmem:[%s210 + $0x178] sm:$0xff]
        %v2739 = vld [vmem:[%s210 + $0x180] sm:$0xff]
        %v2740 = vld [vmem:[%s210 + $0x188] sm:$0xff]
        %v2741 = vld [vmem:[%s210 + $0x190] sm:$0xff]
        %v2742 = vld [vmem:[%s210 + $0x198] sm:$0xff]
        %v2743 = vld [vmem:[%s210 + $0x1a0] sm:$0xff]
        %v2744 = vld [vmem:[%s210 + $0x1a8] sm:$0xff]
        %v2745 = vld [vmem:[%s210 + $0x1b0] sm:$0xff]
        %v2746 = vld [vmem:[%s210 + $0x1b8] sm:$0xff]
        %v2747 = vld [vmem:[%s210 + $0x1c0] sm:$0xff]
        %v2748 = vld [vmem:[%s210 + $0x1c8] sm:$0xff]
        %v2749 = vld [vmem:[%s210 + $0x1d0] sm:$0xff]
        %v2750 = vld [vmem:[%s210 + $0x1d8] sm:$0xff]
        %v2751 = vld [vmem:[%s210 + $0x1e0] sm:$0xff]
        %v2752 = vld [vmem:[%s210 + $0x1e8] sm:$0xff]
        %v2753 = vld [vmem:[%s210 + $0x1f0] sm:$0xff]
        %v2754 = vld [vmem:[%s210 + $0x1f8] sm:$0xff]
        %v2755 = vlaneseq
        %v2756 = vand.u32 %v2755, 127
        %vm2757 = vcmp.lt.s32.totalorder %v2756, 4
        %v2758 = vsel %vm2757, %v2691, -1e+30
        %v2759 = vsel %vm2757, %v2692, -1e+30
        %v2760 = vsel %vm2757, %v2693, -1e+30
        %v2761 = vsel %vm2757, %v2694, -1e+30
        %v2762 = vsel %vm2757, %v2695, -1e+30
        %v2763 = vsel %vm2757, %v2696, -1e+30
        %v2764 = vsel %vm2757, %v2697, -1e+30
        %v2765 = vsel %vm2757, %v2698, -1e+30
        %v2766 = vsel %vm2757, %v2699, -1e+30
        %v2767 = vsel %vm2757, %v2700, -1e+30
        %v2768 = vsel %vm2757, %v2701, -1e+30
        %v2769 = vsel %vm2757, %v2702, -1e+30
        %v2770 = vsel %vm2757, %v2703, -1e+30
        %v2771 = vsel %vm2757, %v2704, -1e+30
        %v2772 = vsel %vm2757, %v2705, -1e+30
        %v2773 = vsel %vm2757, %v2706, -1e+30
        %v2774 = vsel %vm2757, %v2707, -1e+30
        %v2775 = vsel %vm2757, %v2708, -1e+30
        %v2776 = vsel %vm2757, %v2709, -1e+30
        %v2777 = vsel %vm2757, %v2710, -1e+30
        %v2778 = vsel %vm2757, %v2711, -1e+30
        %v2779 = vsel %vm2757, %v2712, -1e+30
        %v2780 = vsel %vm2757, %v2713, -1e+30
        %v2781 = vsel %vm2757, %v2714, -1e+30
        %v2782 = vsel %vm2757, %v2715, -1e+30
        %v2783 = vsel %vm2757, %v2716, -1e+30
        %v2784 = vsel %vm2757, %v2717, -1e+30
        %v2785 = vsel %vm2757, %v2718, -1e+30
        %v2786 = vsel %vm2757, %v2719, -1e+30
        %v2787 = vsel %vm2757, %v2720, -1e+30
        %v2788 = vsel %vm2757, %v2721, -1e+30
        %v2789 = vsel %vm2757, %v2722, -1e+30
        %v2790 = vsel %vm2757, %v2723, -1e+30
        %v2791 = vsel %vm2757, %v2724, -1e+30
        %v2792 = vsel %vm2757, %v2725, -1e+30
        %v2793 = vsel %vm2757, %v2726, -1e+30
        %v2794 = vsel %vm2757, %v2727, -1e+30
        %v2795 = vsel %vm2757, %v2728, -1e+30
        %v2796 = vsel %vm2757, %v2729, -1e+30
        %v2797 = vsel %vm2757, %v2730, -1e+30
        %v2798 = vsel %vm2757, %v2731, -1e+30
        %v2799 = vsel %vm2757, %v2732, -1e+30
        %v2800 = vsel %vm2757, %v2733, -1e+30
        %v2801 = vsel %vm2757, %v2734, -1e+30
        %v2802 = vsel %vm2757, %v2735, -1e+30
        %v2803 = vsel %vm2757, %v2736, -1e+30
        %v2804 = vsel %vm2757, %v2737, -1e+30
        %v2805 = vsel %vm2757, %v2738, -1e+30
        %v2806 = vsel %vm2757, %v2739, -1e+30
        %v2807 = vsel %vm2757, %v2740, -1e+30
        %v2808 = vsel %vm2757, %v2741, -1e+30
        %v2809 = vsel %vm2757, %v2742, -1e+30
        %v2810 = vsel %vm2757, %v2743, -1e+30
        %v2811 = vsel %vm2757, %v2744, -1e+30
        %v2812 = vsel %vm2757, %v2745, -1e+30
        %v2813 = vsel %vm2757, %v2746, -1e+30
        %v2814 = vsel %vm2757, %v2747, -1e+30
        %v2815 = vsel %vm2757, %v2748, -1e+30
        %v2816 = vsel %vm2757, %v2749, -1e+30
        %v2817 = vsel %vm2757, %v2750, -1e+30
        %v2818 = vsel %vm2757, %v2751, -1e+30
        %v2819 = vsel %vm2757, %v2752, -1e+30
        %v2820 = vsel %vm2757, %v2753, -1e+30
        %v2821 = vsel %vm2757, %v2754, -1e+30
        %2822 = vmax.xlane.f32.xlu0 %v2758
        %v2823 = vpop.xlane.xlu0 %2822
        %2824 = vmax.xlane.f32.xlu0 %v2759
        %v2825 = vpop.xlane.xlu0 %2824
        %2826 = vmax.xlane.f32.xlu0 %v2760
        %v2827 = vpop.xlane.xlu0 %2826
        %2828 = vmax.xlane.f32.xlu0 %v2761
        %v2829 = vpop.xlane.xlu0 %2828
        %2830 = vmax.xlane.f32.xlu0 %v2762
        %v2831 = vpop.xlane.xlu0 %2830
        %2832 = vmax.xlane.f32.xlu0 %v2763
        %v2833 = vpop.xlane.xlu0 %2832
        %2834 = vmax.xlane.f32.xlu0 %v2764
        %v2835 = vpop.xlane.xlu0 %2834
        %2836 = vmax.xlane.f32.xlu0 %v2765
        %v2837 = vpop.xlane.xlu0 %2836
        %2838 = vmax.xlane.f32.xlu0 %v2766
        %v2839 = vpop.xlane.xlu0 %2838
        %2840 = vmax.xlane.f32.xlu0 %v2767
        %v2841 = vpop.xlane.xlu0 %2840
        %2842 = vmax.xlane.f32.xlu0 %v2768
        %v2843 = vpop.xlane.xlu0 %2842
        %2844 = vmax.xlane.f32.xlu0 %v2769
        %v2845 = vpop.xlane.xlu0 %2844
        %2846 = vmax.xlane.f32.xlu0 %v2770
        %v2847 = vpop.xlane.xlu0 %2846
        %2848 = vmax.xlane.f32.xlu0 %v2771
        %v2849 = vpop.xlane.xlu0 %2848
        %2850 = vmax.xlane.f32.xlu0 %v2772
        %v2851 = vpop.xlane.xlu0 %2850
        %2852 = vmax.xlane.f32.xlu0 %v2773
        %v2853 = vpop.xlane.xlu0 %2852
        %2854 = vmax.xlane.f32.xlu0 %v2774
        %v2855 = vpop.xlane.xlu0 %2854
        %2856 = vmax.xlane.f32.xlu0 %v2775
        %v2857 = vpop.xlane.xlu0 %2856
        %2858 = vmax.xlane.f32.xlu0 %v2776
        %v2859 = vpop.xlane.xlu0 %2858
        %2860 = vmax.xlane.f32.xlu0 %v2777
        %v2861 = vpop.xlane.xlu0 %2860
        %2862 = vmax.xlane.f32.xlu0 %v2778
        %v2863 = vpop.xlane.xlu0 %2862
        %2864 = vmax.xlane.f32.xlu0 %v2779
        %v2865 = vpop.xlane.xlu0 %2864
        %2866 = vmax.xlane.f32.xlu0 %v2780
        %v2867 = vpop.xlane.xlu0 %2866
        %2868 = vmax.xlane.f32.xlu0 %v2781
        %v2869 = vpop.xlane.xlu0 %2868
        %2870 = vmax.xlane.f32.xlu0 %v2782
        %v2871 = vpop.xlane.xlu0 %2870
        %2872 = vmax.xlane.f32.xlu0 %v2783
        %v2873 = vpop.xlane.xlu0 %2872
        %2874 = vmax.xlane.f32.xlu0 %v2784
        %v2875 = vpop.xlane.xlu0 %2874
        %2876 = vmax.xlane.f32.xlu0 %v2785
        %v2877 = vpop.xlane.xlu0 %2876
        %2878 = vmax.xlane.f32.xlu0 %v2786
        %v2879 = vpop.xlane.xlu0 %2878
        %2880 = vmax.xlane.f32.xlu0 %v2787
        %v2881 = vpop.xlane.xlu0 %2880
        %2882 = vmax.xlane.f32.xlu0 %v2788
        %v2883 = vpop.xlane.xlu0 %2882
        %2884 = vmax.xlane.f32.xlu0 %v2789
        %v2885 = vpop.xlane.xlu0 %2884
        %2886 = vmax.xlane.f32.xlu0 %v2790
        %v2887 = vpop.xlane.xlu0 %2886
        %2888 = vmax.xlane.f32.xlu0 %v2791
        %v2889 = vpop.xlane.xlu0 %2888
        %2890 = vmax.xlane.f32.xlu0 %v2792
        %v2891 = vpop.xlane.xlu0 %2890
        %2892 = vmax.xlane.f32.xlu0 %v2793
        %v2893 = vpop.xlane.xlu0 %2892
        %2894 = vmax.xlane.f32.xlu0 %v2794
        %v2895 = vpop.xlane.xlu0 %2894
        %2896 = vmax.xlane.f32.xlu0 %v2795
        %v2897 = vpop.xlane.xlu0 %2896
        %2898 = vmax.xlane.f32.xlu0 %v2796
        %v2899 = vpop.xlane.xlu0 %2898
        %2900 = vmax.xlane.f32.xlu0 %v2797
        %v2901 = vpop.xlane.xlu0 %2900
        %2902 = vmax.xlane.f32.xlu0 %v2798
        %v2903 = vpop.xlane.xlu0 %2902
        %2904 = vmax.xlane.f32.xlu0 %v2799
        %v2905 = vpop.xlane.xlu0 %2904
        %2906 = vmax.xlane.f32.xlu0 %v2800
        %v2907 = vpop.xlane.xlu0 %2906
        %2908 = vmax.xlane.f32.xlu0 %v2801
        %v2909 = vpop.xlane.xlu0 %2908
        %2910 = vmax.xlane.f32.xlu0 %v2802
        %v2911 = vpop.xlane.xlu0 %2910
        %2912 = vmax.xlane.f32.xlu0 %v2803
        %v2913 = vpop.xlane.xlu0 %2912
        %2914 = vmax.xlane.f32.xlu0 %v2804
        %v2915 = vpop.xlane.xlu0 %2914
        %2916 = vmax.xlane.f32.xlu0 %v2805
        %v2917 = vpop.xlane.xlu0 %2916
        %2918 = vmax.xlane.f32.xlu0 %v2806
        %v2919 = vpop.xlane.xlu0 %2918
        %2920 = vmax.xlane.f32.xlu0 %v2807
        %v2921 = vpop.xlane.xlu0 %2920
        %2922 = vmax.xlane.f32.xlu0 %v2808
        %v2923 = vpop.xlane.xlu0 %2922
        %2924 = vmax.xlane.f32.xlu0 %v2809
        %v2925 = vpop.xlane.xlu0 %2924
        %2926 = vmax.xlane.f32.xlu0 %v2810
        %v2927 = vpop.xlane.xlu0 %2926
        %2928 = vmax.xlane.f32.xlu0 %v2811
        %v2929 = vpop.xlane.xlu0 %2928
        %2930 = vmax.xlane.f32.xlu0 %v2812
        %v2931 = vpop.xlane.xlu0 %2930
        %2932 = vmax.xlane.f32.xlu0 %v2813
        %v2933 = vpop.xlane.xlu0 %2932
        %2934 = vmax.xlane.f32.xlu0 %v2814
        %v2935 = vpop.xlane.xlu0 %2934
        %2936 = vmax.xlane.f32.xlu0 %v2815
        %v2937 = vpop.xlane.xlu0 %2936
        %2938 = vmax.xlane.f32.xlu0 %v2816
        %v2939 = vpop.xlane.xlu0 %2938
        %2940 = vmax.xlane.f32.xlu0 %v2817
        %v2941 = vpop.xlane.xlu0 %2940
        %2942 = vmax.xlane.f32.xlu0 %v2818
        %v2943 = vpop.xlane.xlu0 %2942
        %2944 = vmax.xlane.f32.xlu0 %v2819
        %v2945 = vpop.xlane.xlu0 %2944
        %2946 = vmax.xlane.f32.xlu0 %v2820
        %v2947 = vpop.xlane.xlu0 %2946
        %2948 = vmax.xlane.f32.xlu0 %v2821
        %v2949 = vpop.xlane.xlu0 %2948
        %v2950 = vsub.f32 %v2758, %v2823
        %v2951 = vsub.f32 %v2759, %v2825
        %v2952 = vsub.f32 %v2760, %v2827
        %v2953 = vsub.f32 %v2761, %v2829
        %v2954 = vsub.f32 %v2762, %v2831
        %v2955 = vsub.f32 %v2763, %v2833
        %v2956 = vsub.f32 %v2764, %v2835
        %v2957 = vsub.f32 %v2765, %v2837
        %v2958 = vsub.f32 %v2766, %v2839
        %v2959 = vsub.f32 %v2767, %v2841
        %v2960 = vsub.f32 %v2768, %v2843
        %v2961 = vsub.f32 %v2769, %v2845
        %v2962 = vsub.f32 %v2770, %v2847
        %v2963 = vsub.f32 %v2771, %v2849
        %v2964 = vsub.f32 %v2772, %v2851
        %v2965 = vsub.f32 %v2773, %v2853
        %v2966 = vsub.f32 %v2774, %v2855
        %v2967 = vsub.f32 %v2775, %v2857
        %v2968 = vsub.f32 %v2776, %v2859
        %v2969 = vsub.f32 %v2777, %v2861
        %v2970 = vsub.f32 %v2778, %v2863
        %v2971 = vsub.f32 %v2779, %v2865
        %v2972 = vsub.f32 %v2780, %v2867
        %v2973 = vsub.f32 %v2781, %v2869
        %v2974 = vsub.f32 %v2782, %v2871
        %v2975 = vsub.f32 %v2783, %v2873
        %v2976 = vsub.f32 %v2784, %v2875
        %v2977 = vsub.f32 %v2785, %v2877
        %v2978 = vsub.f32 %v2786, %v2879
        %v2979 = vsub.f32 %v2787, %v2881
        %v2980 = vsub.f32 %v2788, %v2883
        %v2981 = vsub.f32 %v2789, %v2885
        %v2982 = vsub.f32 %v2790, %v2887
        %v2983 = vsub.f32 %v2791, %v2889
        %v2984 = vsub.f32 %v2792, %v2891
        %v2985 = vsub.f32 %v2793, %v2893
        %v2986 = vsub.f32 %v2794, %v2895
        %v2987 = vsub.f32 %v2795, %v2897
        %v2988 = vsub.f32 %v2796, %v2899
        %v2989 = vsub.f32 %v2797, %v2901
        %v2990 = vsub.f32 %v2798, %v2903
        %v2991 = vsub.f32 %v2799, %v2905
        %v2992 = vsub.f32 %v2800, %v2907
        %v2993 = vsub.f32 %v2801, %v2909
        %v2994 = vsub.f32 %v2802, %v2911
        %v2995 = vsub.f32 %v2803, %v2913
        %v2996 = vsub.f32 %v2804, %v2915
        %v2997 = vsub.f32 %v2805, %v2917
        %v2998 = vsub.f32 %v2806, %v2919
        %v2999 = vsub.f32 %v2807, %v2921
        %v3000 = vsub.f32 %v2808, %v2923
        %v3001 = vsub.f32 %v2809, %v2925
        %v3002 = vsub.f32 %v2810, %v2927
        %v3003 = vsub.f32 %v2811, %v2929
        %v3004 = vsub.f32 %v2812, %v2931
        %v3005 = vsub.f32 %v2813, %v2933
        %v3006 = vsub.f32 %v2814, %v2935
        %v3007 = vsub.f32 %v2815, %v2937
        %v3008 = vsub.f32 %v2816, %v2939
        %v3009 = vsub.f32 %v2817, %v2941
        %v3010 = vsub.f32 %v2818, %v2943
        %v3011 = vsub.f32 %v2819, %v2945
        %v3012 = vsub.f32 %v2820, %v2947
        %v3013 = vsub.f32 %v2821, %v2949
        %v3014 = vmul.f32 %v2950, 1.442695
        %v3015 = vpow.pop %v3014
        %v3016 = vmul.f32 %v2951, 1.442695
        %v3017 = vpow.pop %v3016
        %v3018 = vmul.f32 %v2952, 1.442695
        %v3019 = vpow.pop %v3018
        %v3020 = vmul.f32 %v2953, 1.442695
        %v3021 = vpow.pop %v3020
        %v3022 = vmul.f32 %v2954, 1.442695
        %v3023 = vpow.pop %v3022
        %v3024 = vmul.f32 %v2955, 1.442695
        %v3025 = vpow.pop %v3024
        %v3026 = vmul.f32 %v2956, 1.442695
        %v3027 = vpow.pop %v3026
        %v3028 = vmul.f32 %v2957, 1.442695
        %v3029 = vpow.pop %v3028
        %v3030 = vmul.f32 %v2958, 1.442695
        %v3031 = vpow.pop %v3030
        %v3032 = vmul.f32 %v2959, 1.442695
        %v3033 = vpow.pop %v3032
        %v3034 = vmul.f32 %v2960, 1.442695
        %v3035 = vpow.pop %v3034
        %v3036 = vmul.f32 %v2961, 1.442695
        %v3037 = vpow.pop %v3036
        %v3038 = vmul.f32 %v2962, 1.442695
        %v3039 = vpow.pop %v3038
        %v3040 = vmul.f32 %v2963, 1.442695
        %v3041 = vpow.pop %v3040
        %v3042 = vmul.f32 %v2964, 1.442695
        %v3043 = vpow.pop %v3042
        %v3044 = vmul.f32 %v2965, 1.442695
        %v3045 = vpow.pop %v3044
        %v3046 = vmul.f32 %v2966, 1.442695
        %v3047 = vpow.pop %v3046
        %v3048 = vmul.f32 %v2967, 1.442695
        %v3049 = vpow.pop %v3048
        %v3050 = vmul.f32 %v2968, 1.442695
        %v3051 = vpow.pop %v3050
        %v3052 = vmul.f32 %v2969, 1.442695
        %v3053 = vpow.pop %v3052
        %v3054 = vmul.f32 %v2970, 1.442695
        %v3055 = vpow.pop %v3054
        %v3056 = vmul.f32 %v2971, 1.442695
        %v3057 = vpow.pop %v3056
        %v3058 = vmul.f32 %v2972, 1.442695
        %v3059 = vpow.pop %v3058
        %v3060 = vmul.f32 %v2973, 1.442695
        %v3061 = vpow.pop %v3060
        %v3062 = vmul.f32 %v2974, 1.442695
        %v3063 = vpow.pop %v3062
        %v3064 = vmul.f32 %v2975, 1.442695
        %v3065 = vpow.pop %v3064
        %v3066 = vmul.f32 %v2976, 1.442695
        %v3067 = vpow.pop %v3066
        %v3068 = vmul.f32 %v2977, 1.442695
        %v3069 = vpow.pop %v3068
        %v3070 = vmul.f32 %v2978, 1.442695
        %v3071 = vpow.pop %v3070
        %v3072 = vmul.f32 %v2979, 1.442695
        %v3073 = vpow.pop %v3072
        %v3074 = vmul.f32 %v2980, 1.442695
        %v3075 = vpow.pop %v3074
        %v3076 = vmul.f32 %v2981, 1.442695
        %v3077 = vpow.pop %v3076
        %v3078 = vmul.f32 %v2982, 1.442695
        %v3079 = vpow.pop %v3078
        %v3080 = vmul.f32 %v2983, 1.442695
        %v3081 = vpow.pop %v3080
        %v3082 = vmul.f32 %v2984, 1.442695
        %v3083 = vpow.pop %v3082
        %v3084 = vmul.f32 %v2985, 1.442695
        %v3085 = vpow.pop %v3084
        %v3086 = vmul.f32 %v2986, 1.442695
        %v3087 = vpow.pop %v3086
        %v3088 = vmul.f32 %v2987, 1.442695
        %v3089 = vpow.pop %v3088
        %v3090 = vmul.f32 %v2988, 1.442695
        %v3091 = vpow.pop %v3090
        %v3092 = vmul.f32 %v2989, 1.442695
        %v3093 = vpow.pop %v3092
        %v3094 = vmul.f32 %v2990, 1.442695
        %v3095 = vpow.pop %v3094
        %v3096 = vmul.f32 %v2991, 1.442695
        %v3097 = vpow.pop %v3096
        %v3098 = vmul.f32 %v2992, 1.442695
        %v3099 = vpow.pop %v3098
        %v3100 = vmul.f32 %v2993, 1.442695
        %v3101 = vpow.pop %v3100
        %v3102 = vmul.f32 %v2994, 1.442695
        %v3103 = vpow.pop %v3102
        %v3104 = vmul.f32 %v2995, 1.442695
        %v3105 = vpow.pop %v3104
        %v3106 = vmul.f32 %v2996, 1.442695
        %v3107 = vpow.pop %v3106
        %v3108 = vmul.f32 %v2997, 1.442695
        %v3109 = vpow.pop %v3108
        %v3110 = vmul.f32 %v2998, 1.442695
        %v3111 = vpow.pop %v3110
        %v3112 = vmul.f32 %v2999, 1.442695
        %v3113 = vpow.pop %v3112
        %v3114 = vmul.f32 %v3000, 1.442695
        %v3115 = vpow.pop %v3114
        %v3116 = vmul.f32 %v3001, 1.442695
        %v3117 = vpow.pop %v3116
        %v3118 = vmul.f32 %v3002, 1.442695
        %v3119 = vpow.pop %v3118
        %v3120 = vmul.f32 %v3003, 1.442695
        %v3121 = vpow.pop %v3120
        %v3122 = vmul.f32 %v3004, 1.442695
        %v3123 = vpow.pop %v3122
        %v3124 = vmul.f32 %v3005, 1.442695
        %v3125 = vpow.pop %v3124
        %v3126 = vmul.f32 %v3006, 1.442695
        %v3127 = vpow.pop %v3126
        %v3128 = vmul.f32 %v3007, 1.442695
        %v3129 = vpow.pop %v3128
        %v3130 = vmul.f32 %v3008, 1.442695
        %v3131 = vpow.pop %v3130
        %v3132 = vmul.f32 %v3009, 1.442695
        %v3133 = vpow.pop %v3132
        %v3134 = vmul.f32 %v3010, 1.442695
        %v3135 = vpow.pop %v3134
        %v3136 = vmul.f32 %v3011, 1.442695
        %v3137 = vpow.pop %v3136
        %v3138 = vmul.f32 %v3012, 1.442695
        %v3139 = vpow.pop %v3138
        %v3140 = vmul.f32 %v3013, 1.442695
        %v3141 = vpow.pop %v3140
        %3142 = vadd.xlane.f32.xlu0 %v3015
        %v3143 = vpop.xlane.xlu0 %3142
        %3144 = vadd.xlane.f32.xlu0 %v3017
        %v3145 = vpop.xlane.xlu0 %3144
        %3146 = vadd.xlane.f32.xlu0 %v3019
        %v3147 = vpop.xlane.xlu0 %3146
        %3148 = vadd.xlane.f32.xlu0 %v3021
        %v3149 = vpop.xlane.xlu0 %3148
        %3150 = vadd.xlane.f32.xlu0 %v3023
        %v3151 = vpop.xlane.xlu0 %3150
        %3152 = vadd.xlane.f32.xlu0 %v3025
        %v3153 = vpop.xlane.xlu0 %3152
        %3154 = vadd.xlane.f32.xlu0 %v3027
        %v3155 = vpop.xlane.xlu0 %3154
        %3156 = vadd.xlane.f32.xlu0 %v3029
        %v3157 = vpop.xlane.xlu0 %3156
        %3158 = vadd.xlane.f32.xlu0 %v3031
        %v3159 = vpop.xlane.xlu0 %3158
        %3160 = vadd.xlane.f32.xlu0 %v3033
        %v3161 = vpop.xlane.xlu0 %3160
        %3162 = vadd.xlane.f32.xlu0 %v3035
        %v3163 = vpop.xlane.xlu0 %3162
        %3164 = vadd.xlane.f32.xlu0 %v3037
        %v3165 = vpop.xlane.xlu0 %3164
        %3166 = vadd.xlane.f32.xlu0 %v3039
        %v3167 = vpop.xlane.xlu0 %3166
        %3168 = vadd.xlane.f32.xlu0 %v3041
        %v3169 = vpop.xlane.xlu0 %3168
        %3170 = vadd.xlane.f32.xlu0 %v3043
        %v3171 = vpop.xlane.xlu0 %3170
        %3172 = vadd.xlane.f32.xlu0 %v3045
        %v3173 = vpop.xlane.xlu0 %3172
        %3174 = vadd.xlane.f32.xlu0 %v3047
        %v3175 = vpop.xlane.xlu0 %3174
        %3176 = vadd.xlane.f32.xlu0 %v3049
        %v3177 = vpop.xlane.xlu0 %3176
        %3178 = vadd.xlane.f32.xlu0 %v3051
        %v3179 = vpop.xlane.xlu0 %3178
        %3180 = vadd.xlane.f32.xlu0 %v3053
        %v3181 = vpop.xlane.xlu0 %3180
        %3182 = vadd.xlane.f32.xlu0 %v3055
        %v3183 = vpop.xlane.xlu0 %3182
        %3184 = vadd.xlane.f32.xlu0 %v3057
        %v3185 = vpop.xlane.xlu0 %3184
        %3186 = vadd.xlane.f32.xlu0 %v3059
        %v3187 = vpop.xlane.xlu0 %3186
        %3188 = vadd.xlane.f32.xlu0 %v3061
        %v3189 = vpop.xlane.xlu0 %3188
        %3190 = vadd.xlane.f32.xlu0 %v3063
        %v3191 = vpop.xlane.xlu0 %3190
        %3192 = vadd.xlane.f32.xlu0 %v3065
        %v3193 = vpop.xlane.xlu0 %3192
        %3194 = vadd.xlane.f32.xlu0 %v3067
        %v3195 = vpop.xlane.xlu0 %3194
        %3196 = vadd.xlane.f32.xlu0 %v3069
        %v3197 = vpop.xlane.xlu0 %3196
        %3198 = vadd.xlane.f32.xlu0 %v3071
        %v3199 = vpop.xlane.xlu0 %3198
        %3200 = vadd.xlane.f32.xlu0 %v3073
        %v3201 = vpop.xlane.xlu0 %3200
        %3202 = vadd.xlane.f32.xlu0 %v3075
        %v3203 = vpop.xlane.xlu0 %3202
        %3204 = vadd.xlane.f32.xlu0 %v3077
        %v3205 = vpop.xlane.xlu0 %3204
        %3206 = vadd.xlane.f32.xlu0 %v3079
        %v3207 = vpop.xlane.xlu0 %3206
        %3208 = vadd.xlane.f32.xlu0 %v3081
        %v3209 = vpop.xlane.xlu0 %3208
        %3210 = vadd.xlane.f32.xlu0 %v3083
        %v3211 = vpop.xlane.xlu0 %3210
        %3212 = vadd.xlane.f32.xlu0 %v3085
        %v3213 = vpop.xlane.xlu0 %3212
        %3214 = vadd.xlane.f32.xlu0 %v3087
        %v3215 = vpop.xlane.xlu0 %3214
        %3216 = vadd.xlane.f32.xlu0 %v3089
        %v3217 = vpop.xlane.xlu0 %3216
        %3218 = vadd.xlane.f32.xlu0 %v3091
        %v3219 = vpop.xlane.xlu0 %3218
        %3220 = vadd.xlane.f32.xlu0 %v3093
        %v3221 = vpop.xlane.xlu0 %3220
        %3222 = vadd.xlane.f32.xlu0 %v3095
        %v3223 = vpop.xlane.xlu0 %3222
        %3224 = vadd.xlane.f32.xlu0 %v3097
        %v3225 = vpop.xlane.xlu0 %3224
        %3226 = vadd.xlane.f32.xlu0 %v3099
        %v3227 = vpop.xlane.xlu0 %3226
        %3228 = vadd.xlane.f32.xlu0 %v3101
        %v3229 = vpop.xlane.xlu0 %3228
        %3230 = vadd.xlane.f32.xlu0 %v3103
        %v3231 = vpop.xlane.xlu0 %3230
        %3232 = vadd.xlane.f32.xlu0 %v3105
        %v3233 = vpop.xlane.xlu0 %3232
        %3234 = vadd.xlane.f32.xlu0 %v3107
        %v3235 = vpop.xlane.xlu0 %3234
        %3236 = vadd.xlane.f32.xlu0 %v3109
        %v3237 = vpop.xlane.xlu0 %3236
        %3238 = vadd.xlane.f32.xlu0 %v3111
        %v3239 = vpop.xlane.xlu0 %3238
        %3240 = vadd.xlane.f32.xlu0 %v3113
        %v3241 = vpop.xlane.xlu0 %3240
        %3242 = vadd.xlane.f32.xlu0 %v3115
        %v3243 = vpop.xlane.xlu0 %3242
        %3244 = vadd.xlane.f32.xlu0 %v3117
        %v3245 = vpop.xlane.xlu0 %3244
        %3246 = vadd.xlane.f32.xlu0 %v3119
        %v3247 = vpop.xlane.xlu0 %3246
        %3248 = vadd.xlane.f32.xlu0 %v3121
        %v3249 = vpop.xlane.xlu0 %3248
        %3250 = vadd.xlane.f32.xlu0 %v3123
        %v3251 = vpop.xlane.xlu0 %3250
        %3252 = vadd.xlane.f32.xlu0 %v3125
        %v3253 = vpop.xlane.xlu0 %3252
        %3254 = vadd.xlane.f32.xlu0 %v3127
        %v3255 = vpop.xlane.xlu0 %3254
        %3256 = vadd.xlane.f32.xlu0 %v3129
        %v3257 = vpop.xlane.xlu0 %3256
        %3258 = vadd.xlane.f32.xlu0 %v3131
        %v3259 = vpop.xlane.xlu0 %3258
        %3260 = vadd.xlane.f32.xlu0 %v3133
        %v3261 = vpop.xlane.xlu0 %3260
        %3262 = vadd.xlane.f32.xlu0 %v3135
        %v3263 = vpop.xlane.xlu0 %3262
        %3264 = vadd.xlane.f32.xlu0 %v3137
        %v3265 = vpop.xlane.xlu0 %3264
        %3266 = vadd.xlane.f32.xlu0 %v3139
        %v3267 = vpop.xlane.xlu0 %3266
        %3268 = vadd.xlane.f32.xlu0 %v3141
        %v3269 = vpop.xlane.xlu0 %3268
        %v3270 = vlog2.pop %v3143
        %v3271 = vmul.f32 %v3270, 0.6931472
        %v3272 = vlog2.pop %v3145
        %v3273 = vmul.f32 %v3272, 0.6931472
        %v3274 = vlog2.pop %v3147
        %v3275 = vmul.f32 %v3274, 0.6931472
        %v3276 = vlog2.pop %v3149
        %v3277 = vmul.f32 %v3276, 0.6931472
        %v3278 = vlog2.pop %v3151
        %v3279 = vmul.f32 %v3278, 0.6931472
        %v3280 = vlog2.pop %v3153
        %v3281 = vmul.f32 %v3280, 0.6931472
        %v3282 = vlog2.pop %v3155
        %v3283 = vmul.f32 %v3282, 0.6931472
        %v3284 = vlog2.pop %v3157
        %v3285 = vmul.f32 %v3284, 0.6931472
        %v3286 = vlog2.pop %v3159
        %v3287 = vmul.f32 %v3286, 0.6931472
        %v3288 = vlog2.pop %v3161
        %v3289 = vmul.f32 %v3288, 0.6931472
        %v3290 = vlog2.pop %v3163
        %v3291 = vmul.f32 %v3290, 0.6931472
        %v3292 = vlog2.pop %v3165
        %v3293 = vmul.f32 %v3292, 0.6931472
        %v3294 = vlog2.pop %v3167
        %v3295 = vmul.f32 %v3294, 0.6931472
        %v3296 = vlog2.pop %v3169
        %v3297 = vmul.f32 %v3296, 0.6931472
        %v3298 = vlog2.pop %v3171
        %v3299 = vmul.f32 %v3298, 0.6931472
        %v3300 = vlog2.pop %v3173
        %v3301 = vmul.f32 %v3300, 0.6931472
        %v3302 = vlog2.pop %v3175
        %v3303 = vmul.f32 %v3302, 0.6931472
        %v3304 = vlog2.pop %v3177
        %v3305 = vmul.f32 %v3304, 0.6931472
        %v3306 = vlog2.pop %v3179
        %v3307 = vmul.f32 %v3306, 0.6931472
        %v3308 = vlog2.pop %v3181
        %v3309 = vmul.f32 %v3308, 0.6931472
        %v3310 = vlog2.pop %v3183
        %v3311 = vmul.f32 %v3310, 0.6931472
        %v3312 = vlog2.pop %v3185
        %v3313 = vmul.f32 %v3312, 0.6931472
        %v3314 = vlog2.pop %v3187
        %v3315 = vmul.f32 %v3314, 0.6931472
        %v3316 = vlog2.pop %v3189
        %v3317 = vmul.f32 %v3316, 0.6931472
        %v3318 = vlog2.pop %v3191
        %v3319 = vmul.f32 %v3318, 0.6931472
        %v3320 = vlog2.pop %v3193
        %v3321 = vmul.f32 %v3320, 0.6931472
        %v3322 = vlog2.pop %v3195
        %v3323 = vmul.f32 %v3322, 0.6931472
        %v3324 = vlog2.pop %v3197
        %v3325 = vmul.f32 %v3324, 0.6931472
        %v3326 = vlog2.pop %v3199
        %v3327 = vmul.f32 %v3326, 0.6931472
        %v3328 = vlog2.pop %v3201
        %v3329 = vmul.f32 %v3328, 0.6931472
        %v3330 = vlog2.pop %v3203
        %v3331 = vmul.f32 %v3330, 0.6931472
        %v3332 = vlog2.pop %v3205
        %v3333 = vmul.f32 %v3332, 0.6931472
        %v3334 = vlog2.pop %v3207
        %v3335 = vmul.f32 %v3334, 0.6931472
        %v3336 = vlog2.pop %v3209
        %v3337 = vmul.f32 %v3336, 0.6931472
        %v3338 = vlog2.pop %v3211
        %v3339 = vmul.f32 %v3338, 0.6931472
        %v3340 = vlog2.pop %v3213
        %v3341 = vmul.f32 %v3340, 0.6931472
        %v3342 = vlog2.pop %v3215
        %v3343 = vmul.f32 %v3342, 0.6931472
        %v3344 = vlog2.pop %v3217
        %v3345 = vmul.f32 %v3344, 0.6931472
        %v3346 = vlog2.pop %v3219
        %v3347 = vmul.f32 %v3346, 0.6931472
        %v3348 = vlog2.pop %v3221
        %v3349 = vmul.f32 %v3348, 0.6931472
        %v3350 = vlog2.pop %v3223
        %v3351 = vmul.f32 %v3350, 0.6931472
        %v3352 = vlog2.pop %v3225
        %v3353 = vmul.f32 %v3352, 0.6931472
        %v3354 = vlog2.pop %v3227
        %v3355 = vmul.f32 %v3354, 0.6931472
        %v3356 = vlog2.pop %v3229
        %v3357 = vmul.f32 %v3356, 0.6931472
        %v3358 = vlog2.pop %v3231
        %v3359 = vmul.f32 %v3358, 0.6931472
        %v3360 = vlog2.pop %v3233
        %v3361 = vmul.f32 %v3360, 0.6931472
        %v3362 = vlog2.pop %v3235
        %v3363 = vmul.f32 %v3362, 0.6931472
        %v3364 = vlog2.pop %v3237
        %v3365 = vmul.f32 %v3364, 0.6931472
        %v3366 = vlog2.pop %v3239
        %v3367 = vmul.f32 %v3366, 0.6931472
        %v3368 = vlog2.pop %v3241
        %v3369 = vmul.f32 %v3368, 0.6931472
        %v3370 = vlog2.pop %v3243
        %v3371 = vmul.f32 %v3370, 0.6931472
        %v3372 = vlog2.pop %v3245
        %v3373 = vmul.f32 %v3372, 0.6931472
        %v3374 = vlog2.pop %v3247
        %v3375 = vmul.f32 %v3374, 0.6931472
        %v3376 = vlog2.pop %v3249
        %v3377 = vmul.f32 %v3376, 0.6931472
        %v3378 = vlog2.pop %v3251
        %v3379 = vmul.f32 %v3378, 0.6931472
        %v3380 = vlog2.pop %v3253
        %v3381 = vmul.f32 %v3380, 0.6931472
        %v3382 = vlog2.pop %v3255
        %v3383 = vmul.f32 %v3382, 0.6931472
        %v3384 = vlog2.pop %v3257
        %v3385 = vmul.f32 %v3384, 0.6931472
        %v3386 = vlog2.pop %v3259
        %v3387 = vmul.f32 %v3386, 0.6931472
        %v3388 = vlog2.pop %v3261
        %v3389 = vmul.f32 %v3388, 0.6931472
        %v3390 = vlog2.pop %v3263
        %v3391 = vmul.f32 %v3390, 0.6931472
        %v3392 = vlog2.pop %v3265
        %v3393 = vmul.f32 %v3392, 0.6931472
        %v3394 = vlog2.pop %v3267
        %v3395 = vmul.f32 %v3394, 0.6931472
        %v3396 = vlog2.pop %v3269
        %v3397 = vmul.f32 %v3396, 0.6931472
        %v3398 = vsub.f32 %v2950, %v3271
        %v3399 = vsub.f32 %v2951, %v3273
        %v3400 = vsub.f32 %v2952, %v3275
        %v3401 = vsub.f32 %v2953, %v3277
        %v3402 = vsub.f32 %v2954, %v3279
        %v3403 = vsub.f32 %v2955, %v3281
        %v3404 = vsub.f32 %v2956, %v3283
        %v3405 = vsub.f32 %v2957, %v3285
        %v3406 = vsub.f32 %v2958, %v3287
        %v3407 = vsub.f32 %v2959, %v3289
        %v3408 = vsub.f32 %v2960, %v3291
        %v3409 = vsub.f32 %v2961, %v3293
        %v3410 = vsub.f32 %v2962, %v3295
        %v3411 = vsub.f32 %v2963, %v3297
        %v3412 = vsub.f32 %v2964, %v3299
        %v3413 = vsub.f32 %v2965, %v3301
        %v3414 = vsub.f32 %v2966, %v3303
        %v3415 = vsub.f32 %v2967, %v3305
        %v3416 = vsub.f32 %v2968, %v3307
        %v3417 = vsub.f32 %v2969, %v3309
        %v3418 = vsub.f32 %v2970, %v3311
        %v3419 = vsub.f32 %v2971, %v3313
        %v3420 = vsub.f32 %v2972, %v3315
        %v3421 = vsub.f32 %v2973, %v3317
        %v3422 = vsub.f32 %v2974, %v3319
        %v3423 = vsub.f32 %v2975, %v3321
        %v3424 = vsub.f32 %v2976, %v3323
        %v3425 = vsub.f32 %v2977, %v3325
        %v3426 = vsub.f32 %v2978, %v3327
        %v3427 = vsub.f32 %v2979, %v3329
        %v3428 = vsub.f32 %v2980, %v3331
        %v3429 = vsub.f32 %v2981, %v3333
        %v3430 = vsub.f32 %v2982, %v3335
        %v3431 = vsub.f32 %v2983, %v3337
        %v3432 = vsub.f32 %v2984, %v3339
        %v3433 = vsub.f32 %v2985, %v3341
        %v3434 = vsub.f32 %v2986, %v3343
        %v3435 = vsub.f32 %v2987, %v3345
        %v3436 = vsub.f32 %v2988, %v3347
        %v3437 = vsub.f32 %v2989, %v3349
        %v3438 = vsub.f32 %v2990, %v3351
        %v3439 = vsub.f32 %v2991, %v3353
        %v3440 = vsub.f32 %v2992, %v3355
        %v3441 = vsub.f32 %v2993, %v3357
        %v3442 = vsub.f32 %v2994, %v3359
        %v3443 = vsub.f32 %v2995, %v3361
        %v3444 = vsub.f32 %v2996, %v3363
        %v3445 = vsub.f32 %v2997, %v3365
        %v3446 = vsub.f32 %v2998, %v3367
        %v3447 = vsub.f32 %v2999, %v3369
        %v3448 = vsub.f32 %v3000, %v3371
        %v3449 = vsub.f32 %v3001, %v3373
        %v3450 = vsub.f32 %v3002, %v3375
        %v3451 = vsub.f32 %v3003, %v3377
        %v3452 = vsub.f32 %v3004, %v3379
        %v3453 = vsub.f32 %v3005, %v3381
        %v3454 = vsub.f32 %v3006, %v3383
        %v3455 = vsub.f32 %v3007, %v3385
        %v3456 = vsub.f32 %v3008, %v3387
        %v3457 = vsub.f32 %v3009, %v3389
        %v3458 = vsub.f32 %v3010, %v3391
        %v3459 = vsub.f32 %v3011, %v3393
        %v3460 = vsub.f32 %v3012, %v3395
        %v3461 = vsub.f32 %v3013, %v3397
        %3462 = vst [vmem:[%s210] sm:$0xff] %v3398
        %3463 = vst [vmem:[%s210 + $0x8] sm:$0xff] %v3399
        %3464 = vst [vmem:[%s210 + $0x10] sm:$0xff] %v3400
        %3465 = vst [vmem:[%s210 + $0x18] sm:$0xff] %v3401
        %3466 = vst [vmem:[%s210 + $0x20] sm:$0xff] %v3402
        %3467 = vst [vmem:[%s210 + $0x28] sm:$0xff] %v3403
        %3468 = vst [vmem:[%s210 + $0x30] sm:$0xff] %v3404
        %3469 = vst [vmem:[%s210 + $0x38] sm:$0xff] %v3405
        %3470 = vst [vmem:[%s210 + $0x40] sm:$0xff] %v3406
        %3471 = vst [vmem:[%s210 + $0x48] sm:$0xff] %v3407
        %3472 = vst [vmem:[%s210 + $0x50] sm:$0xff] %v3408
        %3473 = vst [vmem:[%s210 + $0x58] sm:$0xff] %v3409
        %3474 = vst [vmem:[%s210 + $0x60] sm:$0xff] %v3410
        %3475 = vst [vmem:[%s210 + $0x68] sm:$0xff] %v3411
        %3476 = vst [vmem:[%s210 + $0x70] sm:$0xff] %v3412
        %3477 = vst [vmem:[%s210 + $0x78] sm:$0xff] %v3413
        %3478 = vst [vmem:[%s210 + $0x80] sm:$0xff] %v3414
        %3479 = vst [vmem:[%s210 + $0x88] sm:$0xff] %v3415
        %3480 = vst [vmem:[%s210 + $0x90] sm:$0xff] %v3416
        %3481 = vst [vmem:[%s210 + $0x98] sm:$0xff] %v3417
        %3482 = vst [vmem:[%s210 + $0xa0] sm:$0xff] %v3418
        %3483 = vst [vmem:[%s210 + $0xa8] sm:$0xff] %v3419
        %3484 = vst [vmem:[%s210 + $0xb0] sm:$0xff] %v3420
        %3485 = vst [vmem:[%s210 + $0xb8] sm:$0xff] %v3421
        %3486 = vst [vmem:[%s210 + $0xc0] sm:$0xff] %v3422
        %3487 = vst [vmem:[%s210 + $0xc8] sm:$0xff] %v3423
        %3488 = vst [vmem:[%s210 + $0xd0] sm:$0xff] %v3424
        %3489 = vst [vmem:[%s210 + $0xd8] sm:$0xff] %v3425
        %3490 = vst [vmem:[%s210 + $0xe0] sm:$0xff] %v3426
        %3491 = vst [vmem:[%s210 + $0xe8] sm:$0xff] %v3427
        %3492 = vst [vmem:[%s210 + $0xf0] sm:$0xff] %v3428
        %3493 = vst [vmem:[%s210 + $0xf8] sm:$0xff] %v3429
        %3494 = vst [vmem:[%s210 + $0x100] sm:$0xff] %v3430
        %3495 = vst [vmem:[%s210 + $0x108] sm:$0xff] %v3431
        %3496 = vst [vmem:[%s210 + $0x110] sm:$0xff] %v3432
        %3497 = vst [vmem:[%s210 + $0x118] sm:$0xff] %v3433
        %3498 = vst [vmem:[%s210 + $0x120] sm:$0xff] %v3434
        %3499 = vst [vmem:[%s210 + $0x128] sm:$0xff] %v3435
        %3500 = vst [vmem:[%s210 + $0x130] sm:$0xff] %v3436
        %3501 = vst [vmem:[%s210 + $0x138] sm:$0xff] %v3437
        %3502 = vst [vmem:[%s210 + $0x140] sm:$0xff] %v3438
        %3503 = vst [vmem:[%s210 + $0x148] sm:$0xff] %v3439
        %3504 = vst [vmem:[%s210 + $0x150] sm:$0xff] %v3440
        %3505 = vst [vmem:[%s210 + $0x158] sm:$0xff] %v3441
        %3506 = vst [vmem:[%s210 + $0x160] sm:$0xff] %v3442
        %3507 = vst [vmem:[%s210 + $0x168] sm:$0xff] %v3443
        %3508 = vst [vmem:[%s210 + $0x170] sm:$0xff] %v3444
        %3509 = vst [vmem:[%s210 + $0x178] sm:$0xff] %v3445
        %3510 = vst [vmem:[%s210 + $0x180] sm:$0xff] %v3446
        %3511 = vst [vmem:[%s210 + $0x188] sm:$0xff] %v3447
        %3512 = vst [vmem:[%s210 + $0x190] sm:$0xff] %v3448
        %3513 = vst [vmem:[%s210 + $0x198] sm:$0xff] %v3449
        %3514 = vst [vmem:[%s210 + $0x1a0] sm:$0xff] %v3450
        %3515 = vst [vmem:[%s210 + $0x1a8] sm:$0xff] %v3451
        %3516 = vst [vmem:[%s210 + $0x1b0] sm:$0xff] %v3452
        %3517 = vst [vmem:[%s210 + $0x1b8] sm:$0xff] %v3453
        %3518 = vst [vmem:[%s210 + $0x1c0] sm:$0xff] %v3454
        %3519 = vst [vmem:[%s210 + $0x1c8] sm:$0xff] %v3455
        %3520 = vst [vmem:[%s210 + $0x1d0] sm:$0xff] %v3456
        %3521 = vst [vmem:[%s210 + $0x1d8] sm:$0xff] %v3457
        %3522 = vst [vmem:[%s210 + $0x1e0] sm:$0xff] %v3458
        %3523 = vst [vmem:[%s210 + $0x1e8] sm:$0xff] %v3459
        %3524 = vst [vmem:[%s210 + $0x1f0] sm:$0xff] %v3460
        %3525 = vst [vmem:[%s210 + $0x1f8] sm:$0xff] %v3461
      $region48: #{appnp_net_forward.3} parent=31 // pred_fallthru
        _
      %s3526 = smul.u32 64, %s20
      %p3527 = scmp.lt.s32.totalorder %s3526, 63
      %s3528 = scalar_select %p3527, %s3526, 63
      %s3529 = smul.addr %s3528, 8
      %s3530 = scalar_lea.vmem %s3, %s3529
      // Predicated region
      $region49: #{appnp_net_forward.3} parent=31 // pred_check
        %p3531 = pneg %p121
      $region50: #{appnp_net_forward.3} parent=31 // pred_check_branch
        %3533 = sbr.rel (%p3531) target = $region52
      $region51: #{appnp_net_forward.3} parent=31 // pred_region
        %s3534 = smul.u32 64, %s20
      $region52: #{appnp_net_forward.3} parent=31 // pred_fallthru
        _
      // Predicated region
      $region53: #{appnp_net_forward.3} parent=31 // pred_check
        %p3535 = pneg %p121
      $region54: #{appnp_net_forward.3} parent=31 // pred_check_branch
        %3537 = sbr.rel (%p3535) target = $region56
      $region55: #{appnp_net_forward.3} parent=31 // pred_region
        %s3538 = smul.u32 64, %s20
        %p3539 = scmp.lt.s32.totalorder %s3538, 63
        %s3540 = scalar_select %p3539, %s3538, 63
        %s3541 = smul.addr %s3540, 8
        %s3542 = scalar_lea.vmem %s3, %s3541
      $region56: #{appnp_net_forward.3} parent=31 // pred_fallthru
        _
    $region32: #{appnp_net_forward.3} parent=5 // pred_fallthru
      _
    %p3543 = scmp.le.s32.totalorder 2, %s9
    // Predicated region
    $region57: #{appnp_net_forward.3} parent=5 // pred_check
      %p3544 = pneg %p3543
    $region58: #{appnp_net_forward.3} parent=5 // pred_check_branch
      %3546 = sbr.rel (%p3544) target = $region60
    $region59: #{appnp_net_forward.3} parent=5 // pred_region
      %s3547 = ssub.s32 %s9, 2
    $region60: #{appnp_net_forward.3} parent=5 // pred_fallthru
      _
  $region6: #{appnp_net_forward.3} parent=0 // loop_footer
    %s13 = sadd.s32 1, %s9
  $region7: #{appnp_net_forward.3} parent=0 // loop_footer_branch
    %8 = sbr.rel target = $region3
  $region8: #{appnp_net_forward.3} parent=0 // loop_exit
    _

</llo_original>
